<compile_context>
chip_gen: v7x
topology: tpu7x:2x2x1
jax: 0.10.0
libtpu: 0.0.40
codegen_flags: <defaults>
</compile_context>

<pallas_src>
import jax
import jax.numpy as jnp
from jax.experimental import pallas as pl
from jax.experimental.pallas import tpu as pltpu

# ---- small, forward-consistent hyper-parameters ----
B = 2          # batch (number of prompts)
S = 8          # context / sequence length
D = 64         # transformer width
H = 4          # attention heads
HD = D // H    # head dim
MLP = 4 * D    # MLP hidden width
P = 32         # text_projection output dim
L = 2          # transformer layers
DTYPE = jnp.float32


# ----------------------------- in-kernel helpers -----------------------------

def _ln(x, g, b):
    x = x.astype(jnp.float32)
    mu = jnp.mean(x, axis=-1, keepdims=True)
    var = jnp.mean((x - mu) ** 2, axis=-1, keepdims=True)
    return (x - mu) * jax.lax.rsqrt(var + 1e-5) * g + b


def _gelu_tanh(x):
    # TODO(synk): nn.GELU is erf-exact in PyTorch; tanh formulation keeps the
    # Mosaic lowering to VPU/EUP ops straightforward (error ~1e-3 scale).
    return 0.5 * x * (1.0 + jnp.tanh(0.7978845608028654 * (x + 0.044715 * x * x * x)))


# ------------------------------ fused kernel ---------------------------------

def _encoder_kernel(prompts_ref, pos_ref, mask_ref, sel_ref,
                    ln1_g_ref, ln1_b_ref, w_qkv_ref, b_qkv_ref,
                    w_o_ref, b_o_ref, ln2_g_ref, ln2_b_ref,
                    w_fc_ref, b_fc_ref, w_proj_ref, b_proj_ref,
                    ln_f_g_ref, ln_f_b_ref, w_tp_ref,
                    o_ref):
    # x = prompts + positional_embedding.  (PyTorch's permute(1,0,2) is only a
    # calling-convention change for nn.MultiheadAttention; math is identical in
    # (B, S, D) layout, so it is skipped.)
    x = prompts_ref[...].astype(jnp.float32) + pos_ref[...][None]
    h = x.reshape(B * S, D)                                   # residual stream
    mask = mask_ref[...]                                      # (S, S), -inf upper
    scale = HD ** -0.5

    for l in range(L):                                        # static unroll, L=2
        # ---------------- residual attention block ----------------
        y = _ln(h, ln1_g_ref[l], ln1_b_ref[l])
        qkv = jnp.dot(y, w_qkv_ref[l],
                      preferred_element_type=jnp.float32) + b_qkv_ref[l]   # (B*S, 3D)
        q = qkv[:, 0 * D:1 * D].reshape(B, S, D)
        k = qkv[:, 1 * D:2 * D].reshape(B, S, D)
        v = qkv[:, 2 * D:3 * D].reshape(B, S, D)

        ctx_heads = []
        for hh in range(H):                                   # static unroll, H=4
            sl = slice(hh * HD, (hh + 1) * HD)
            qh, kh, vh = q[..., sl], k[..., sl], v[..., sl]   # (B, S, HD) each
            s = jnp.einsum("bqd,bkd->bqk", qh, kh,
                           preferred_element_type=jnp.float32)
            s = s * scale + mask[None]                        # causal mask
            s = s - jnp.max(s, axis=-1, keepdims=True)
            p = jnp.exp(s)
            p = p / jnp.sum(p, axis=-1, keepdims=True)
            ctx_heads.append(
                jnp.einsum("bqk,bkd->bqd", p, vh,
                           preferred_element_type=jnp.float32))
        ctx = jnp.concatenate(ctx_heads, axis=-1).reshape(B * S, D)

        # out-projection + residual (lane-dense D=64 stream, stays in-kernel)
        h = jnp.dot(ctx, w_o_ref[l],
                    preferred_element_type=jnp.float32) + b_o_ref[l] + h

        # ---------------------- MLP block --------------------------
        y = _ln(h, ln2_g_ref[l], ln2_b_ref[l])
        y = _gelu_tanh(jnp.dot(y, w_fc_ref[l],
                               preferred_element_type=jnp.float32) + b_fc_ref[l])
        h = jnp.dot(y, w_proj_ref[l],
                    preferred_element_type=jnp.float32) + b_proj_ref[l] + h

    # ln_final, EOT-token selection (one-hot matmul), text projection
    xf = _ln(h, ln_f_g_ref[...], ln_f_b_ref[...])             # (B*S, D)
    feats = jnp.dot(sel_ref[...], xf,
                    preferred_element_type=jnp.float32)       # (B, D)
    out = jnp.dot(feats, w_tp_ref[...],
                  preferred_element_type=jnp.float32)         # (B, P)
    o_ref[...] = out.astype(o_ref.dtype)


def text_encoder_forward(prompts, tokenized_prompts, params, attn_mask):
    # EOT gather expressed as a one-hot selection matrix so the gather + final
    # projection fuse into the kernel epilogue (glue int work stays in JAX).
    eot = jnp.argmax(tokenized_prompts, axis=-1)              # (B,)
    sel = jax.nn.one_hot(jnp.arange(B) * S + eot, B * S, dtype=DTYPE)  # (B, B*S)

    return pl.pallas_call(
        _encoder_kernel,
        out_shape=jax.ShapeDtypeStruct((B, P), DTYPE),
        compiler_params=pltpu.CompilerParams(
            # whole model (~0.5 MB f32) is VMEM-resident; explicit budget keeps
            # this safe on v7x's 64 MiB VMEM when scaling up.
            vmem_limit_bytes=32 * 1024 * 1024),
    )(prompts, params["pos"], attn_mask, sel,
      params["ln1_g"], params["ln1_b"], params["w_qkv"], params["b_qkv"],
      params["w_o"], params["b_o"], params["ln2_g"], params["ln2_b"],
      params["w_fc"], params["b_fc"], params["w_proj"], params["b_proj"],
      params["ln_f_g"], params["ln_f_b"], params["text_projection"])


# ----------------------------- model parameters ------------------------------

def init_params(key):
    def nrm(k, shape, scale=0.02):
        return (scale * jax.random.normal(k, shape, dtype=jnp.float32)).astype(DTYPE)

    keys = iter(jax.random.split(key, 20))
    return {
        "pos": nrm(next(keys), (S, D)),                        # positional_embedding
        "ln_f_g": 1.0 + nrm(next(keys), (1, D), 0.1),          # ln_final.weight
        "ln_f_b": nrm(next(keys), (1, D)),                     # ln_final.bias
        "text_projection": nrm(next(keys), (D, P), D ** -0.5),
        # per-layer params stacked along a leading L axis (VMEM-resident stack)
        "ln1_g": 1.0 + nrm(next(keys), (L, 1, D), 0.1),
        "ln1_b": nrm(next(keys), (L, 1, D)),
        "w_qkv": nrm(next(keys), (L, D, 3 * D), D ** -0.5),    # in_proj_weight.T
        "b_qkv": nrm(next(keys), (L, 1, 3 * D)),
        "w_o": nrm(next(keys), (L, D, D), D ** -0.5),          # out_proj.weight.T
        "b_o": nrm(next(keys), (L, 1, D)),
        "ln2_g": 1.0 + nrm(next(keys), (L, 1, D), 0.1),
        "ln2_b": nrm(next(keys), (L, 1, D)),
        "w_fc": nrm(next(keys), (L, D, MLP), D ** -0.5),       # mlp.c_fc.weight.T
        "b_fc": nrm(next(keys), (L, 1, MLP)),
        "w_proj": nrm(next(keys), (L, MLP, D), MLP ** -0.5),   # mlp.c_proj.weight.T
        "b_proj": nrm(next(keys), (L, 1, D)),
    }


def build_attn_mask(s):
    # CLIP build_attention_mask: fill with -inf, keep strict upper triangle.
    return jnp.triu(jnp.full((s, s), -jnp.inf, dtype=DTYPE), k=1)


# ------------------------- pure-JAX reference check --------------------------

def reference_forward(prompts, tokenized_prompts, params, attn_mask):
    def ln(t, g, b):
        mu = t.mean(-1, keepdims=True)
        var = ((t - mu) ** 2).mean(-1, keepdims=True)
        return (t - mu) / jnp.sqrt(var + 1e-5) * g + b

    def gelu(t):
        return 0.5 * t * (1.0 + jnp.tanh(0.7978845608028654 * (t + 0.044715 * t ** 3)))

    x = prompts + params["pos"][None]
    h = x.reshape(B * S, D)
    for l in range(L):
        y = ln(h, params["ln1_g"][l], params["ln1_b"][l])
        qkv = y @ params["w_qkv"][l] + params["b_qkv"][l]
        q, k, v = jnp.split(qkv, 3, axis=-1)

        def heads(t):
            return t.reshape(B, S, H, HD).transpose(0, 2, 1, 3)

        q, k, v = heads(q), heads(k), heads(v)
        s = jnp.einsum("bhqd,bhkd->bhqk", q, k) * (HD ** -0.5) + attn_mask
        p = jax.nn.softmax(s, axis=-1)
        ctx = jnp.einsum("bhqk,bhkd->bhqd", p, v).transpose(0, 2, 1, 3).reshape(B * S, D)
        h = ctx @ params["w_o"][l] + params["b_o"][l] + h
        y = ln(h, params["ln2_g"][l], params["ln2_b"][l])
        y = gelu(y @ params["w_fc"][l] + params["b_fc"][l])
        h = y @ params["w_proj"][l] + params["b_proj"][l] + h
    x = ln(h, params["ln_f_g"], params["ln_f_b"]).reshape(B, S, D)
    eot = jnp.argmax(tokenized_prompts, axis=-1)
    return x[jnp.arange(B), eot] @ params["text_projection"]


# ------------------------------------ main ------------------------------------

if __name__ == "__main__":
    key = jax.random.PRNGKey(0)
    kp, kt, kw = jax.random.split(key, 3)

    prompts = (0.02 * jax.random.normal(kp, (B, S, D), dtype=jnp.float32)).astype(DTYPE)
    tokenized_prompts = jax.random.randint(kt, (B, S), 0, 1000, dtype=jnp.int32)
    params = init_params(kw)
    attn_mask = build_attn_mask(S)

    out = text_encoder_forward(prompts, tokenized_prompts, params, attn_mask)
    out = jax.block_until_ready(out)

    ref = reference_forward(prompts, tokenized_prompts, params, attn_mask)
    assert out.shape == (B, P), out.shape
    max_err = float(jnp.max(jnp.abs(out - ref)))
    assert jnp.allclose(out, ref, atol=1e-3, rtol=1e-3), max_err

    print("KERNEL_OK")
</pallas_src>

<mosaic_0001>
module attributes {stable_mosaic.version = 11 : i64} {
  func.func @_encoder_kernel(%arg0: memref<2x8x64xf32, #tpu.memory_space<vmem>>, %arg1: memref<8x64xf32, #tpu.memory_space<vmem>>, %arg2: memref<8x8xf32, #tpu.memory_space<vmem>>, %arg3: memref<2x16xf32, #tpu.memory_space<vmem>>, %arg4: memref<2x1x64xf32, #tpu.memory_space<vmem>>, %arg5: memref<2x1x64xf32, #tpu.memory_space<vmem>>, %arg6: memref<2x64x192xf32, #tpu.memory_space<vmem>>, %arg7: memref<2x1x192xf32, #tpu.memory_space<vmem>>, %arg8: memref<2x64x64xf32, #tpu.memory_space<vmem>>, %arg9: memref<2x1x64xf32, #tpu.memory_space<vmem>>, %arg10: memref<2x1x64xf32, #tpu.memory_space<vmem>>, %arg11: memref<2x1x64xf32, #tpu.memory_space<vmem>>, %arg12: memref<2x64x256xf32, #tpu.memory_space<vmem>>, %arg13: memref<2x1x256xf32, #tpu.memory_space<vmem>>, %arg14: memref<2x256x64xf32, #tpu.memory_space<vmem>>, %arg15: memref<2x1x64xf32, #tpu.memory_space<vmem>>, %arg16: memref<1x64xf32, #tpu.memory_space<vmem>>, %arg17: memref<1x64xf32, #tpu.memory_space<vmem>>, %arg18: memref<64x32xf32, #tpu.memory_space<vmem>>, %arg19: memref<2x32xf32, #tpu.memory_space<vmem>>) attributes {dimension_semantics = [], scalar_prefetch = 0 : i64, scratch_operands = 0 : i64, tpu.core_type = #tpu.core_type<tc>} {
    %c0 = arith.constant 0 : index
    %c0_0 = arith.constant 0 : index
    %c0_1 = arith.constant 0 : index
    %0 = vector.load %arg0[%c0, %c0_0, %c0_1] : memref<2x8x64xf32, #tpu.memory_space<vmem>>, vector<2x8x64xf32>
    %c0_2 = arith.constant 0 : index
    %c0_3 = arith.constant 0 : index
    %1 = vector.load %arg1[%c0_2, %c0_3] : memref<8x64xf32, #tpu.memory_space<vmem>>, vector<8x64xf32>
    %2 = vector.shape_cast %1 : vector<8x64xf32> to vector<1x8x64xf32>
    %3 = vector.broadcast %2 : vector<1x8x64xf32> to vector<2x8x64xf32>
    %4 = arith.addf %0, %3 : vector<2x8x64xf32>
    %5 = vector.shape_cast %4 : vector<2x8x64xf32> to vector<16x64xf32>
    %c0_4 = arith.constant 0 : index
    %c0_5 = arith.constant 0 : index
    %6 = vector.load %arg2[%c0_4, %c0_5] : memref<8x8xf32, #tpu.memory_space<vmem>>, vector<8x8xf32>
    %c0_6 = arith.constant 0 : index
    %c0_7 = arith.constant 0 : index
    %c0_8 = arith.constant 0 : index
    %7 = vector.load %arg4[%c0_6, %c0_7, %c0_8] : memref<2x1x64xf32, #tpu.memory_space<vmem>>, vector<1x1x64xf32>
    %8 = vector.shape_cast %7 : vector<1x1x64xf32> to vector<1x64xf32>
    %c0_9 = arith.constant 0 : index
    %c0_10 = arith.constant 0 : index
    %c0_11 = arith.constant 0 : index
    %9 = vector.load %arg5[%c0_9, %c0_10, %c0_11] : memref<2x1x64xf32, #tpu.memory_space<vmem>>, vector<1x1x64xf32>
    %10 = vector.shape_cast %9 : vector<1x1x64xf32> to vector<1x64xf32>
    %cst = arith.constant dense<0.000000e+00> : vector<16xf32>
    %11 = vector.multi_reduction <add>, %5, %cst [1] : vector<16x64xf32> to vector<16xf32>
    %12 = vector.shape_cast %11 : vector<16xf32> to vector<16x1xf32>
    %cst_12 = arith.constant 6.400000e+01 : f32
    %13 = vector.broadcast %cst_12 : f32 to vector<16x1xf32>
    %14 = arith.divf %12, %13 : vector<16x1xf32>
    %15 = vector.broadcast %14 : vector<16x1xf32> to vector<16x64xf32>
    %16 = arith.subf %5, %15 : vector<16x64xf32>
    %17 = arith.mulf %16, %16 : vector<16x64xf32>
    %cst_13 = arith.constant dense<0.000000e+00> : vector<16xf32>
    %18 = vector.multi_reduction <add>, %17, %cst_13 [1] : vector<16x64xf32> to vector<16xf32>
    %19 = vector.shape_cast %18 : vector<16xf32> to vector<16x1xf32>
    %cst_14 = arith.constant 6.400000e+01 : f32
    %20 = vector.broadcast %cst_14 : f32 to vector<16x1xf32>
    %21 = arith.divf %19, %20 : vector<16x1xf32>
    %22 = vector.broadcast %14 : vector<16x1xf32> to vector<16x64xf32>
    %23 = arith.subf %5, %22 : vector<16x64xf32>
    %cst_15 = arith.constant 9.99999974E-6 : f32
    %24 = vector.broadcast %cst_15 : f32 to vector<16x1xf32>
    %25 = arith.addf %21, %24 : vector<16x1xf32>
    %26 = math.rsqrt %25 : vector<16x1xf32>
    %27 = vector.broadcast %26 : vector<16x1xf32> to vector<16x64xf32>
    %28 = arith.mulf %23, %27 : vector<16x64xf32>
    %29 = vector.broadcast %8 : vector<1x64xf32> to vector<16x64xf32>
    %30 = arith.mulf %28, %29 : vector<16x64xf32>
    %31 = vector.broadcast %10 : vector<1x64xf32> to vector<16x64xf32>
    %32 = arith.addf %30, %31 : vector<16x64xf32>
    %c0_16 = arith.constant 0 : index
    %c0_17 = arith.constant 0 : index
    %c0_18 = arith.constant 0 : index
    %33 = vector.load %arg6[%c0_16, %c0_17, %c0_18] : memref<2x64x192xf32, #tpu.memory_space<vmem>>, vector<1x64x192xf32>
    %34 = vector.shape_cast %33 : vector<1x64x192xf32> to vector<64x192xf32>
    %cst_19 = arith.constant dense<0.000000e+00> : vector<16x192xf32>
    %35 = tpu.matmul %32, %34, %cst_19 {dimension_numbers = #tpu.dot_dimension_numbers<[1], [0], [0], [1], [0, 0, 1, 1], [], []>} : vector<16x64xf32>, vector<64x192xf32>, vector<16x192xf32> -> vector<16x192xf32>
    %c0_20 = arith.constant 0 : index
    %c0_21 = arith.constant 0 : index
    %c0_22 = arith.constant 0 : index
    %36 = vector.load %arg7[%c0_20, %c0_21, %c0_22] : memref<2x1x192xf32, #tpu.memory_space<vmem>>, vector<1x1x192xf32>
    %37 = vector.shape_cast %36 : vector<1x1x192xf32> to vector<1x192xf32>
    %38 = vector.broadcast %37 : vector<1x192xf32> to vector<16x192xf32>
    %39 = arith.addf %35, %38 : vector<16x192xf32>
    %40 = vector.extract_strided_slice %39 {offsets = [0, 0], sizes = [16, 64], strides = [1, 1]} : vector<16x192xf32> to vector<16x64xf32>
    %41 = vector.shape_cast %40 : vector<16x64xf32> to vector<2x8x64xf32>
    %42 = vector.extract_strided_slice %39 {offsets = [0, 64], sizes = [16, 64], strides = [1, 1]} : vector<16x192xf32> to vector<16x64xf32>
    %43 = vector.shape_cast %42 : vector<16x64xf32> to vector<2x8x64xf32>
    %44 = vector.extract_strided_slice %39 {offsets = [0, 128], sizes = [16, 64], strides = [1, 1]} : vector<16x192xf32> to vector<16x64xf32>
    %45 = vector.shape_cast %44 : vector<16x64xf32> to vector<2x8x64xf32>
    %46 = vector.extract_strided_slice %41 {offsets = [0, 0, 0], sizes = [2, 8, 16], strides = [1, 1, 1]} : vector<2x8x64xf32> to vector<2x8x16xf32>
    %47 = vector.extract_strided_slice %43 {offsets = [0, 0, 0], sizes = [2, 8, 16], strides = [1, 1, 1]} : vector<2x8x64xf32> to vector<2x8x16xf32>
    %48 = vector.extract_strided_slice %45 {offsets = [0, 0, 0], sizes = [2, 8, 16], strides = [1, 1, 1]} : vector<2x8x64xf32> to vector<2x8x16xf32>
    "tpu.trace_start"() <{level = 10 : i32, message = "bqd,bkd->bqk"}> : () -> ()
    %cst_23 = arith.constant dense<0.000000e+00> : vector<2x8x8xf32>
    %49 = tpu.matmul %46, %47, %cst_23 {dimension_numbers = #tpu.dot_dimension_numbers<[2], [2], [1], [1], [0, 0, 0, 1, 1, 1], [0], [0]>} : vector<2x8x16xf32>, vector<2x8x16xf32>, vector<2x8x8xf32> -> vector<2x8x8xf32>
    "tpu.trace_stop"() : () -> ()
    %cst_24 = arith.constant 2.500000e-01 : f32
    %50 = vector.broadcast %cst_24 : f32 to vector<2x8x8xf32>
    %51 = arith.mulf %49, %50 : vector<2x8x8xf32>
    %52 = vector.shape_cast %6 : vector<8x8xf32> to vector<1x8x8xf32>
    %53 = vector.broadcast %52 : vector<1x8x8xf32> to vector<2x8x8xf32>
    %54 = arith.addf %51, %53 : vector<2x8x8xf32>
    %cst_25 = arith.constant dense<0xFF800000> : vector<2x8xf32>
    %55 = vector.multi_reduction <maximumf>, %54, %cst_25 [2] : vector<2x8x8xf32> to vector<2x8xf32>
    %56 = vector.shape_cast %55 : vector<2x8xf32> to vector<2x8x1xf32>
    %57 = vector.broadcast %56 : vector<2x8x1xf32> to vector<2x8x8xf32>
    %58 = arith.subf %54, %57 : vector<2x8x8xf32>
    %59 = math.exp %58 : vector<2x8x8xf32>
    %cst_26 = arith.constant dense<0.000000e+00> : vector<2x8xf32>
    %60 = vector.multi_reduction <add>, %59, %cst_26 [2] : vector<2x8x8xf32> to vector<2x8xf32>
    %61 = vector.shape_cast %60 : vector<2x8xf32> to vector<2x8x1xf32>
    %62 = vector.broadcast %61 : vector<2x8x1xf32> to vector<2x8x8xf32>
    %63 = arith.divf %59, %62 : vector<2x8x8xf32>
    "tpu.trace_start"() <{level = 10 : i32, message = "bqk,bkd->bqd"}> : () -> ()
    %cst_27 = arith.constant dense<0.000000e+00> : vector<2x8x16xf32>
    %64 = tpu.matmul %63, %48, %cst_27 {dimension_numbers = #tpu.dot_dimension_numbers<[2], [1], [1], [2], [0, 0, 0, 1, 1, 2], [0], [0]>} : vector<2x8x8xf32>, vector<2x8x16xf32>, vector<2x8x16xf32> -> vector<2x8x16xf32>
    "tpu.trace_stop"() : () -> ()
    %65 = vector.extract_strided_slice %41 {offsets = [0, 0, 16], sizes = [2, 8, 16], strides = [1, 1, 1]} : vector<2x8x64xf32> to vector<2x8x16xf32>
    %66 = vector.extract_strided_slice %43 {offsets = [0, 0, 16], sizes = [2, 8, 16], strides = [1, 1, 1]} : vector<2x8x64xf32> to vector<2x8x16xf32>
    %67 = vector.extract_strided_slice %45 {offsets = [0, 0, 16], sizes = [2, 8, 16], strides = [1, 1, 1]} : vector<2x8x64xf32> to vector<2x8x16xf32>
    "tpu.trace_start"() <{level = 10 : i32, message = "bqd,bkd->bqk"}> : () -> ()
    %cst_28 = arith.constant dense<0.000000e+00> : vector<2x8x8xf32>
    %68 = tpu.matmul %65, %66, %cst_28 {dimension_numbers = #tpu.dot_dimension_numbers<[2], [2], [1], [1], [0, 0, 0, 1, 1, 1], [0], [0]>} : vector<2x8x16xf32>, vector<2x8x16xf32>, vector<2x8x8xf32> -> vector<2x8x8xf32>
    "tpu.trace_stop"() : () -> ()
    %cst_29 = arith.constant 2.500000e-01 : f32
    %69 = vector.broadcast %cst_29 : f32 to vector<2x8x8xf32>
    %70 = arith.mulf %68, %69 : vector<2x8x8xf32>
    %71 = vector.shape_cast %6 : vector<8x8xf32> to vector<1x8x8xf32>
    %72 = vector.broadcast %71 : vector<1x8x8xf32> to vector<2x8x8xf32>
    %73 = arith.addf %70, %72 : vector<2x8x8xf32>
    %cst_30 = arith.constant dense<0xFF800000> : vector<2x8xf32>
    %74 = vector.multi_reduction <maximumf>, %73, %cst_30 [2] : vector<2x8x8xf32> to vector<2x8xf32>
    %75 = vector.shape_cast %74 : vector<2x8xf32> to vector<2x8x1xf32>
    %76 = vector.broadcast %75 : vector<2x8x1xf32> to vector<2x8x8xf32>
    %77 = arith.subf %73, %76 : vector<2x8x8xf32>
    %78 = math.exp %77 : vector<2x8x8xf32>
    %cst_31 = arith.constant dense<0.000000e+00> : vector<2x8xf32>
    %79 = vector.multi_reduction <add>, %78, %cst_31 [2] : vector<2x8x8xf32> to vector<2x8xf32>
    %80 = vector.shape_cast %79 : vector<2x8xf32> to vector<2x8x1xf32>
    %81 = vector.broadcast %80 : vector<2x8x1xf32> to vector<2x8x8xf32>
    %82 = arith.divf %78, %81 : vector<2x8x8xf32>
    "tpu.trace_start"() <{level = 10 : i32, message = "bqk,bkd->bqd"}> : () -> ()
    %cst_32 = arith.constant dense<0.000000e+00> : vector<2x8x16xf32>
    %83 = tpu.matmul %82, %67, %cst_32 {dimension_numbers = #tpu.dot_dimension_numbers<[2], [1], [1], [2], [0, 0, 0, 1, 1, 2], [0], [0]>} : vector<2x8x8xf32>, vector<2x8x16xf32>, vector<2x8x16xf32> -> vector<2x8x16xf32>
    "tpu.trace_stop"() : () -> ()
    %84 = vector.extract_strided_slice %41 {offsets = [0, 0, 32], sizes = [2, 8, 16], strides = [1, 1, 1]} : vector<2x8x64xf32> to vector<2x8x16xf32>
    %85 = vector.extract_strided_slice %43 {offsets = [0, 0, 32], sizes = [2, 8, 16], strides = [1, 1, 1]} : vector<2x8x64xf32> to vector<2x8x16xf32>
    %86 = vector.extract_strided_slice %45 {offsets = [0, 0, 32], sizes = [2, 8, 16], strides = [1, 1, 1]} : vector<2x8x64xf32> to vector<2x8x16xf32>
    "tpu.trace_start"() <{level = 10 : i32, message = "bqd,bkd->bqk"}> : () -> ()
    %cst_33 = arith.constant dense<0.000000e+00> : vector<2x8x8xf32>
    %87 = tpu.matmul %84, %85, %cst_33 {dimension_numbers = #tpu.dot_dimension_numbers<[2], [2], [1], [1], [0, 0, 0, 1, 1, 1], [0], [0]>} : vector<2x8x16xf32>, vector<2x8x16xf32>, vector<2x8x8xf32> -> vector<2x8x8xf32>
    "tpu.trace_stop"() : () -> ()
    %cst_34 = arith.constant 2.500000e-01 : f32
    %88 = vector.broadcast %cst_34 : f32 to vector<2x8x8xf32>
    %89 = arith.mulf %87, %88 : vector<2x8x8xf32>
    %90 = vector.shape_cast %6 : vector<8x8xf32> to vector<1x8x8xf32>
    %91 = vector.broadcast %90 : vector<1x8x8xf32> to vector<2x8x8xf32>
    %92 = arith.addf %89, %91 : vector<2x8x8xf32>
    %cst_35 = arith.constant dense<0xFF800000> : vector<2x8xf32>
    %93 = vector.multi_reduction <maximumf>, %92, %cst_35 [2] : vector<2x8x8xf32> to vector<2x8xf32>
    %94 = vector.shape_cast %93 : vector<2x8xf32> to vector<2x8x1xf32>
    %95 = vector.broadcast %94 : vector<2x8x1xf32> to vector<2x8x8xf32>
    %96 = arith.subf %92, %95 : vector<2x8x8xf32>
    %97 = math.exp %96 : vector<2x8x8xf32>
    %cst_36 = arith.constant dense<0.000000e+00> : vector<2x8xf32>
    %98 = vector.multi_reduction <add>, %97, %cst_36 [2] : vector<2x8x8xf32> to vector<2x8xf32>
    %99 = vector.shape_cast %98 : vector<2x8xf32> to vector<2x8x1xf32>
    %100 = vector.broadcast %99 : vector<2x8x1xf32> to vector<2x8x8xf32>
    %101 = arith.divf %97, %100 : vector<2x8x8xf32>
    "tpu.trace_start"() <{level = 10 : i32, message = "bqk,bkd->bqd"}> : () -> ()
    %cst_37 = arith.constant dense<0.000000e+00> : vector<2x8x16xf32>
    %102 = tpu.matmul %101, %86, %cst_37 {dimension_numbers = #tpu.dot_dimension_numbers<[2], [1], [1], [2], [0, 0, 0, 1, 1, 2], [0], [0]>} : vector<2x8x8xf32>, vector<2x8x16xf32>, vector<2x8x16xf32> -> vector<2x8x16xf32>
    "tpu.trace_stop"() : () -> ()
    %103 = vector.extract_strided_slice %41 {offsets = [0, 0, 48], sizes = [2, 8, 16], strides = [1, 1, 1]} : vector<2x8x64xf32> to vector<2x8x16xf32>
    %104 = vector.extract_strided_slice %43 {offsets = [0, 0, 48], sizes = [2, 8, 16], strides = [1, 1, 1]} : vector<2x8x64xf32> to vector<2x8x16xf32>
    %105 = vector.extract_strided_slice %45 {offsets = [0, 0, 48], sizes = [2, 8, 16], strides = [1, 1, 1]} : vector<2x8x64xf32> to vector<2x8x16xf32>
    "tpu.trace_start"() <{level = 10 : i32, message = "bqd,bkd->bqk"}> : () -> ()
    %cst_38 = arith.constant dense<0.000000e+00> : vector<2x8x8xf32>
    %106 = tpu.matmul %103, %104, %cst_38 {dimension_numbers = #tpu.dot_dimension_numbers<[2], [2], [1], [1], [0, 0, 0, 1, 1, 1], [0], [0]>} : vector<2x8x16xf32>, vector<2x8x16xf32>, vector<2x8x8xf32> -> vector<2x8x8xf32>
    "tpu.trace_stop"() : () -> ()
    %cst_39 = arith.constant 2.500000e-01 : f32
    %107 = vector.broadcast %cst_39 : f32 to vector<2x8x8xf32>
    %108 = arith.mulf %106, %107 : vector<2x8x8xf32>
    %109 = vector.shape_cast %6 : vector<8x8xf32> to vector<1x8x8xf32>
    %110 = vector.broadcast %109 : vector<1x8x8xf32> to vector<2x8x8xf32>
    %111 = arith.addf %108, %110 : vector<2x8x8xf32>
    %cst_40 = arith.constant dense<0xFF800000> : vector<2x8xf32>
    %112 = vector.multi_reduction <maximumf>, %111, %cst_40 [2] : vector<2x8x8xf32> to vector<2x8xf32>
    %113 = vector.shape_cast %112 : vector<2x8xf32> to vector<2x8x1xf32>
    %114 = vector.broadcast %113 : vector<2x8x1xf32> to vector<2x8x8xf32>
    %115 = arith.subf %111, %114 : vector<2x8x8xf32>
    %116 = math.exp %115 : vector<2x8x8xf32>
    %cst_41 = arith.constant dense<0.000000e+00> : vector<2x8xf32>
    %117 = vector.multi_reduction <add>, %116, %cst_41 [2] : vector<2x8x8xf32> to vector<2x8xf32>
    %118 = vector.shape_cast %117 : vector<2x8xf32> to vector<2x8x1xf32>
    %119 = vector.broadcast %118 : vector<2x8x1xf32> to vector<2x8x8xf32>
    %120 = arith.divf %116, %119 : vector<2x8x8xf32>
    "tpu.trace_start"() <{level = 10 : i32, message = "bqk,bkd->bqd"}> : () -> ()
    %cst_42 = arith.constant dense<0.000000e+00> : vector<2x8x16xf32>
    %121 = tpu.matmul %120, %105, %cst_42 {dimension_numbers = #tpu.dot_dimension_numbers<[2], [1], [1], [2], [0, 0, 0, 1, 1, 2], [0], [0]>} : vector<2x8x8xf32>, vector<2x8x16xf32>, vector<2x8x16xf32> -> vector<2x8x16xf32>
    "tpu.trace_stop"() : () -> ()
    %122 = tpu.concatenate %64, %83, %102, %121 in 2 : vector<2x8x16xf32>, vector<2x8x16xf32>, vector<2x8x16xf32>, vector<2x8x16xf32> -> vector<2x8x64xf32>
    %123 = vector.shape_cast %122 : vector<2x8x64xf32> to vector<16x64xf32>
    %c0_43 = arith.constant 0 : index
    %c0_44 = arith.constant 0 : index
    %c0_45 = arith.constant 0 : index
    %124 = vector.load %arg8[%c0_43, %c0_44, %c0_45] : memref<2x64x64xf32, #tpu.memory_space<vmem>>, vector<1x64x64xf32>
    %125 = vector.shape_cast %124 : vector<1x64x64xf32> to vector<64x64xf32>
    %cst_46 = arith.constant dense<0.000000e+00> : vector<16x64xf32>
    %126 = tpu.matmul %123, %125, %cst_46 {dimension_numbers = #tpu.dot_dimension_numbers<[1], [0], [0], [1], [0, 0, 1, 1], [], []>} : vector<16x64xf32>, vector<64x64xf32>, vector<16x64xf32> -> vector<16x64xf32>
    %c0_47 = arith.constant 0 : index
    %c0_48 = arith.constant 0 : index
    %c0_49 = arith.constant 0 : index
    %127 = vector.load %arg9[%c0_47, %c0_48, %c0_49] : memref<2x1x64xf32, #tpu.memory_space<vmem>>, vector<1x1x64xf32>
    %128 = vector.shape_cast %127 : vector<1x1x64xf32> to vector<1x64xf32>
    %129 = vector.broadcast %128 : vector<1x64xf32> to vector<16x64xf32>
    %130 = arith.addf %126, %129 : vector<16x64xf32>
    %131 = arith.addf %130, %5 : vector<16x64xf32>
    %c0_50 = arith.constant 0 : index
    %c0_51 = arith.constant 0 : index
    %c0_52 = arith.constant 0 : index
    %132 = vector.load %arg10[%c0_50, %c0_51, %c0_52] : memref<2x1x64xf32, #tpu.memory_space<vmem>>, vector<1x1x64xf32>
    %133 = vector.shape_cast %132 : vector<1x1x64xf32> to vector<1x64xf32>
    %c0_53 = arith.constant 0 : index
    %c0_54 = arith.constant 0 : index
    %c0_55 = arith.constant 0 : index
    %134 = vector.load %arg11[%c0_53, %c0_54, %c0_55] : memref<2x1x64xf32, #tpu.memory_space<vmem>>, vector<1x1x64xf32>
    %135 = vector.shape_cast %134 : vector<1x1x64xf32> to vector<1x64xf32>
    %cst_56 = arith.constant dense<0.000000e+00> : vector<16xf32>
    %136 = vector.multi_reduction <add>, %131, %cst_56 [1] : vector<16x64xf32> to vector<16xf32>
    %137 = vector.shape_cast %136 : vector<16xf32> to vector<16x1xf32>
    %cst_57 = arith.constant 6.400000e+01 : f32
    %138 = vector.broadcast %cst_57 : f32 to vector<16x1xf32>
    %139 = arith.divf %137, %138 : vector<16x1xf32>
    %140 = vector.broadcast %139 : vector<16x1xf32> to vector<16x64xf32>
    %141 = arith.subf %131, %140 : vector<16x64xf32>
    %142 = arith.mulf %141, %141 : vector<16x64xf32>
    %cst_58 = arith.constant dense<0.000000e+00> : vector<16xf32>
    %143 = vector.multi_reduction <add>, %142, %cst_58 [1] : vector<16x64xf32> to vector<16xf32>
    %144 = vector.shape_cast %143 : vector<16xf32> to vector<16x1xf32>
    %cst_59 = arith.constant 6.400000e+01 : f32
    %145 = vector.broadcast %cst_59 : f32 to vector<16x1xf32>
    %146 = arith.divf %144, %145 : vector<16x1xf32>
    %147 = vector.broadcast %139 : vector<16x1xf32> to vector<16x64xf32>
    %148 = arith.subf %131, %147 : vector<16x64xf32>
    %cst_60 = arith.constant 9.99999974E-6 : f32
    %149 = vector.broadcast %cst_60 : f32 to vector<16x1xf32>
    %150 = arith.addf %146, %149 : vector<16x1xf32>
    %151 = math.rsqrt %150 : vector<16x1xf32>
    %152 = vector.broadcast %151 : vector<16x1xf32> to vector<16x64xf32>
    %153 = arith.mulf %148, %152 : vector<16x64xf32>
    %154 = vector.broadcast %133 : vector<1x64xf32> to vector<16x64xf32>
    %155 = arith.mulf %153, %154 : vector<16x64xf32>
    %156 = vector.broadcast %135 : vector<1x64xf32> to vector<16x64xf32>
    %157 = arith.addf %155, %156 : vector<16x64xf32>
    %c0_61 = arith.constant 0 : index
    %c0_62 = arith.constant 0 : index
    %c0_63 = arith.constant 0 : index
    %158 = vector.load %arg12[%c0_61, %c0_62, %c0_63] : memref<2x64x256xf32, #tpu.memory_space<vmem>>, vector<1x64x256xf32>
    %159 = vector.shape_cast %158 : vector<1x64x256xf32> to vector<64x256xf32>
    %cst_64 = arith.constant dense<0.000000e+00> : vector<16x256xf32>
    %160 = tpu.matmul %157, %159, %cst_64 {dimension_numbers = #tpu.dot_dimension_numbers<[1], [0], [0], [1], [0, 0, 1, 1], [], []>} : vector<16x64xf32>, vector<64x256xf32>, vector<16x256xf32> -> vector<16x256xf32>
    %c0_65 = arith.constant 0 : index
    %c0_66 = arith.constant 0 : index
    %c0_67 = arith.constant 0 : index
    %161 = vector.load %arg13[%c0_65, %c0_66, %c0_67] : memref<2x1x256xf32, #tpu.memory_space<vmem>>, vector<1x1x256xf32>
    %162 = vector.shape_cast %161 : vector<1x1x256xf32> to vector<1x256xf32>
    %163 = vector.broadcast %162 : vector<1x256xf32> to vector<16x256xf32>
    %164 = arith.addf %160, %163 : vector<16x256xf32>
    %cst_68 = arith.constant 5.000000e-01 : f32
    %165 = vector.broadcast %cst_68 : f32 to vector<16x256xf32>
    %166 = arith.mulf %165, %164 : vector<16x256xf32>
    %cst_69 = arith.constant 4.471500e-02 : f32
    %167 = vector.broadcast %cst_69 : f32 to vector<16x256xf32>
    %168 = arith.mulf %167, %164 : vector<16x256xf32>
    %169 = arith.mulf %168, %164 : vector<16x256xf32>
    %170 = arith.mulf %169, %164 : vector<16x256xf32>
    %171 = arith.addf %164, %170 : vector<16x256xf32>
    %cst_70 = arith.constant 0.797884583 : f32
    %172 = vector.broadcast %cst_70 : f32 to vector<16x256xf32>
    %173 = arith.mulf %172, %171 : vector<16x256xf32>
    %174 = math.tanh %173 : vector<16x256xf32>
    %cst_71 = arith.constant 1.000000e+00 : f32
    %175 = vector.broadcast %cst_71 : f32 to vector<16x256xf32>
    %176 = arith.addf %175, %174 : vector<16x256xf32>
    %177 = arith.mulf %166, %176 : vector<16x256xf32>
    %c0_72 = arith.constant 0 : index
    %c0_73 = arith.constant 0 : index
    %c0_74 = arith.constant 0 : index
    %178 = vector.load %arg14[%c0_72, %c0_73, %c0_74] : memref<2x256x64xf32, #tpu.memory_space<vmem>>, vector<1x256x64xf32>
    %179 = vector.shape_cast %178 : vector<1x256x64xf32> to vector<256x64xf32>
    %cst_75 = arith.constant dense<0.000000e+00> : vector<16x64xf32>
    %180 = tpu.matmul %177, %179, %cst_75 {dimension_numbers = #tpu.dot_dimension_numbers<[1], [0], [0], [1], [0, 0, 1, 1], [], []>} : vector<16x256xf32>, vector<256x64xf32>, vector<16x64xf32> -> vector<16x64xf32>
    %c0_76 = arith.constant 0 : index
    %c0_77 = arith.constant 0 : index
    %c0_78 = arith.constant 0 : index
    %181 = vector.load %arg15[%c0_76, %c0_77, %c0_78] : memref<2x1x64xf32, #tpu.memory_space<vmem>>, vector<1x1x64xf32>
    %182 = vector.shape_cast %181 : vector<1x1x64xf32> to vector<1x64xf32>
    %183 = vector.broadcast %182 : vector<1x64xf32> to vector<16x64xf32>
    %184 = arith.addf %180, %183 : vector<16x64xf32>
    %185 = arith.addf %184, %131 : vector<16x64xf32>
    %c1 = arith.constant 1 : index
    %c0_79 = arith.constant 0 : index
    %c0_80 = arith.constant 0 : index
    %186 = vector.load %arg4[%c1, %c0_79, %c0_80] : memref<2x1x64xf32, #tpu.memory_space<vmem>>, vector<1x1x64xf32>
    %187 = vector.shape_cast %186 : vector<1x1x64xf32> to vector<1x64xf32>
    %c1_81 = arith.constant 1 : index
    %c0_82 = arith.constant 0 : index
    %c0_83 = arith.constant 0 : index
    %188 = vector.load %arg5[%c1_81, %c0_82, %c0_83] : memref<2x1x64xf32, #tpu.memory_space<vmem>>, vector<1x1x64xf32>
    %189 = vector.shape_cast %188 : vector<1x1x64xf32> to vector<1x64xf32>
    %cst_84 = arith.constant dense<0.000000e+00> : vector<16xf32>
    %190 = vector.multi_reduction <add>, %185, %cst_84 [1] : vector<16x64xf32> to vector<16xf32>
    %191 = vector.shape_cast %190 : vector<16xf32> to vector<16x1xf32>
    %cst_85 = arith.constant 6.400000e+01 : f32
    %192 = vector.broadcast %cst_85 : f32 to vector<16x1xf32>
    %193 = arith.divf %191, %192 : vector<16x1xf32>
    %194 = vector.broadcast %193 : vector<16x1xf32> to vector<16x64xf32>
    %195 = arith.subf %185, %194 : vector<16x64xf32>
    %196 = arith.mulf %195, %195 : vector<16x64xf32>
    %cst_86 = arith.constant dense<0.000000e+00> : vector<16xf32>
    %197 = vector.multi_reduction <add>, %196, %cst_86 [1] : vector<16x64xf32> to vector<16xf32>
    %198 = vector.shape_cast %197 : vector<16xf32> to vector<16x1xf32>
    %cst_87 = arith.constant 6.400000e+01 : f32
    %199 = vector.broadcast %cst_87 : f32 to vector<16x1xf32>
    %200 = arith.divf %198, %199 : vector<16x1xf32>
    %201 = vector.broadcast %193 : vector<16x1xf32> to vector<16x64xf32>
    %202 = arith.subf %185, %201 : vector<16x64xf32>
    %cst_88 = arith.constant 9.99999974E-6 : f32
    %203 = vector.broadcast %cst_88 : f32 to vector<16x1xf32>
    %204 = arith.addf %200, %203 : vector<16x1xf32>
    %205 = math.rsqrt %204 : vector<16x1xf32>
    %206 = vector.broadcast %205 : vector<16x1xf32> to vector<16x64xf32>
    %207 = arith.mulf %202, %206 : vector<16x64xf32>
    %208 = vector.broadcast %187 : vector<1x64xf32> to vector<16x64xf32>
    %209 = arith.mulf %207, %208 : vector<16x64xf32>
    %210 = vector.broadcast %189 : vector<1x64xf32> to vector<16x64xf32>
    %211 = arith.addf %209, %210 : vector<16x64xf32>
    %c1_89 = arith.constant 1 : index
    %c0_90 = arith.constant 0 : index
    %c0_91 = arith.constant 0 : index
    %212 = vector.load %arg6[%c1_89, %c0_90, %c0_91] : memref<2x64x192xf32, #tpu.memory_space<vmem>>, vector<1x64x192xf32>
    %213 = vector.shape_cast %212 : vector<1x64x192xf32> to vector<64x192xf32>
    %cst_92 = arith.constant dense<0.000000e+00> : vector<16x192xf32>
    %214 = tpu.matmul %211, %213, %cst_92 {dimension_numbers = #tpu.dot_dimension_numbers<[1], [0], [0], [1], [0, 0, 1, 1], [], []>} : vector<16x64xf32>, vector<64x192xf32>, vector<16x192xf32> -> vector<16x192xf32>
    %c1_93 = arith.constant 1 : index
    %c0_94 = arith.constant 0 : index
    %c0_95 = arith.constant 0 : index
    %215 = vector.load %arg7[%c1_93, %c0_94, %c0_95] : memref<2x1x192xf32, #tpu.memory_space<vmem>>, vector<1x1x192xf32>
    %216 = vector.shape_cast %215 : vector<1x1x192xf32> to vector<1x192xf32>
    %217 = vector.broadcast %216 : vector<1x192xf32> to vector<16x192xf32>
    %218 = arith.addf %214, %217 : vector<16x192xf32>
    %219 = vector.extract_strided_slice %218 {offsets = [0, 0], sizes = [16, 64], strides = [1, 1]} : vector<16x192xf32> to vector<16x64xf32>
    %220 = vector.shape_cast %219 : vector<16x64xf32> to vector<2x8x64xf32>
    %221 = vector.extract_strided_slice %218 {offsets = [0, 64], sizes = [16, 64], strides = [1, 1]} : vector<16x192xf32> to vector<16x64xf32>
    %222 = vector.shape_cast %221 : vector<16x64xf32> to vector<2x8x64xf32>
    %223 = vector.extract_strided_slice %218 {offsets = [0, 128], sizes = [16, 64], strides = [1, 1]} : vector<16x192xf32> to vector<16x64xf32>
    %224 = vector.shape_cast %223 : vector<16x64xf32> to vector<2x8x64xf32>
    %225 = vector.extract_strided_slice %220 {offsets = [0, 0, 0], sizes = [2, 8, 16], strides = [1, 1, 1]} : vector<2x8x64xf32> to vector<2x8x16xf32>
    %226 = vector.extract_strided_slice %222 {offsets = [0, 0, 0], sizes = [2, 8, 16], strides = [1, 1, 1]} : vector<2x8x64xf32> to vector<2x8x16xf32>
    %227 = vector.extract_strided_slice %224 {offsets = [0, 0, 0], sizes = [2, 8, 16], strides = [1, 1, 1]} : vector<2x8x64xf32> to vector<2x8x16xf32>
    "tpu.trace_start"() <{level = 10 : i32, message = "bqd,bkd->bqk"}> : () -> ()
    %cst_96 = arith.constant dense<0.000000e+00> : vector<2x8x8xf32>
    %228 = tpu.matmul %225, %226, %cst_96 {dimension_numbers = #tpu.dot_dimension_numbers<[2], [2], [1], [1], [0, 0, 0, 1, 1, 1], [0], [0]>} : vector<2x8x16xf32>, vector<2x8x16xf32>, vector<2x8x8xf32> -> vector<2x8x8xf32>
    "tpu.trace_stop"() : () -> ()
    %cst_97 = arith.constant 2.500000e-01 : f32
    %229 = vector.broadcast %cst_97 : f32 to vector<2x8x8xf32>
    %230 = arith.mulf %228, %229 : vector<2x8x8xf32>
    %231 = vector.shape_cast %6 : vector<8x8xf32> to vector<1x8x8xf32>
    %232 = vector.broadcast %231 : vector<1x8x8xf32> to vector<2x8x8xf32>
    %233 = arith.addf %230, %232 : vector<2x8x8xf32>
    %cst_98 = arith.constant dense<0xFF800000> : vector<2x8xf32>
    %234 = vector.multi_reduction <maximumf>, %233, %cst_98 [2] : vector<2x8x8xf32> to vector<2x8xf32>
    %235 = vector.shape_cast %234 : vector<2x8xf32> to vector<2x8x1xf32>
    %236 = vector.broadcast %235 : vector<2x8x1xf32> to vector<2x8x8xf32>
    %237 = arith.subf %233, %236 : vector<2x8x8xf32>
    %238 = math.exp %237 : vector<2x8x8xf32>
    %cst_99 = arith.constant dense<0.000000e+00> : vector<2x8xf32>
    %239 = vector.multi_reduction <add>, %238, %cst_99 [2] : vector<2x8x8xf32> to vector<2x8xf32>
    %240 = vector.shape_cast %239 : vector<2x8xf32> to vector<2x8x1xf32>
    %241 = vector.broadcast %240 : vector<2x8x1xf32> to vector<2x8x8xf32>
    %242 = arith.divf %238, %241 : vector<2x8x8xf32>
    "tpu.trace_start"() <{level = 10 : i32, message = "bqk,bkd->bqd"}> : () -> ()
    %cst_100 = arith.constant dense<0.000000e+00> : vector<2x8x16xf32>
    %243 = tpu.matmul %242, %227, %cst_100 {dimension_numbers = #tpu.dot_dimension_numbers<[2], [1], [1], [2], [0, 0, 0, 1, 1, 2], [0], [0]>} : vector<2x8x8xf32>, vector<2x8x16xf32>, vector<2x8x16xf32> -> vector<2x8x16xf32>
    "tpu.trace_stop"() : () -> ()
    %244 = vector.extract_strided_slice %220 {offsets = [0, 0, 16], sizes = [2, 8, 16], strides = [1, 1, 1]} : vector<2x8x64xf32> to vector<2x8x16xf32>
    %245 = vector.extract_strided_slice %222 {offsets = [0, 0, 16], sizes = [2, 8, 16], strides = [1, 1, 1]} : vector<2x8x64xf32> to vector<2x8x16xf32>
    %246 = vector.extract_strided_slice %224 {offsets = [0, 0, 16], sizes = [2, 8, 16], strides = [1, 1, 1]} : vector<2x8x64xf32> to vector<2x8x16xf32>
    "tpu.trace_start"() <{level = 10 : i32, message = "bqd,bkd->bqk"}> : () -> ()
    %cst_101 = arith.constant dense<0.000000e+00> : vector<2x8x8xf32>
    %247 = tpu.matmul %244, %245, %cst_101 {dimension_numbers = #tpu.dot_dimension_numbers<[2], [2], [1], [1], [0, 0, 0, 1, 1, 1], [0], [0]>} : vector<2x8x16xf32>, vector<2x8x16xf32>, vector<2x8x8xf32> -> vector<2x8x8xf32>
    "tpu.trace_stop"() : () -> ()
    %cst_102 = arith.constant 2.500000e-01 : f32
    %248 = vector.broadcast %cst_102 : f32 to vector<2x8x8xf32>
    %249 = arith.mulf %247, %248 : vector<2x8x8xf32>
    %250 = vector.shape_cast %6 : vector<8x8xf32> to vector<1x8x8xf32>
    %251 = vector.broadcast %250 : vector<1x8x8xf32> to vector<2x8x8xf32>
    %252 = arith.addf %249, %251 : vector<2x8x8xf32>
    %cst_103 = arith.constant dense<0xFF800000> : vector<2x8xf32>
    %253 = vector.multi_reduction <maximumf>, %252, %cst_103 [2] : vector<2x8x8xf32> to vector<2x8xf32>
    %254 = vector.shape_cast %253 : vector<2x8xf32> to vector<2x8x1xf32>
    %255 = vector.broadcast %254 : vector<2x8x1xf32> to vector<2x8x8xf32>
    %256 = arith.subf %252, %255 : vector<2x8x8xf32>
    %257 = math.exp %256 : vector<2x8x8xf32>
    %cst_104 = arith.constant dense<0.000000e+00> : vector<2x8xf32>
    %258 = vector.multi_reduction <add>, %257, %cst_104 [2] : vector<2x8x8xf32> to vector<2x8xf32>
    %259 = vector.shape_cast %258 : vector<2x8xf32> to vector<2x8x1xf32>
    %260 = vector.broadcast %259 : vector<2x8x1xf32> to vector<2x8x8xf32>
    %261 = arith.divf %257, %260 : vector<2x8x8xf32>
    "tpu.trace_start"() <{level = 10 : i32, message = "bqk,bkd->bqd"}> : () -> ()
    %cst_105 = arith.constant dense<0.000000e+00> : vector<2x8x16xf32>
    %262 = tpu.matmul %261, %246, %cst_105 {dimension_numbers = #tpu.dot_dimension_numbers<[2], [1], [1], [2], [0, 0, 0, 1, 1, 2], [0], [0]>} : vector<2x8x8xf32>, vector<2x8x16xf32>, vector<2x8x16xf32> -> vector<2x8x16xf32>
    "tpu.trace_stop"() : () -> ()
    %263 = vector.extract_strided_slice %220 {offsets = [0, 0, 32], sizes = [2, 8, 16], strides = [1, 1, 1]} : vector<2x8x64xf32> to vector<2x8x16xf32>
    %264 = vector.extract_strided_slice %222 {offsets = [0, 0, 32], sizes = [2, 8, 16], strides = [1, 1, 1]} : vector<2x8x64xf32> to vector<2x8x16xf32>
    %265 = vector.extract_strided_slice %224 {offsets = [0, 0, 32], sizes = [2, 8, 16], strides = [1, 1, 1]} : vector<2x8x64xf32> to vector<2x8x16xf32>
    "tpu.trace_start"() <{level = 10 : i32, message = "bqd,bkd->bqk"}> : () -> ()
    %cst_106 = arith.constant dense<0.000000e+00> : vector<2x8x8xf32>
    %266 = tpu.matmul %263, %264, %cst_106 {dimension_numbers = #tpu.dot_dimension_numbers<[2], [2], [1], [1], [0, 0, 0, 1, 1, 1], [0], [0]>} : vector<2x8x16xf32>, vector<2x8x16xf32>, vector<2x8x8xf32> -> vector<2x8x8xf32>
    "tpu.trace_stop"() : () -> ()
    %cst_107 = arith.constant 2.500000e-01 : f32
    %267 = vector.broadcast %cst_107 : f32 to vector<2x8x8xf32>
    %268 = arith.mulf %266, %267 : vector<2x8x8xf32>
    %269 = vector.shape_cast %6 : vector<8x8xf32> to vector<1x8x8xf32>
    %270 = vector.broadcast %269 : vector<1x8x8xf32> to vector<2x8x8xf32>
    %271 = arith.addf %268, %270 : vector<2x8x8xf32>
    %cst_108 = arith.constant dense<0xFF800000> : vector<2x8xf32>
    %272 = vector.multi_reduction <maximumf>, %271, %cst_108 [2] : vector<2x8x8xf32> to vector<2x8xf32>
    %273 = vector.shape_cast %272 : vector<2x8xf32> to vector<2x8x1xf32>
    %274 = vector.broadcast %273 : vector<2x8x1xf32> to vector<2x8x8xf32>
    %275 = arith.subf %271, %274 : vector<2x8x8xf32>
    %276 = math.exp %275 : vector<2x8x8xf32>
    %cst_109 = arith.constant dense<0.000000e+00> : vector<2x8xf32>
    %277 = vector.multi_reduction <add>, %276, %cst_109 [2] : vector<2x8x8xf32> to vector<2x8xf32>
    %278 = vector.shape_cast %277 : vector<2x8xf32> to vector<2x8x1xf32>
    %279 = vector.broadcast %278 : vector<2x8x1xf32> to vector<2x8x8xf32>
    %280 = arith.divf %276, %279 : vector<2x8x8xf32>
    "tpu.trace_start"() <{level = 10 : i32, message = "bqk,bkd->bqd"}> : () -> ()
    %cst_110 = arith.constant dense<0.000000e+00> : vector<2x8x16xf32>
    %281 = tpu.matmul %280, %265, %cst_110 {dimension_numbers = #tpu.dot_dimension_numbers<[2], [1], [1], [2], [0, 0, 0, 1, 1, 2], [0], [0]>} : vector<2x8x8xf32>, vector<2x8x16xf32>, vector<2x8x16xf32> -> vector<2x8x16xf32>
    "tpu.trace_stop"() : () -> ()
    %282 = vector.extract_strided_slice %220 {offsets = [0, 0, 48], sizes = [2, 8, 16], strides = [1, 1, 1]} : vector<2x8x64xf32> to vector<2x8x16xf32>
    %283 = vector.extract_strided_slice %222 {offsets = [0, 0, 48], sizes = [2, 8, 16], strides = [1, 1, 1]} : vector<2x8x64xf32> to vector<2x8x16xf32>
    %284 = vector.extract_strided_slice %224 {offsets = [0, 0, 48], sizes = [2, 8, 16], strides = [1, 1, 1]} : vector<2x8x64xf32> to vector<2x8x16xf32>
    "tpu.trace_start"() <{level = 10 : i32, message = "bqd,bkd->bqk"}> : () -> ()
    %cst_111 = arith.constant dense<0.000000e+00> : vector<2x8x8xf32>
    %285 = tpu.matmul %282, %283, %cst_111 {dimension_numbers = #tpu.dot_dimension_numbers<[2], [2], [1], [1], [0, 0, 0, 1, 1, 1], [0], [0]>} : vector<2x8x16xf32>, vector<2x8x16xf32>, vector<2x8x8xf32> -> vector<2x8x8xf32>
    "tpu.trace_stop"() : () -> ()
    %cst_112 = arith.constant 2.500000e-01 : f32
    %286 = vector.broadcast %cst_112 : f32 to vector<2x8x8xf32>
    %287 = arith.mulf %285, %286 : vector<2x8x8xf32>
    %288 = vector.shape_cast %6 : vector<8x8xf32> to vector<1x8x8xf32>
    %289 = vector.broadcast %288 : vector<1x8x8xf32> to vector<2x8x8xf32>
    %290 = arith.addf %287, %289 : vector<2x8x8xf32>
    %cst_113 = arith.constant dense<0xFF800000> : vector<2x8xf32>
    %291 = vector.multi_reduction <maximumf>, %290, %cst_113 [2] : vector<2x8x8xf32> to vector<2x8xf32>
    %292 = vector.shape_cast %291 : vector<2x8xf32> to vector<2x8x1xf32>
    %293 = vector.broadcast %292 : vector<2x8x1xf32> to vector<2x8x8xf32>
    %294 = arith.subf %290, %293 : vector<2x8x8xf32>
    %295 = math.exp %294 : vector<2x8x8xf32>
    %cst_114 = arith.constant dense<0.000000e+00> : vector<2x8xf32>
    %296 = vector.multi_reduction <add>, %295, %cst_114 [2] : vector<2x8x8xf32> to vector<2x8xf32>
    %297 = vector.shape_cast %296 : vector<2x8xf32> to vector<2x8x1xf32>
    %298 = vector.broadcast %297 : vector<2x8x1xf32> to vector<2x8x8xf32>
    %299 = arith.divf %295, %298 : vector<2x8x8xf32>
    "tpu.trace_start"() <{level = 10 : i32, message = "bqk,bkd->bqd"}> : () -> ()
    %cst_115 = arith.constant dense<0.000000e+00> : vector<2x8x16xf32>
    %300 = tpu.matmul %299, %284, %cst_115 {dimension_numbers = #tpu.dot_dimension_numbers<[2], [1], [1], [2], [0, 0, 0, 1, 1, 2], [0], [0]>} : vector<2x8x8xf32>, vector<2x8x16xf32>, vector<2x8x16xf32> -> vector<2x8x16xf32>
    "tpu.trace_stop"() : () -> ()
    %301 = tpu.concatenate %243, %262, %281, %300 in 2 : vector<2x8x16xf32>, vector<2x8x16xf32>, vector<2x8x16xf32>, vector<2x8x16xf32> -> vector<2x8x64xf32>
    %302 = vector.shape_cast %301 : vector<2x8x64xf32> to vector<16x64xf32>
    %c1_116 = arith.constant 1 : index
    %c0_117 = arith.constant 0 : index
    %c0_118 = arith.constant 0 : index
    %303 = vector.load %arg8[%c1_116, %c0_117, %c0_118] : memref<2x64x64xf32, #tpu.memory_space<vmem>>, vector<1x64x64xf32>
    %304 = vector.shape_cast %303 : vector<1x64x64xf32> to vector<64x64xf32>
    %cst_119 = arith.constant dense<0.000000e+00> : vector<16x64xf32>
    %305 = tpu.matmul %302, %304, %cst_119 {dimension_numbers = #tpu.dot_dimension_numbers<[1], [0], [0], [1], [0, 0, 1, 1], [], []>} : vector<16x64xf32>, vector<64x64xf32>, vector<16x64xf32> -> vector<16x64xf32>
    %c1_120 = arith.constant 1 : index
    %c0_121 = arith.constant 0 : index
    %c0_122 = arith.constant 0 : index
    %306 = vector.load %arg9[%c1_120, %c0_121, %c0_122] : memref<2x1x64xf32, #tpu.memory_space<vmem>>, vector<1x1x64xf32>
    %307 = vector.shape_cast %306 : vector<1x1x64xf32> to vector<1x64xf32>
    %308 = vector.broadcast %307 : vector<1x64xf32> to vector<16x64xf32>
    %309 = arith.addf %305, %308 : vector<16x64xf32>
    %310 = arith.addf %309, %185 : vector<16x64xf32>
    %c1_123 = arith.constant 1 : index
    %c0_124 = arith.constant 0 : index
    %c0_125 = arith.constant 0 : index
    %311 = vector.load %arg10[%c1_123, %c0_124, %c0_125] : memref<2x1x64xf32, #tpu.memory_space<vmem>>, vector<1x1x64xf32>
    %312 = vector.shape_cast %311 : vector<1x1x64xf32> to vector<1x64xf32>
    %c1_126 = arith.constant 1 : index
    %c0_127 = arith.constant 0 : index
    %c0_128 = arith.constant 0 : index
    %313 = vector.load %arg11[%c1_126, %c0_127, %c0_128] : memref<2x1x64xf32, #tpu.memory_space<vmem>>, vector<1x1x64xf32>
    %314 = vector.shape_cast %313 : vector<1x1x64xf32> to vector<1x64xf32>
    %cst_129 = arith.constant dense<0.000000e+00> : vector<16xf32>
    %315 = vector.multi_reduction <add>, %310, %cst_129 [1] : vector<16x64xf32> to vector<16xf32>
    %316 = vector.shape_cast %315 : vector<16xf32> to vector<16x1xf32>
    %cst_130 = arith.constant 6.400000e+01 : f32
    %317 = vector.broadcast %cst_130 : f32 to vector<16x1xf32>
    %318 = arith.divf %316, %317 : vector<16x1xf32>
    %319 = vector.broadcast %318 : vector<16x1xf32> to vector<16x64xf32>
    %320 = arith.subf %310, %319 : vector<16x64xf32>
    %321 = arith.mulf %320, %320 : vector<16x64xf32>
    %cst_131 = arith.constant dense<0.000000e+00> : vector<16xf32>
    %322 = vector.multi_reduction <add>, %321, %cst_131 [1] : vector<16x64xf32> to vector<16xf32>
    %323 = vector.shape_cast %322 : vector<16xf32> to vector<16x1xf32>
    %cst_132 = arith.constant 6.400000e+01 : f32
    %324 = vector.broadcast %cst_132 : f32 to vector<16x1xf32>
    %325 = arith.divf %323, %324 : vector<16x1xf32>
    %326 = vector.broadcast %318 : vector<16x1xf32> to vector<16x64xf32>
    %327 = arith.subf %310, %326 : vector<16x64xf32>
    %cst_133 = arith.constant 9.99999974E-6 : f32
    %328 = vector.broadcast %cst_133 : f32 to vector<16x1xf32>
    %329 = arith.addf %325, %328 : vector<16x1xf32>
    %330 = math.rsqrt %329 : vector<16x1xf32>
    %331 = vector.broadcast %330 : vector<16x1xf32> to vector<16x64xf32>
    %332 = arith.mulf %327, %331 : vector<16x64xf32>
    %333 = vector.broadcast %312 : vector<1x64xf32> to vector<16x64xf32>
    %334 = arith.mulf %332, %333 : vector<16x64xf32>
    %335 = vector.broadcast %314 : vector<1x64xf32> to vector<16x64xf32>
    %336 = arith.addf %334, %335 : vector<16x64xf32>
    %c1_134 = arith.constant 1 : index
    %c0_135 = arith.constant 0 : index
    %c0_136 = arith.constant 0 : index
    %337 = vector.load %arg12[%c1_134, %c0_135, %c0_136] : memref<2x64x256xf32, #tpu.memory_space<vmem>>, vector<1x64x256xf32>
    %338 = vector.shape_cast %337 : vector<1x64x256xf32> to vector<64x256xf32>
    %cst_137 = arith.constant dense<0.000000e+00> : vector<16x256xf32>
    %339 = tpu.matmul %336, %338, %cst_137 {dimension_numbers = #tpu.dot_dimension_numbers<[1], [0], [0], [1], [0, 0, 1, 1], [], []>} : vector<16x64xf32>, vector<64x256xf32>, vector<16x256xf32> -> vector<16x256xf32>
    %c1_138 = arith.constant 1 : index
    %c0_139 = arith.constant 0 : index
    %c0_140 = arith.constant 0 : index
    %340 = vector.load %arg13[%c1_138, %c0_139, %c0_140] : memref<2x1x256xf32, #tpu.memory_space<vmem>>, vector<1x1x256xf32>
    %341 = vector.shape_cast %340 : vector<1x1x256xf32> to vector<1x256xf32>
    %342 = vector.broadcast %341 : vector<1x256xf32> to vector<16x256xf32>
    %343 = arith.addf %339, %342 : vector<16x256xf32>
    %cst_141 = arith.constant 5.000000e-01 : f32
    %344 = vector.broadcast %cst_141 : f32 to vector<16x256xf32>
    %345 = arith.mulf %344, %343 : vector<16x256xf32>
    %cst_142 = arith.constant 4.471500e-02 : f32
    %346 = vector.broadcast %cst_142 : f32 to vector<16x256xf32>
    %347 = arith.mulf %346, %343 : vector<16x256xf32>
    %348 = arith.mulf %347, %343 : vector<16x256xf32>
    %349 = arith.mulf %348, %343 : vector<16x256xf32>
    %350 = arith.addf %343, %349 : vector<16x256xf32>
    %cst_143 = arith.constant 0.797884583 : f32
    %351 = vector.broadcast %cst_143 : f32 to vector<16x256xf32>
    %352 = arith.mulf %351, %350 : vector<16x256xf32>
    %353 = math.tanh %352 : vector<16x256xf32>
    %cst_144 = arith.constant 1.000000e+00 : f32
    %354 = vector.broadcast %cst_144 : f32 to vector<16x256xf32>
    %355 = arith.addf %354, %353 : vector<16x256xf32>
    %356 = arith.mulf %345, %355 : vector<16x256xf32>
    %c1_145 = arith.constant 1 : index
    %c0_146 = arith.constant 0 : index
    %c0_147 = arith.constant 0 : index
    %357 = vector.load %arg14[%c1_145, %c0_146, %c0_147] : memref<2x256x64xf32, #tpu.memory_space<vmem>>, vector<1x256x64xf32>
    %358 = vector.shape_cast %357 : vector<1x256x64xf32> to vector<256x64xf32>
    %cst_148 = arith.constant dense<0.000000e+00> : vector<16x64xf32>
    %359 = tpu.matmul %356, %358, %cst_148 {dimension_numbers = #tpu.dot_dimension_numbers<[1], [0], [0], [1], [0, 0, 1, 1], [], []>} : vector<16x256xf32>, vector<256x64xf32>, vector<16x64xf32> -> vector<16x64xf32>
    %c1_149 = arith.constant 1 : index
    %c0_150 = arith.constant 0 : index
    %c0_151 = arith.constant 0 : index
    %360 = vector.load %arg15[%c1_149, %c0_150, %c0_151] : memref<2x1x64xf32, #tpu.memory_space<vmem>>, vector<1x1x64xf32>
    %361 = vector.shape_cast %360 : vector<1x1x64xf32> to vector<1x64xf32>
    %362 = vector.broadcast %361 : vector<1x64xf32> to vector<16x64xf32>
    %363 = arith.addf %359, %362 : vector<16x64xf32>
    %364 = arith.addf %363, %310 : vector<16x64xf32>
    %c0_152 = arith.constant 0 : index
    %c0_153 = arith.constant 0 : index
    %365 = vector.load %arg16[%c0_152, %c0_153] : memref<1x64xf32, #tpu.memory_space<vmem>>, vector<1x64xf32>
    %c0_154 = arith.constant 0 : index
    %c0_155 = arith.constant 0 : index
    %366 = vector.load %arg17[%c0_154, %c0_155] : memref<1x64xf32, #tpu.memory_space<vmem>>, vector<1x64xf32>
    %cst_156 = arith.constant dense<0.000000e+00> : vector<16xf32>
    %367 = vector.multi_reduction <add>, %364, %cst_156 [1] : vector<16x64xf32> to vector<16xf32>
    %368 = vector.shape_cast %367 : vector<16xf32> to vector<16x1xf32>
    %cst_157 = arith.constant 6.400000e+01 : f32
    %369 = vector.broadcast %cst_157 : f32 to vector<16x1xf32>
    %370 = arith.divf %368, %369 : vector<16x1xf32>
    %371 = vector.broadcast %370 : vector<16x1xf32> to vector<16x64xf32>
    %372 = arith.subf %364, %371 : vector<16x64xf32>
    %373 = arith.mulf %372, %372 : vector<16x64xf32>
    %cst_158 = arith.constant dense<0.000000e+00> : vector<16xf32>
    %374 = vector.multi_reduction <add>, %373, %cst_158 [1] : vector<16x64xf32> to vector<16xf32>
    %375 = vector.shape_cast %374 : vector<16xf32> to vector<16x1xf32>
    %cst_159 = arith.constant 6.400000e+01 : f32
    %376 = vector.broadcast %cst_159 : f32 to vector<16x1xf32>
    %377 = arith.divf %375, %376 : vector<16x1xf32>
    %378 = vector.broadcast %370 : vector<16x1xf32> to vector<16x64xf32>
    %379 = arith.subf %364, %378 : vector<16x64xf32>
    %cst_160 = arith.constant 9.99999974E-6 : f32
    %380 = vector.broadcast %cst_160 : f32 to vector<16x1xf32>
    %381 = arith.addf %377, %380 : vector<16x1xf32>
    %382 = math.rsqrt %381 : vector<16x1xf32>
    %383 = vector.broadcast %382 : vector<16x1xf32> to vector<16x64xf32>
    %384 = arith.mulf %379, %383 : vector<16x64xf32>
    %385 = vector.broadcast %365 : vector<1x64xf32> to vector<16x64xf32>
    %386 = arith.mulf %384, %385 : vector<16x64xf32>
    %387 = vector.broadcast %366 : vector<1x64xf32> to vector<16x64xf32>
    %388 = arith.addf %386, %387 : vector<16x64xf32>
    %c0_161 = arith.constant 0 : index
    %c0_162 = arith.constant 0 : index
    %389 = vector.load %arg3[%c0_161, %c0_162] : memref<2x16xf32, #tpu.memory_space<vmem>>, vector<2x16xf32>
    %cst_163 = arith.constant dense<0.000000e+00> : vector<2x64xf32>
    %390 = tpu.matmul %389, %388, %cst_163 {dimension_numbers = #tpu.dot_dimension_numbers<[1], [0], [0], [1], [0, 0, 1, 1], [], []>} : vector<2x16xf32>, vector<16x64xf32>, vector<2x64xf32> -> vector<2x64xf32>
    %c0_164 = arith.constant 0 : index
    %c0_165 = arith.constant 0 : index
    %391 = vector.load %arg18[%c0_164, %c0_165] : memref<64x32xf32, #tpu.memory_space<vmem>>, vector<64x32xf32>
    %cst_166 = arith.constant dense<0.000000e+00> : vector<2x32xf32>
    %392 = tpu.matmul %390, %391, %cst_166 {dimension_numbers = #tpu.dot_dimension_numbers<[1], [0], [0], [1], [0, 0, 1, 1], [], []>} : vector<2x64xf32>, vector<64x32xf32>, vector<2x32xf32> -> vector<2x32xf32>
    %c0_167 = arith.constant 0 : index
    %c0_168 = arith.constant 0 : index
    %393 = vector.load %arg19[%c0_167, %c0_168] : memref<2x32xf32, #tpu.memory_space<vmem>>, vector<2x32xf32>
    tpu.vector_store %arg19[%c0_167, %c0_168], %392 {strides = array<i32>} : memref<2x32xf32, #tpu.memory_space<vmem>>, vector<2x32xf32>,
    return
  }
}

</mosaic_0001>

<llo_original>
// kernel: tpu_custom_call.1
$region0: #{tpu_custom_call.1}
  #allocation0 [shape = 'u32[]', space=smem, size = 0x4, offset = 0x4, fixed_abs, tag = 'smem constant byte address 0x4 - core index']
  #allocation1 [shape = 'u32[144,128]{1,0:T(1,128)}', space=vmem, size = 0x12000, scoped, tag = 'internal scratch']
  %s0 = inlined_call_operand.vmem [shape: f32[2,8,64], index: 0, kind: input, shape index: {}]
  %s1 = inlined_call_operand.vmem [shape: f32[8,64], index: 1, kind: input, shape index: {}]
  %s2 = inlined_call_operand.vmem [shape: f32[8,8], index: 2, kind: input, shape index: {}]
  %s3 = inlined_call_operand.vmem [shape: f32[2,16], index: 3, kind: input, shape index: {}]
  %s4 = inlined_call_operand.vmem [shape: f32[2,1,64], index: 4, kind: input, shape index: {}]
  %s5 = inlined_call_operand.vmem [shape: f32[2,1,64], index: 5, kind: input, shape index: {}]
  %s6 = inlined_call_operand.vmem [shape: f32[2,64,192], index: 6, kind: input, shape index: {}]
  %s7 = inlined_call_operand.vmem [shape: f32[2,1,192], index: 7, kind: input, shape index: {}]
  %s8 = inlined_call_operand.vmem [shape: f32[2,64,64], index: 8, kind: input, shape index: {}]
  %s9 = inlined_call_operand.vmem [shape: f32[2,1,64], index: 9, kind: input, shape index: {}]
  %s10 = inlined_call_operand.vmem [shape: f32[2,1,64], index: 10, kind: input, shape index: {}]
  %s11 = inlined_call_operand.vmem [shape: f32[2,1,64], index: 11, kind: input, shape index: {}]
  %s12 = inlined_call_operand.vmem [shape: f32[2,64,256], index: 12, kind: input, shape index: {}]
  %s13 = inlined_call_operand.vmem [shape: f32[2,1,256], index: 13, kind: input, shape index: {}]
  %s14 = inlined_call_operand.vmem [shape: f32[2,256,64], index: 14, kind: input, shape index: {}]
  %s15 = inlined_call_operand.vmem [shape: f32[2,1,64], index: 15, kind: input, shape index: {}]
  %s16 = inlined_call_operand.vmem [shape: f32[1,64], index: 16, kind: input, shape index: {}]
  %s17 = inlined_call_operand.vmem [shape: f32[1,64], index: 17, kind: input, shape index: {}]
  %s18 = inlined_call_operand.vmem [shape: f32[64,32], index: 18, kind: input, shape index: {}]
  %s19 = inlined_call_operand.hbm [shape: f32[2,32], index: 19, kind: output, shape index: {}]
  %s20 = sld [smem:[#allocation0]]
  $region86: #{tpu_custom_call.1} parent=0
    _
  %s22 = ssub.s32 1, %s20
  %s23 = scalar_select 0, %s22, %s20
  $region1: #{tpu_custom_call.1} parent=0
    #allocation2 [shape = 'u8[1024]{0}', space=vmem, size = 0x400, scoped, tag = 'output window, operand 0, single buffered']
    #allocation3 [shape = 's32[1]{0}', space=sflag, size = 0x4, scoped, tag = 'scoped memory for tpu_custom_call.1']
    %24 = vsyncpa [#allocation3], 0
    // Predicated region
    $region2: #{tpu_custom_call.1} parent=1 // pred_check
      _
    $region3: #{tpu_custom_call.1} parent=1 // pred_check_branch
      %26 = sbr.rel (0) target = $region5
    $region4: #{tpu_custom_call.1} parent=1 // pred_region
      _
    $region5: #{tpu_custom_call.1} parent=1 // pred_fallthru
      _
    // Predicated region
    $region6: #{tpu_custom_call.1} parent=1 // pred_check
      _
    $region7: #{tpu_custom_call.1} parent=1 // pred_check_branch
      %28 = sbr.rel (0) target = $region9
    $region8: #{tpu_custom_call.1} parent=1 // pred_region
      _
    $region9: #{tpu_custom_call.1} parent=1 // pred_fallthru
      _
    // Predicated region
    $region10: #{tpu_custom_call.1} parent=1 // pred_check
      _
    $region11: #{tpu_custom_call.1} parent=1 // pred_check_branch
      %30 = sbr.rel (0) target = $region13
    $region12: #{tpu_custom_call.1} parent=1 // pred_region
      _
    $region13: #{tpu_custom_call.1} parent=1 // pred_fallthru
      _
    // Predicated region
    $region14: #{tpu_custom_call.1} parent=1 // pred_check
      _
    $region15: #{tpu_custom_call.1} parent=1 // pred_check_branch
      %32 = sbr.rel (0) target = $region17
    $region16: #{tpu_custom_call.1} parent=1 // pred_region
      _
    $region17: #{tpu_custom_call.1} parent=1 // pred_fallthru
      _
    // Predicated region
    $region18: #{tpu_custom_call.1} parent=1 // pred_check
      _
    $region19: #{tpu_custom_call.1} parent=1 // pred_check_branch
      %34 = sbr.rel (0) target = $region21
    $region20: #{tpu_custom_call.1} parent=1 // pred_region
      _
    $region21: #{tpu_custom_call.1} parent=1 // pred_fallthru
      _
    // Predicated region
    $region22: #{tpu_custom_call.1} parent=1 // pred_check
      _
    $region23: #{tpu_custom_call.1} parent=1 // pred_check_branch
      %36 = sbr.rel (0) target = $region25
    $region24: #{tpu_custom_call.1} parent=1 // pred_region
      _
    $region25: #{tpu_custom_call.1} parent=1 // pred_fallthru
      _
    // Predicated region
    $region26: #{tpu_custom_call.1} parent=1 // pred_check
      _
    $region27: #{tpu_custom_call.1} parent=1 // pred_check_branch
      %38 = sbr.rel (0) target = $region29
    $region28: #{tpu_custom_call.1} parent=1 // pred_region
      _
    $region29: #{tpu_custom_call.1} parent=1 // pred_fallthru
      _
    // Predicated region
    $region30: #{tpu_custom_call.1} parent=1 // pred_check
      _
    $region31: #{tpu_custom_call.1} parent=1 // pred_check_branch
      %40 = sbr.rel (0) target = $region33
    $region32: #{tpu_custom_call.1} parent=1 // pred_region
      _
    $region33: #{tpu_custom_call.1} parent=1 // pred_fallthru
      _
    // Predicated region
    $region34: #{tpu_custom_call.1} parent=1 // pred_check
      _
    $region35: #{tpu_custom_call.1} parent=1 // pred_check_branch
      %42 = sbr.rel (0) target = $region37
    $region36: #{tpu_custom_call.1} parent=1 // pred_region
      _
    $region37: #{tpu_custom_call.1} parent=1 // pred_fallthru
      _
    // Predicated region
    $region38: #{tpu_custom_call.1} parent=1 // pred_check
      _
    $region39: #{tpu_custom_call.1} parent=1 // pred_check_branch
      %44 = sbr.rel (0) target = $region41
    $region40: #{tpu_custom_call.1} parent=1 // pred_region
      _
    $region41: #{tpu_custom_call.1} parent=1 // pred_fallthru
      _
    // Predicated region
    $region42: #{tpu_custom_call.1} parent=1 // pred_check
      _
    $region43: #{tpu_custom_call.1} parent=1 // pred_check_branch
      %46 = sbr.rel (0) target = $region45
    $region44: #{tpu_custom_call.1} parent=1 // pred_region
      _
    $region45: #{tpu_custom_call.1} parent=1 // pred_fallthru
      _
    // Predicated region
    $region46: #{tpu_custom_call.1} parent=1 // pred_check
      _
    $region47: #{tpu_custom_call.1} parent=1 // pred_check_branch
      %48 = sbr.rel (0) target = $region49
    $region48: #{tpu_custom_call.1} parent=1 // pred_region
      _
    $region49: #{tpu_custom_call.1} parent=1 // pred_fallthru
      _
    // Predicated region
    $region50: #{tpu_custom_call.1} parent=1 // pred_check
      _
    $region51: #{tpu_custom_call.1} parent=1 // pred_check_branch
      %50 = sbr.rel (0) target = $region53
    $region52: #{tpu_custom_call.1} parent=1 // pred_region
      _
    $region53: #{tpu_custom_call.1} parent=1 // pred_fallthru
      _
    // Predicated region
    $region54: #{tpu_custom_call.1} parent=1 // pred_check
      _
    $region55: #{tpu_custom_call.1} parent=1 // pred_check_branch
      %52 = sbr.rel (0) target = $region57
    $region56: #{tpu_custom_call.1} parent=1 // pred_region
      _
    $region57: #{tpu_custom_call.1} parent=1 // pred_fallthru
      _
    // Predicated region
    $region58: #{tpu_custom_call.1} parent=1 // pred_check
      _
    $region59: #{tpu_custom_call.1} parent=1 // pred_check_branch
      %54 = sbr.rel (0) target = $region61
    $region60: #{tpu_custom_call.1} parent=1 // pred_region
      _
    $region61: #{tpu_custom_call.1} parent=1 // pred_fallthru
      _
    // Predicated region
    $region62: #{tpu_custom_call.1} parent=1 // pred_check
      _
    $region63: #{tpu_custom_call.1} parent=1 // pred_check_branch
      %56 = sbr.rel (0) target = $region65
    $region64: #{tpu_custom_call.1} parent=1 // pred_region
      _
    $region65: #{tpu_custom_call.1} parent=1 // pred_fallthru
      _
    // Predicated region
    $region66: #{tpu_custom_call.1} parent=1 // pred_check
      _
    $region67: #{tpu_custom_call.1} parent=1 // pred_check_branch
      %58 = sbr.rel (0) target = $region69
    $region68: #{tpu_custom_call.1} parent=1 // pred_region
      _
    $region69: #{tpu_custom_call.1} parent=1 // pred_fallthru
      _
    // Predicated region
    $region70: #{tpu_custom_call.1} parent=1 // pred_check
      _
    $region71: #{tpu_custom_call.1} parent=1 // pred_check_branch
      %60 = sbr.rel (0) target = $region73
    $region72: #{tpu_custom_call.1} parent=1 // pred_region
      _
    $region73: #{tpu_custom_call.1} parent=1 // pred_fallthru
      _
    // Predicated region
    $region74: #{tpu_custom_call.1} parent=1 // pred_check
      _
    $region75: #{tpu_custom_call.1} parent=1 // pred_check_branch
      %62 = sbr.rel (0) target = $region77
    $region76: #{tpu_custom_call.1} parent=1 // pred_region
      _
    $region77: #{tpu_custom_call.1} parent=1 // pred_fallthru
      _
    %v63 = vld [vmem:[%s0] sm:$0xff]
    %v64 = vld [vmem:[%s0 + $0x8] sm:$0xff]
    %v65 = vld [vmem:[%s1] sm:$0xff]
    %v66 = vadd.f32 %v63, %v65
    %v67 = vadd.f32 %v64, %v65
    %v68 = vld [vmem:[%s2] sm:$0xff]
    %v69 = vld [vmem:[%s4] sm:$0x1]
    %v70 = vld [vmem:[%s5] sm:$0x1]
    %vm71 = vcmask 523264
    %v72 = vsel %vm71, %v66, 0.0
    %73 = vadd.xlane.f32.xlu0 %v72
    %v74 = vpop.xlane.xlu0 %73
    %v75 = vsel %vm71, %v67, 0.0
    %76 = vadd.xlane.f32.xlu0 %v75
    %v77 = vpop.xlane.xlu0 %76
    %v78 = vrcp.pop 64.0
    %v79 = vmul.f32 %v74, %v78
    %v80 = vmul.f32 %v77, %v78
    %v81 = vsub.f32 %v66, %v79
    %v82 = vsub.f32 %v67, %v80
    %v83 = vmul.f32 %v81, %v81
    %v84 = vmul.f32 %v82, %v82
    %v85 = vsel %vm71, %v83, 0.0
    %86 = vadd.xlane.f32.xlu0 %v85
    %v87 = vpop.xlane.xlu0 %86
    %v88 = vsel %vm71, %v84, 0.0
    %89 = vadd.xlane.f32.xlu0 %v88
    %v90 = vpop.xlane.xlu0 %89
    %v91 = vmul.f32 %v87, %v78
    %v92 = vmul.f32 %v90, %v78
    %v93 = vadd.f32 %v91, 1e-05
    %v94 = vadd.f32 %v92, 1e-05
    %v95 = vrsqrt.pop %v93
    %v96 = vrsqrt.pop %v94
    %v97 = vmul.f32 %v81, %v95
    %v98 = vmul.f32 %v82, %v96
    %v100 = vlaneseq
    %v101 = vshrl.u32 %v100, 7
    %v102 = vsub.s32 0, %v101
    %v103 = vrot.slane %v69, %v102
    %v105 = vmul.f32 %v97, %v103
    %v106 = vmul.f32 %v98, %v103
    %v108 = vlaneseq
    %v109 = vshrl.u32 %v108, 7
    %v110 = vsub.s32 0, %v109
    %v111 = vrot.slane %v70, %v110
    %v113 = vadd.f32 %v105, %v111
    %v114 = vadd.f32 %v106, %v111
    %v115 = vld [vmem:[%s6] sm:$0xff]
    %v116 = vld [vmem:[%s6 + $0x8] sm:$0xff]
    %v117 = vld [vmem:[%s6 + $0x10] sm:$0xff]
    %v118 = vld [vmem:[%s6 + $0x18] sm:$0xff]
    %v119 = vld [vmem:[%s6 + $0x20] sm:$0xff]
    %v120 = vld [vmem:[%s6 + $0x28] sm:$0xff]
    %v121 = vld [vmem:[%s6 + $0x30] sm:$0xff]
    %v122 = vld [vmem:[%s6 + $0x38] sm:$0xff]
    %v123 = vld [vmem:[%s6 + $0x40] sm:$0xff]
    %v124 = vld [vmem:[%s6 + $0x48] sm:$0xff]
    %v125 = vld [vmem:[%s6 + $0x50] sm:$0xff]
    %v126 = vld [vmem:[%s6 + $0x58] sm:$0xff]
    %v127 = vld [vmem:[%s6 + $0x60] sm:$0xff]
    %v128 = vld [vmem:[%s6 + $0x68] sm:$0xff]
    %v129 = vld [vmem:[%s6 + $0x70] sm:$0xff]
    %v130 = vld [vmem:[%s6 + $0x78] sm:$0xff]
    %v131 = vld [vmem:[%s7] sm:$0x3]
    %v133 = vlaneseq
    %v134 = vshrl.u32 %v133, 7
    %v135 = vsub.s32 0, %v134
    %v136 = vrot.slane %v131, %v135
    %v137 = vlaneseq
    %v138 = vshrl.u32 %v137, 7
    %v139 = vsub.s32 1, %v138
    %v140 = vrot.slane %v131, %v139
    %v144 = vsel %vm71, %v113, 0
    %v147 = vsel %vm71, %v114, 0
    %149 = vmatprep.subr.mxu0 %v116
    %150 = vmatpush1.msra.mxu0 %v115
    %151 = vmatprep.subr.mxu0 %v118
    %152 = vmatpush1.msra.mxu0 %v117
    %153 = vmatprep.subr.mxu0 %v120
    %154 = vmatpush1.msra.mxu0 %v119
    %155 = vmatprep.subr.mxu0 %v122
    %156 = vmatpush1.msra.mxu0 %v121
    %157 = vmatprep.subr.mxu0 %v124
    %158 = vmatpush1.msra.mxu0 %v123
    %159 = vmatprep.subr.mxu0 %v126
    %160 = vmatpush1.msra.mxu0 %v125
    %161 = vmatprep.subr.mxu0 %v128
    %162 = vmatpush1.msra.mxu0 %v127
    %163 = vmatprep.subr.mxu0 %v130
    %164 = vmatpush1.msra.mxu0 %v129
    %165 = vmatprep.subr.mxu0 0.0
    %166 = vmatpush1.msra.mxu0 0.0
    %167 = vmatprep.subr.mxu0 0.0
    %168 = vmatpush1.msra.mxu0 0.0
    %169 = vmatprep.subr.mxu0 0.0
    %170 = vmatpush1.msra.mxu0 0.0
    %171 = vmatprep.subr.mxu0 0.0
    %172 = vmatpush1.msra.mxu0 0.0
    %173 = vmatprep.subr.mxu0 0.0
    %174 = vmatpush1.msra.mxu0 0.0
    %175 = vmatprep.subr.mxu0 0.0
    %176 = vmatpush1.msra.mxu0 0.0
    %177 = vmatprep.subr.mxu0 0.0
    %178 = vmatpush1.msra.mxu0 0.0
    %179 = vmatprep.subr.mxu0 0.0
    %180 = vmatpush1.msra.mxu0 0.0
    %181 = vmatprep.subr.mxu0 0.0
    %182 = vmatpush1.msra.mxu0 0.0
    %183 = vmatprep.subr.mxu0 0.0
    %184 = vmatpush1.msra.mxu0 0.0
    %185 = vmatprep.subr.mxu0 0.0
    %186 = vmatpush1.msra.mxu0 0.0
    %187 = vmatprep.subr.mxu0 0.0
    %188 = vmatpush1.msra.mxu0 0.0
    %189 = vmatprep.subr.mxu0 0.0
    %190 = vmatpush1.msra.mxu0 0.0
    %191 = vmatprep.subr.mxu0 0.0
    %192 = vmatpush1.msra.mxu0 0.0
    %193 = vmatprep.subr.mxu0 0.0
    %194 = vmatpush1.msra.mxu0 0.0
    %195 = vmatprep.subr.mxu0 0.0
    %196 = vmatpush1.msra.mxu0 0.0
    %197 = vmatprep.subr.mxu0 0.0
    %198 = vmatpush1.msra.mxu0 0.0
    %199 = vmatprep.subr.mxu0 0.0
    %200 = vmatpush1.msra.mxu0 0.0
    %201 = vmatprep.subr.mxu0 0.0
    %202 = vmatpush1.msra.mxu0 0.0
    %203 = vmatprep.subr.mxu0 0.0
    %204 = vmatpush1.msra.mxu0 0.0
    %205 = vmatprep.subr.mxu0 0.0
    %206 = vmatpush1.msra.mxu0 0.0
    %207 = vmatprep.subr.mxu0 0.0
    %208 = vmatpush1.msra.mxu0 0.0
    %209 = vmatprep.subr.mxu0 0.0
    %210 = vmatpush1.msra.mxu0 0.0
    %211 = vmatprep.subr.mxu0 0.0
    %212 = vmatpush1.msra.mxu0 0.0
    %213 = vmatprep.mubr.f32.mxu0 0.0
    %214 = vmatmul.mubr.f32.gmra.mrb[0].mxu0 %v144
    %v215 = vpop.f32.mrb[0].mxu0
    %v216 = vadd.f32 %v136, %v215
    %v217 = vpop.f32.mrb[0].mxu0
    %v218 = vadd.f32 %v140, %v217
    %219 = vmatprep.mubr.f32.mxu0 0.0
    %220 = vmatmul.mubr.f32.gmra.mrb[0].mxu0 %v147
    %v221 = vpop.f32.mrb[0].mxu0
    %v222 = vadd.f32 %v136, %v221
    %v223 = vpop.f32.mrb[0].mxu0
    %v224 = vadd.f32 %v140, %v223
    %225 = vdwg.mxu0
    %227 = vrot.lane.b32.xlu0 %v216, 64
    %v228 = vpop.permute.xlu0 %227
    %vm229 = vcmask 130048
    %v230 = vsel %vm229, %v216, 0
    %v232 = vsel %vm229, %v228, 0
    %234 = vmatprep.subr.mxu0 0.0
    %235 = vmatpush1.xpose.msra.mxu0 %v232
    %236 = vmatprep.subr.mxu0 0.0
    %237 = vmatpush1.xpose.msra.mxu0 0.0
    %238 = vmatprep.subr.mxu0 0.0
    %239 = vmatpush1.xpose.msra.mxu0 0.0
    %240 = vmatprep.subr.mxu0 0.0
    %241 = vmatpush1.xpose.msra.mxu0 0.0
    %242 = vmatprep.subr.mxu0 0.0
    %243 = vmatpush1.xpose.msra.mxu0 0.0
    %244 = vmatprep.subr.mxu0 0.0
    %245 = vmatpush1.xpose.msra.mxu0 0.0
    %246 = vmatprep.subr.mxu0 0.0
    %247 = vmatpush1.xpose.msra.mxu0 0.0
    %248 = vmatprep.subr.mxu0 0.0
    %249 = vmatpush1.xpose.msra.mxu0 0.0
    %250 = vmatprep.subr.mxu0 0.0
    %251 = vmatpush1.xpose.msra.mxu0 0.0
    %252 = vmatprep.subr.mxu0 0.0
    %253 = vmatpush1.xpose.msra.mxu0 0.0
    %254 = vmatprep.subr.mxu0 0.0
    %255 = vmatpush1.xpose.msra.mxu0 0.0
    %256 = vmatprep.subr.mxu0 0.0
    %257 = vmatpush1.xpose.msra.mxu0 0.0
    %258 = vmatprep.subr.mxu0 0.0
    %259 = vmatpush1.xpose.msra.mxu0 0.0
    %260 = vmatprep.subr.mxu0 0.0
    %261 = vmatpush1.xpose.msra.mxu0 0.0
    %262 = vmatprep.subr.mxu0 0.0
    %263 = vmatpush1.xpose.msra.mxu0 0.0
    %264 = vmatprep.subr.mxu0 0.0
    %265 = vmatpush1.xpose.msra.mxu0 0.0
    %266 = vmatprep.subr.mxu0 0.0
    %267 = vmatpush1.xpose.msra.mxu0 0.0
    %268 = vmatprep.subr.mxu0 0.0
    %269 = vmatpush1.xpose.msra.mxu0 0.0
    %270 = vmatprep.subr.mxu0 0.0
    %271 = vmatpush1.xpose.msra.mxu0 0.0
    %272 = vmatprep.subr.mxu0 0.0
    %273 = vmatpush1.xpose.msra.mxu0 0.0
    %274 = vmatprep.subr.mxu0 0.0
    %275 = vmatpush1.xpose.msra.mxu0 0.0
    %276 = vmatprep.subr.mxu0 0.0
    %277 = vmatpush1.xpose.msra.mxu0 0.0
    %278 = vmatprep.subr.mxu0 0.0
    %279 = vmatpush1.xpose.msra.mxu0 0.0
    %280 = vmatprep.subr.mxu0 0.0
    %281 = vmatpush1.xpose.msra.mxu0 0.0
    %282 = vmatprep.subr.mxu0 0.0
    %283 = vmatpush1.xpose.msra.mxu0 0.0
    %284 = vmatprep.subr.mxu0 0.0
    %285 = vmatpush1.xpose.msra.mxu0 0.0
    %286 = vmatprep.subr.mxu0 0.0
    %287 = vmatpush1.xpose.msra.mxu0 0.0
    %288 = vmatprep.subr.mxu0 0.0
    %289 = vmatpush1.xpose.msra.mxu0 0.0
    %290 = vmatprep.subr.mxu0 0.0
    %291 = vmatpush1.xpose.msra.mxu0 0.0
    %292 = vmatprep.subr.mxu0 0.0
    %293 = vmatpush1.xpose.msra.mxu0 0.0
    %294 = vmatprep.subr.mxu0 0.0
    %295 = vmatpush1.xpose.msra.mxu0 0.0
    %296 = vmatprep.subr.mxu0 0.0
    %297 = vmatpush1.xpose.msra.mxu0 0.0
    %298 = vmatprep.mubr.f32.mxu0 0.0
    %299 = vmatmul.mubr.f32.gmra.mrb[0].mxu0 %v230
    %v300 = vpop.f32.mrb[0].mxu0
    %v301 = vadd.f32 0.0, %v300
    %v302 = vpop.f32.mrb[0].mxu0
    %303 = vdwg.mxu0
    %305 = vrot.lane.b32.xlu0 %v222, 64
    %v306 = vpop.permute.xlu0 %305
    %v307 = vsel %vm229, %v222, 0
    %v309 = vsel %vm229, %v306, 0
    %311 = vmatprep.subr.mxu0 0.0
    %312 = vmatpush1.xpose.msra.mxu0 %v309
    %313 = vmatprep.subr.mxu0 0.0
    %314 = vmatpush1.xpose.msra.mxu0 0.0
    %315 = vmatprep.subr.mxu0 0.0
    %316 = vmatpush1.xpose.msra.mxu0 0.0
    %317 = vmatprep.subr.mxu0 0.0
    %318 = vmatpush1.xpose.msra.mxu0 0.0
    %319 = vmatprep.subr.mxu0 0.0
    %320 = vmatpush1.xpose.msra.mxu0 0.0
    %321 = vmatprep.subr.mxu0 0.0
    %322 = vmatpush1.xpose.msra.mxu0 0.0
    %323 = vmatprep.subr.mxu0 0.0
    %324 = vmatpush1.xpose.msra.mxu0 0.0
    %325 = vmatprep.subr.mxu0 0.0
    %326 = vmatpush1.xpose.msra.mxu0 0.0
    %327 = vmatprep.subr.mxu0 0.0
    %328 = vmatpush1.xpose.msra.mxu0 0.0
    %329 = vmatprep.subr.mxu0 0.0
    %330 = vmatpush1.xpose.msra.mxu0 0.0
    %331 = vmatprep.subr.mxu0 0.0
    %332 = vmatpush1.xpose.msra.mxu0 0.0
    %333 = vmatprep.subr.mxu0 0.0
    %334 = vmatpush1.xpose.msra.mxu0 0.0
    %335 = vmatprep.subr.mxu0 0.0
    %336 = vmatpush1.xpose.msra.mxu0 0.0
    %337 = vmatprep.subr.mxu0 0.0
    %338 = vmatpush1.xpose.msra.mxu0 0.0
    %339 = vmatprep.subr.mxu0 0.0
    %340 = vmatpush1.xpose.msra.mxu0 0.0
    %341 = vmatprep.subr.mxu0 0.0
    %342 = vmatpush1.xpose.msra.mxu0 0.0
    %343 = vmatprep.subr.mxu0 0.0
    %344 = vmatpush1.xpose.msra.mxu0 0.0
    %345 = vmatprep.subr.mxu0 0.0
    %346 = vmatpush1.xpose.msra.mxu0 0.0
    %347 = vmatprep.subr.mxu0 0.0
    %348 = vmatpush1.xpose.msra.mxu0 0.0
    %349 = vmatprep.subr.mxu0 0.0
    %350 = vmatpush1.xpose.msra.mxu0 0.0
    %351 = vmatprep.subr.mxu0 0.0
    %352 = vmatpush1.xpose.msra.mxu0 0.0
    %353 = vmatprep.subr.mxu0 0.0
    %354 = vmatpush1.xpose.msra.mxu0 0.0
    %355 = vmatprep.subr.mxu0 0.0
    %356 = vmatpush1.xpose.msra.mxu0 0.0
    %357 = vmatprep.subr.mxu0 0.0
    %358 = vmatpush1.xpose.msra.mxu0 0.0
    %359 = vmatprep.subr.mxu0 0.0
    %360 = vmatpush1.xpose.msra.mxu0 0.0
    %361 = vmatprep.subr.mxu0 0.0
    %362 = vmatpush1.xpose.msra.mxu0 0.0
    %363 = vmatprep.subr.mxu0 0.0
    %364 = vmatpush1.xpose.msra.mxu0 0.0
    %365 = vmatprep.subr.mxu0 0.0
    %366 = vmatpush1.xpose.msra.mxu0 0.0
    %367 = vmatprep.subr.mxu0 0.0
    %368 = vmatpush1.xpose.msra.mxu0 0.0
    %369 = vmatprep.subr.mxu0 0.0
    %370 = vmatpush1.xpose.msra.mxu0 0.0
    %371 = vmatprep.subr.mxu0 0.0
    %372 = vmatpush1.xpose.msra.mxu0 0.0
    %373 = vmatprep.subr.mxu0 0.0
    %374 = vmatpush1.xpose.msra.mxu0 0.0
    %375 = vmatprep.mubr.f32.mxu0 0.0
    %376 = vmatmul.mubr.f32.gmra.mrb[0].mxu0 %v307
    %v377 = vpop.f32.mrb[0].mxu0
    %v378 = vadd.f32 0.0, %v377
    %v379 = vpop.f32.mrb[0].mxu0
    %380 = vdwg.mxu0
    %v381 = vmul.f32 %v301, 0.25
    %v382 = vmul.f32 %v378, 0.25
    %v383 = vadd.f32 %v381, %v68
    %v384 = vadd.f32 %v382, %v68
    %vm385 = vcmask 64512
    %v386 = vsel %vm385, %v383, -inf
    %387 = vmax.xlane.f32.xlu0 %v386
    %v388 = vpop.xlane.xlu0 %387
    %v389 = vsel %vm385, %v384, -inf
    %390 = vmax.xlane.f32.xlu0 %v389
    %v391 = vpop.xlane.xlu0 %390
    %v392 = vsub.f32 %v383, %v388
    %v393 = vsub.f32 %v384, %v391
    %v394 = vmul.f32 %v392, 1.442695
    %v395 = vpow.pop %v394
    %v396 = vmul.f32 %v393, 1.442695
    %v397 = vpow.pop %v396
    %v398 = vsel %vm385, %v395, 0.0
    %399 = vadd.xlane.f32.xlu0 %v398
    %v400 = vpop.xlane.xlu0 %399
    %v401 = vsel %vm385, %v397, 0.0
    %402 = vadd.xlane.f32.xlu0 %v401
    %v403 = vpop.xlane.xlu0 %402
    %v404 = vrcp.pop %v400
    %v405 = vmul.f32 %v395, %v404
    %v406 = vrcp.pop %v403
    %v407 = vmul.f32 %v397, %v406
    %v409 = vsel %vm385, %v405, 0
    %411 = vmatprep.subr.mxu0 0.0
    %412 = vmatpush1.msra.mxu0 %v218
    %413 = vmatprep.subr.mxu0 0.0
    %414 = vmatpush1.msra.mxu0 0.0
    %415 = vmatprep.subr.mxu0 0.0
    %416 = vmatpush1.msra.mxu0 0.0
    %417 = vmatprep.subr.mxu0 0.0
    %418 = vmatpush1.msra.mxu0 0.0
    %419 = vmatprep.subr.mxu0 0.0
    %420 = vmatpush1.msra.mxu0 0.0
    %421 = vmatprep.subr.mxu0 0.0
    %422 = vmatpush1.msra.mxu0 0.0
    %423 = vmatprep.subr.mxu0 0.0
    %424 = vmatpush1.msra.mxu0 0.0
    %425 = vmatprep.subr.mxu0 0.0
    %426 = vmatpush1.msra.mxu0 0.0
    %427 = vmatprep.subr.mxu0 0.0
    %428 = vmatpush1.msra.mxu0 0.0
    %429 = vmatprep.subr.mxu0 0.0
    %430 = vmatpush1.msra.mxu0 0.0
    %431 = vmatprep.subr.mxu0 0.0
    %432 = vmatpush1.msra.mxu0 0.0
    %433 = vmatprep.subr.mxu0 0.0
    %434 = vmatpush1.msra.mxu0 0.0
    %435 = vmatprep.subr.mxu0 0.0
    %436 = vmatpush1.msra.mxu0 0.0
    %437 = vmatprep.subr.mxu0 0.0
    %438 = vmatpush1.msra.mxu0 0.0
    %439 = vmatprep.subr.mxu0 0.0
    %440 = vmatpush1.msra.mxu0 0.0
    %441 = vmatprep.subr.mxu0 0.0
    %442 = vmatpush1.msra.mxu0 0.0
    %443 = vmatprep.subr.mxu0 0.0
    %444 = vmatpush1.msra.mxu0 0.0
    %445 = vmatprep.subr.mxu0 0.0
    %446 = vmatpush1.msra.mxu0 0.0
    %447 = vmatprep.subr.mxu0 0.0
    %448 = vmatpush1.msra.mxu0 0.0
    %449 = vmatprep.subr.mxu0 0.0
    %450 = vmatpush1.msra.mxu0 0.0
    %451 = vmatprep.subr.mxu0 0.0
    %452 = vmatpush1.msra.mxu0 0.0
    %453 = vmatprep.subr.mxu0 0.0
    %454 = vmatpush1.msra.mxu0 0.0
    %455 = vmatprep.subr.mxu0 0.0
    %456 = vmatpush1.msra.mxu0 0.0
    %457 = vmatprep.subr.mxu0 0.0
    %458 = vmatpush1.msra.mxu0 0.0
    %459 = vmatprep.subr.mxu0 0.0
    %460 = vmatpush1.msra.mxu0 0.0
    %461 = vmatprep.subr.mxu0 0.0
    %462 = vmatpush1.msra.mxu0 0.0
    %463 = vmatprep.subr.mxu0 0.0
    %464 = vmatpush1.msra.mxu0 0.0
    %465 = vmatprep.subr.mxu0 0.0
    %466 = vmatpush1.msra.mxu0 0.0
    %467 = vmatprep.subr.mxu0 0.0
    %468 = vmatpush1.msra.mxu0 0.0
    %469 = vmatprep.subr.mxu0 0.0
    %470 = vmatpush1.msra.mxu0 0.0
    %471 = vmatprep.subr.mxu0 0.0
    %472 = vmatpush1.msra.mxu0 0.0
    %473 = vmatprep.subr.mxu0 0.0
    %474 = vmatpush1.msra.mxu0 0.0
    %475 = vmatprep.mubr.f32.mxu0 0.0
    %476 = vmatmul.mubr.f32.gmra.mrb[0].mxu0 %v409
    %v477 = vpop.f32.mrb[0].mxu0
    %v478 = vadd.f32 0.0, %v477
    %v479 = vpop.f32.mrb[0].mxu0
    %480 = vdwg.mxu0
    %v482 = vsel %vm385, %v407, 0
    %484 = vmatprep.subr.mxu0 0.0
    %485 = vmatpush1.msra.mxu0 %v224
    %486 = vmatprep.subr.mxu0 0.0
    %487 = vmatpush1.msra.mxu0 0.0
    %488 = vmatprep.subr.mxu0 0.0
    %489 = vmatpush1.msra.mxu0 0.0
    %490 = vmatprep.subr.mxu0 0.0
    %491 = vmatpush1.msra.mxu0 0.0
    %492 = vmatprep.subr.mxu0 0.0
    %493 = vmatpush1.msra.mxu0 0.0
    %494 = vmatprep.subr.mxu0 0.0
    %495 = vmatpush1.msra.mxu0 0.0
    %496 = vmatprep.subr.mxu0 0.0
    %497 = vmatpush1.msra.mxu0 0.0
    %498 = vmatprep.subr.mxu0 0.0
    %499 = vmatpush1.msra.mxu0 0.0
    %500 = vmatprep.subr.mxu0 0.0
    %501 = vmatpush1.msra.mxu0 0.0
    %502 = vmatprep.subr.mxu0 0.0
    %503 = vmatpush1.msra.mxu0 0.0
    %504 = vmatprep.subr.mxu0 0.0
    %505 = vmatpush1.msra.mxu0 0.0
    %506 = vmatprep.subr.mxu0 0.0
    %507 = vmatpush1.msra.mxu0 0.0
    %508 = vmatprep.subr.mxu0 0.0
    %509 = vmatpush1.msra.mxu0 0.0
    %510 = vmatprep.subr.mxu0 0.0
    %511 = vmatpush1.msra.mxu0 0.0
    %512 = vmatprep.subr.mxu0 0.0
    %513 = vmatpush1.msra.mxu0 0.0
    %514 = vmatprep.subr.mxu0 0.0
    %515 = vmatpush1.msra.mxu0 0.0
    %516 = vmatprep.subr.mxu0 0.0
    %517 = vmatpush1.msra.mxu0 0.0
    %518 = vmatprep.subr.mxu0 0.0
    %519 = vmatpush1.msra.mxu0 0.0
    %520 = vmatprep.subr.mxu0 0.0
    %521 = vmatpush1.msra.mxu0 0.0
    %522 = vmatprep.subr.mxu0 0.0
    %523 = vmatpush1.msra.mxu0 0.0
    %524 = vmatprep.subr.mxu0 0.0
    %525 = vmatpush1.msra.mxu0 0.0
    %526 = vmatprep.subr.mxu0 0.0
    %527 = vmatpush1.msra.mxu0 0.0
    %528 = vmatprep.subr.mxu0 0.0
    %529 = vmatpush1.msra.mxu0 0.0
    %530 = vmatprep.subr.mxu0 0.0
    %531 = vmatpush1.msra.mxu0 0.0
    %532 = vmatprep.subr.mxu0 0.0
    %533 = vmatpush1.msra.mxu0 0.0
    %534 = vmatprep.subr.mxu0 0.0
    %535 = vmatpush1.msra.mxu0 0.0
    %536 = vmatprep.subr.mxu0 0.0
    %537 = vmatpush1.msra.mxu0 0.0
    %538 = vmatprep.subr.mxu0 0.0
    %539 = vmatpush1.msra.mxu0 0.0
    %540 = vmatprep.subr.mxu0 0.0
    %541 = vmatpush1.msra.mxu0 0.0
    %542 = vmatprep.subr.mxu0 0.0
    %543 = vmatpush1.msra.mxu0 0.0
    %544 = vmatprep.subr.mxu0 0.0
    %545 = vmatpush1.msra.mxu0 0.0
    %546 = vmatprep.subr.mxu0 0.0
    %547 = vmatpush1.msra.mxu0 0.0
    %548 = vmatprep.mubr.f32.mxu0 0.0
    %549 = vmatmul.mubr.f32.gmra.mrb[0].mxu0 %v482
    %v550 = vpop.f32.mrb[0].mxu0
    %v551 = vadd.f32 0.0, %v550
    %v552 = vpop.f32.mrb[0].mxu0
    %553 = vdwg.mxu0
    %554 = vrot.lane.b32.xlu0 %v216, 112
    %v555 = vpop.permute.xlu0 %554
    %556 = vrot.lane.b32.xlu0 %v216, 48
    %v557 = vpop.permute.xlu0 %556
    %v558 = vsel %vm229, %v555, 0
    %v560 = vsel %vm229, %v557, 0
    %562 = vmatprep.subr.mxu0 0.0
    %563 = vmatpush1.xpose.msra.mxu0 %v560
    %564 = vmatprep.subr.mxu0 0.0
    %565 = vmatpush1.xpose.msra.mxu0 0.0
    %566 = vmatprep.subr.mxu0 0.0
    %567 = vmatpush1.xpose.msra.mxu0 0.0
    %568 = vmatprep.subr.mxu0 0.0
    %569 = vmatpush1.xpose.msra.mxu0 0.0
    %570 = vmatprep.subr.mxu0 0.0
    %571 = vmatpush1.xpose.msra.mxu0 0.0
    %572 = vmatprep.subr.mxu0 0.0
    %573 = vmatpush1.xpose.msra.mxu0 0.0
    %574 = vmatprep.subr.mxu0 0.0
    %575 = vmatpush1.xpose.msra.mxu0 0.0
    %576 = vmatprep.subr.mxu0 0.0
    %577 = vmatpush1.xpose.msra.mxu0 0.0
    %578 = vmatprep.subr.mxu0 0.0
    %579 = vmatpush1.xpose.msra.mxu0 0.0
    %580 = vmatprep.subr.mxu0 0.0
    %581 = vmatpush1.xpose.msra.mxu0 0.0
    %582 = vmatprep.subr.mxu0 0.0
    %583 = vmatpush1.xpose.msra.mxu0 0.0
    %584 = vmatprep.subr.mxu0 0.0
    %585 = vmatpush1.xpose.msra.mxu0 0.0
    %586 = vmatprep.subr.mxu0 0.0
    %587 = vmatpush1.xpose.msra.mxu0 0.0
    %588 = vmatprep.subr.mxu0 0.0
    %589 = vmatpush1.xpose.msra.mxu0 0.0
    %590 = vmatprep.subr.mxu0 0.0
    %591 = vmatpush1.xpose.msra.mxu0 0.0
    %592 = vmatprep.subr.mxu0 0.0
    %593 = vmatpush1.xpose.msra.mxu0 0.0
    %594 = vmatprep.subr.mxu0 0.0
    %595 = vmatpush1.xpose.msra.mxu0 0.0
    %596 = vmatprep.subr.mxu0 0.0
    %597 = vmatpush1.xpose.msra.mxu0 0.0
    %598 = vmatprep.subr.mxu0 0.0
    %599 = vmatpush1.xpose.msra.mxu0 0.0
    %600 = vmatprep.subr.mxu0 0.0
    %601 = vmatpush1.xpose.msra.mxu0 0.0
    %602 = vmatprep.subr.mxu0 0.0
    %603 = vmatpush1.xpose.msra.mxu0 0.0
    %604 = vmatprep.subr.mxu0 0.0
    %605 = vmatpush1.xpose.msra.mxu0 0.0
    %606 = vmatprep.subr.mxu0 0.0
    %607 = vmatpush1.xpose.msra.mxu0 0.0
    %608 = vmatprep.subr.mxu0 0.0
    %609 = vmatpush1.xpose.msra.mxu0 0.0
    %610 = vmatprep.subr.mxu0 0.0
    %611 = vmatpush1.xpose.msra.mxu0 0.0
    %612 = vmatprep.subr.mxu0 0.0
    %613 = vmatpush1.xpose.msra.mxu0 0.0
    %614 = vmatprep.subr.mxu0 0.0
    %615 = vmatpush1.xpose.msra.mxu0 0.0
    %616 = vmatprep.subr.mxu0 0.0
    %617 = vmatpush1.xpose.msra.mxu0 0.0
    %618 = vmatprep.subr.mxu0 0.0
    %619 = vmatpush1.xpose.msra.mxu0 0.0
    %620 = vmatprep.subr.mxu0 0.0
    %621 = vmatpush1.xpose.msra.mxu0 0.0
    %622 = vmatprep.subr.mxu0 0.0
    %623 = vmatpush1.xpose.msra.mxu0 0.0
    %624 = vmatprep.subr.mxu0 0.0
    %625 = vmatpush1.xpose.msra.mxu0 0.0
    %626 = vmatprep.mubr.f32.mxu0 0.0
    %627 = vmatmul.mubr.f32.gmra.mrb[0].mxu0 %v558
    %v628 = vpop.f32.mrb[0].mxu0
    %v629 = vadd.f32 0.0, %v628
    %v630 = vpop.f32.mrb[0].mxu0
    %631 = vdwg.mxu0
    %632 = vrot.lane.b32.xlu0 %v222, 112
    %v633 = vpop.permute.xlu0 %632
    %634 = vrot.lane.b32.xlu0 %v222, 48
    %v635 = vpop.permute.xlu0 %634
    %v636 = vsel %vm229, %v633, 0
    %v638 = vsel %vm229, %v635, 0
    %640 = vmatprep.subr.mxu0 0.0
    %641 = vmatpush1.xpose.msra.mxu0 %v638
    %642 = vmatprep.subr.mxu0 0.0
    %643 = vmatpush1.xpose.msra.mxu0 0.0
    %644 = vmatprep.subr.mxu0 0.0
    %645 = vmatpush1.xpose.msra.mxu0 0.0
    %646 = vmatprep.subr.mxu0 0.0
    %647 = vmatpush1.xpose.msra.mxu0 0.0
    %648 = vmatprep.subr.mxu0 0.0
    %649 = vmatpush1.xpose.msra.mxu0 0.0
    %650 = vmatprep.subr.mxu0 0.0
    %651 = vmatpush1.xpose.msra.mxu0 0.0
    %652 = vmatprep.subr.mxu0 0.0
    %653 = vmatpush1.xpose.msra.mxu0 0.0
    %654 = vmatprep.subr.mxu0 0.0
    %655 = vmatpush1.xpose.msra.mxu0 0.0
    %656 = vmatprep.subr.mxu0 0.0
    %657 = vmatpush1.xpose.msra.mxu0 0.0
    %658 = vmatprep.subr.mxu0 0.0
    %659 = vmatpush1.xpose.msra.mxu0 0.0
    %660 = vmatprep.subr.mxu0 0.0
    %661 = vmatpush1.xpose.msra.mxu0 0.0
    %662 = vmatprep.subr.mxu0 0.0
    %663 = vmatpush1.xpose.msra.mxu0 0.0
    %664 = vmatprep.subr.mxu0 0.0
    %665 = vmatpush1.xpose.msra.mxu0 0.0
    %666 = vmatprep.subr.mxu0 0.0
    %667 = vmatpush1.xpose.msra.mxu0 0.0
    %668 = vmatprep.subr.mxu0 0.0
    %669 = vmatpush1.xpose.msra.mxu0 0.0
    %670 = vmatprep.subr.mxu0 0.0
    %671 = vmatpush1.xpose.msra.mxu0 0.0
    %672 = vmatprep.subr.mxu0 0.0
    %673 = vmatpush1.xpose.msra.mxu0 0.0
    %674 = vmatprep.subr.mxu0 0.0
    %675 = vmatpush1.xpose.msra.mxu0 0.0
    %676 = vmatprep.subr.mxu0 0.0
    %677 = vmatpush1.xpose.msra.mxu0 0.0
    %678 = vmatprep.subr.mxu0 0.0
    %679 = vmatpush1.xpose.msra.mxu0 0.0
    %680 = vmatprep.subr.mxu0 0.0
    %681 = vmatpush1.xpose.msra.mxu0 0.0
    %682 = vmatprep.subr.mxu0 0.0
    %683 = vmatpush1.xpose.msra.mxu0 0.0
    %684 = vmatprep.subr.mxu0 0.0
    %685 = vmatpush1.xpose.msra.mxu0 0.0
    %686 = vmatprep.subr.mxu0 0.0
    %687 = vmatpush1.xpose.msra.mxu0 0.0
    %688 = vmatprep.subr.mxu0 0.0
    %689 = vmatpush1.xpose.msra.mxu0 0.0
    %690 = vmatprep.subr.mxu0 0.0
    %691 = vmatpush1.xpose.msra.mxu0 0.0
    %692 = vmatprep.subr.mxu0 0.0
    %693 = vmatpush1.xpose.msra.mxu0 0.0
    %694 = vmatprep.subr.mxu0 0.0
    %695 = vmatpush1.xpose.msra.mxu0 0.0
    %696 = vmatprep.subr.mxu0 0.0
    %697 = vmatpush1.xpose.msra.mxu0 0.0
    %698 = vmatprep.subr.mxu0 0.0
    %699 = vmatpush1.xpose.msra.mxu0 0.0
    %700 = vmatprep.subr.mxu0 0.0
    %701 = vmatpush1.xpose.msra.mxu0 0.0
    %702 = vmatprep.subr.mxu0 0.0
    %703 = vmatpush1.xpose.msra.mxu0 0.0
    %704 = vmatprep.mubr.f32.mxu0 0.0
    %705 = vmatmul.mubr.f32.gmra.mrb[0].mxu0 %v636
    %v706 = vpop.f32.mrb[0].mxu0
    %v707 = vadd.f32 0.0, %v706
    %v708 = vpop.f32.mrb[0].mxu0
    %709 = vdwg.mxu0
    %v710 = vmul.f32 %v629, 0.25
    %v711 = vmul.f32 %v707, 0.25
    %v712 = vadd.f32 %v710, %v68
    %v713 = vadd.f32 %v711, %v68
    %v714 = vsel %vm385, %v712, -inf
    %715 = vmax.xlane.f32.xlu0 %v714
    %v716 = vpop.xlane.xlu0 %715
    %v717 = vsel %vm385, %v713, -inf
    %718 = vmax.xlane.f32.xlu0 %v717
    %v719 = vpop.xlane.xlu0 %718
    %v720 = vsub.f32 %v712, %v716
    %v721 = vsub.f32 %v713, %v719
    %v722 = vmul.f32 %v720, 1.442695
    %v723 = vpow.pop %v722
    %v724 = vmul.f32 %v721, 1.442695
    %v725 = vpow.pop %v724
    %v726 = vsel %vm385, %v723, 0.0
    %727 = vadd.xlane.f32.xlu0 %v726
    %v728 = vpop.xlane.xlu0 %727
    %v729 = vsel %vm385, %v725, 0.0
    %730 = vadd.xlane.f32.xlu0 %v729
    %v731 = vpop.xlane.xlu0 %730
    %v732 = vrcp.pop %v728
    %v733 = vmul.f32 %v723, %v732
    %v734 = vrcp.pop %v731
    %v735 = vmul.f32 %v725, %v734
    %737 = vrot.lane.b32.xlu0 %v218, 112
    %v738 = vpop.permute.xlu0 %737
    %v741 = vsel %vm385, %v733, 0
    %743 = vmatprep.subr.mxu0 0.0
    %744 = vmatpush1.msra.mxu0 %v738
    %745 = vmatprep.subr.mxu0 0.0
    %746 = vmatpush1.msra.mxu0 0.0
    %747 = vmatprep.subr.mxu0 0.0
    %748 = vmatpush1.msra.mxu0 0.0
    %749 = vmatprep.subr.mxu0 0.0
    %750 = vmatpush1.msra.mxu0 0.0
    %751 = vmatprep.subr.mxu0 0.0
    %752 = vmatpush1.msra.mxu0 0.0
    %753 = vmatprep.subr.mxu0 0.0
    %754 = vmatpush1.msra.mxu0 0.0
    %755 = vmatprep.subr.mxu0 0.0
    %756 = vmatpush1.msra.mxu0 0.0
    %757 = vmatprep.subr.mxu0 0.0
    %758 = vmatpush1.msra.mxu0 0.0
    %759 = vmatprep.subr.mxu0 0.0
    %760 = vmatpush1.msra.mxu0 0.0
    %761 = vmatprep.subr.mxu0 0.0
    %762 = vmatpush1.msra.mxu0 0.0
    %763 = vmatprep.subr.mxu0 0.0
    %764 = vmatpush1.msra.mxu0 0.0
    %765 = vmatprep.subr.mxu0 0.0
    %766 = vmatpush1.msra.mxu0 0.0
    %767 = vmatprep.subr.mxu0 0.0
    %768 = vmatpush1.msra.mxu0 0.0
    %769 = vmatprep.subr.mxu0 0.0
    %770 = vmatpush1.msra.mxu0 0.0
    %771 = vmatprep.subr.mxu0 0.0
    %772 = vmatpush1.msra.mxu0 0.0
    %773 = vmatprep.subr.mxu0 0.0
    %774 = vmatpush1.msra.mxu0 0.0
    %775 = vmatprep.subr.mxu0 0.0
    %776 = vmatpush1.msra.mxu0 0.0
    %777 = vmatprep.subr.mxu0 0.0
    %778 = vmatpush1.msra.mxu0 0.0
    %779 = vmatprep.subr.mxu0 0.0
    %780 = vmatpush1.msra.mxu0 0.0
    %781 = vmatprep.subr.mxu0 0.0
    %782 = vmatpush1.msra.mxu0 0.0
    %783 = vmatprep.subr.mxu0 0.0
    %784 = vmatpush1.msra.mxu0 0.0
    %785 = vmatprep.subr.mxu0 0.0
    %786 = vmatpush1.msra.mxu0 0.0
    %787 = vmatprep.subr.mxu0 0.0
    %788 = vmatpush1.msra.mxu0 0.0
    %789 = vmatprep.subr.mxu0 0.0
    %790 = vmatpush1.msra.mxu0 0.0
    %791 = vmatprep.subr.mxu0 0.0
    %792 = vmatpush1.msra.mxu0 0.0
    %793 = vmatprep.subr.mxu0 0.0
    %794 = vmatpush1.msra.mxu0 0.0
    %795 = vmatprep.subr.mxu0 0.0
    %796 = vmatpush1.msra.mxu0 0.0
    %797 = vmatprep.subr.mxu0 0.0
    %798 = vmatpush1.msra.mxu0 0.0
    %799 = vmatprep.subr.mxu0 0.0
    %800 = vmatpush1.msra.mxu0 0.0
    %801 = vmatprep.subr.mxu0 0.0
    %802 = vmatpush1.msra.mxu0 0.0
    %803 = vmatprep.subr.mxu0 0.0
    %804 = vmatpush1.msra.mxu0 0.0
    %805 = vmatprep.subr.mxu0 0.0
    %806 = vmatpush1.msra.mxu0 0.0
    %807 = vmatprep.mubr.f32.mxu0 0.0
    %808 = vmatmul.mubr.f32.gmra.mrb[0].mxu0 %v741
    %v809 = vpop.f32.mrb[0].mxu0
    %v810 = vadd.f32 0.0, %v809
    %v811 = vpop.f32.mrb[0].mxu0
    %812 = vdwg.mxu0
    %814 = vrot.lane.b32.xlu0 %v224, 112
    %v815 = vpop.permute.xlu0 %814
    %v818 = vsel %vm385, %v735, 0
    %820 = vmatprep.subr.mxu0 0.0
    %821 = vmatpush1.msra.mxu0 %v815
    %822 = vmatprep.subr.mxu0 0.0
    %823 = vmatpush1.msra.mxu0 0.0
    %824 = vmatprep.subr.mxu0 0.0
    %825 = vmatpush1.msra.mxu0 0.0
    %826 = vmatprep.subr.mxu0 0.0
    %827 = vmatpush1.msra.mxu0 0.0
    %828 = vmatprep.subr.mxu0 0.0
    %829 = vmatpush1.msra.mxu0 0.0
    %830 = vmatprep.subr.mxu0 0.0
    %831 = vmatpush1.msra.mxu0 0.0
    %832 = vmatprep.subr.mxu0 0.0
    %833 = vmatpush1.msra.mxu0 0.0
    %834 = vmatprep.subr.mxu0 0.0
    %835 = vmatpush1.msra.mxu0 0.0
    %836 = vmatprep.subr.mxu0 0.0
    %837 = vmatpush1.msra.mxu0 0.0
    %838 = vmatprep.subr.mxu0 0.0
    %839 = vmatpush1.msra.mxu0 0.0
    %840 = vmatprep.subr.mxu0 0.0
    %841 = vmatpush1.msra.mxu0 0.0
    %842 = vmatprep.subr.mxu0 0.0
    %843 = vmatpush1.msra.mxu0 0.0
    %844 = vmatprep.subr.mxu0 0.0
    %845 = vmatpush1.msra.mxu0 0.0
    %846 = vmatprep.subr.mxu0 0.0
    %847 = vmatpush1.msra.mxu0 0.0
    %848 = vmatprep.subr.mxu0 0.0
    %849 = vmatpush1.msra.mxu0 0.0
    %850 = vmatprep.subr.mxu0 0.0
    %851 = vmatpush1.msra.mxu0 0.0
    %852 = vmatprep.subr.mxu0 0.0
    %853 = vmatpush1.msra.mxu0 0.0
    %854 = vmatprep.subr.mxu0 0.0
    %855 = vmatpush1.msra.mxu0 0.0
    %856 = vmatprep.subr.mxu0 0.0
    %857 = vmatpush1.msra.mxu0 0.0
    %858 = vmatprep.subr.mxu0 0.0
    %859 = vmatpush1.msra.mxu0 0.0
    %860 = vmatprep.subr.mxu0 0.0
    %861 = vmatpush1.msra.mxu0 0.0
    %862 = vmatprep.subr.mxu0 0.0
    %863 = vmatpush1.msra.mxu0 0.0
    %864 = vmatprep.subr.mxu0 0.0
    %865 = vmatpush1.msra.mxu0 0.0
    %866 = vmatprep.subr.mxu0 0.0
    %867 = vmatpush1.msra.mxu0 0.0
    %868 = vmatprep.subr.mxu0 0.0
    %869 = vmatpush1.msra.mxu0 0.0
    %870 = vmatprep.subr.mxu0 0.0
    %871 = vmatpush1.msra.mxu0 0.0
    %872 = vmatprep.subr.mxu0 0.0
    %873 = vmatpush1.msra.mxu0 0.0
    %874 = vmatprep.subr.mxu0 0.0
    %875 = vmatpush1.msra.mxu0 0.0
    %876 = vmatprep.subr.mxu0 0.0
    %877 = vmatpush1.msra.mxu0 0.0
    %878 = vmatprep.subr.mxu0 0.0
    %879 = vmatpush1.msra.mxu0 0.0
    %880 = vmatprep.subr.mxu0 0.0
    %881 = vmatpush1.msra.mxu0 0.0
    %882 = vmatprep.subr.mxu0 0.0
    %883 = vmatpush1.msra.mxu0 0.0
    %884 = vmatprep.mubr.f32.mxu0 0.0
    %885 = vmatmul.mubr.f32.gmra.mrb[0].mxu0 %v818
    %v886 = vpop.f32.mrb[0].mxu0
    %v887 = vadd.f32 0.0, %v886
    %v888 = vpop.f32.mrb[0].mxu0
    %889 = vdwg.mxu0
    %890 = vrot.lane.b32.xlu0 %v216, 96
    %v891 = vpop.permute.xlu0 %890
    %892 = vrot.lane.b32.xlu0 %v216, 32
    %v893 = vpop.permute.xlu0 %892
    %v894 = vsel %vm229, %v891, 0
    %v896 = vsel %vm229, %v893, 0
    %898 = vmatprep.subr.mxu0 0.0
    %899 = vmatpush1.xpose.msra.mxu0 %v896
    %900 = vmatprep.subr.mxu0 0.0
    %901 = vmatpush1.xpose.msra.mxu0 0.0
    %902 = vmatprep.subr.mxu0 0.0
    %903 = vmatpush1.xpose.msra.mxu0 0.0
    %904 = vmatprep.subr.mxu0 0.0
    %905 = vmatpush1.xpose.msra.mxu0 0.0
    %906 = vmatprep.subr.mxu0 0.0
    %907 = vmatpush1.xpose.msra.mxu0 0.0
    %908 = vmatprep.subr.mxu0 0.0
    %909 = vmatpush1.xpose.msra.mxu0 0.0
    %910 = vmatprep.subr.mxu0 0.0
    %911 = vmatpush1.xpose.msra.mxu0 0.0
    %912 = vmatprep.subr.mxu0 0.0
    %913 = vmatpush1.xpose.msra.mxu0 0.0
    %914 = vmatprep.subr.mxu0 0.0
    %915 = vmatpush1.xpose.msra.mxu0 0.0
    %916 = vmatprep.subr.mxu0 0.0
    %917 = vmatpush1.xpose.msra.mxu0 0.0
    %918 = vmatprep.subr.mxu0 0.0
    %919 = vmatpush1.xpose.msra.mxu0 0.0
    %920 = vmatprep.subr.mxu0 0.0
    %921 = vmatpush1.xpose.msra.mxu0 0.0
    %922 = vmatprep.subr.mxu0 0.0
    %923 = vmatpush1.xpose.msra.mxu0 0.0
    %924 = vmatprep.subr.mxu0 0.0
    %925 = vmatpush1.xpose.msra.mxu0 0.0
    %926 = vmatprep.subr.mxu0 0.0
    %927 = vmatpush1.xpose.msra.mxu0 0.0
    %928 = vmatprep.subr.mxu0 0.0
    %929 = vmatpush1.xpose.msra.mxu0 0.0
    %930 = vmatprep.subr.mxu0 0.0
    %931 = vmatpush1.xpose.msra.mxu0 0.0
    %932 = vmatprep.subr.mxu0 0.0
    %933 = vmatpush1.xpose.msra.mxu0 0.0
    %934 = vmatprep.subr.mxu0 0.0
    %935 = vmatpush1.xpose.msra.mxu0 0.0
    %936 = vmatprep.subr.mxu0 0.0
    %937 = vmatpush1.xpose.msra.mxu0 0.0
    %938 = vmatprep.subr.mxu0 0.0
    %939 = vmatpush1.xpose.msra.mxu0 0.0
    %940 = vmatprep.subr.mxu0 0.0
    %941 = vmatpush1.xpose.msra.mxu0 0.0
    %942 = vmatprep.subr.mxu0 0.0
    %943 = vmatpush1.xpose.msra.mxu0 0.0
    %944 = vmatprep.subr.mxu0 0.0
    %945 = vmatpush1.xpose.msra.mxu0 0.0
    %946 = vmatprep.subr.mxu0 0.0
    %947 = vmatpush1.xpose.msra.mxu0 0.0
    %948 = vmatprep.subr.mxu0 0.0
    %949 = vmatpush1.xpose.msra.mxu0 0.0
    %950 = vmatprep.subr.mxu0 0.0
    %951 = vmatpush1.xpose.msra.mxu0 0.0
    %952 = vmatprep.subr.mxu0 0.0
    %953 = vmatpush1.xpose.msra.mxu0 0.0
    %954 = vmatprep.subr.mxu0 0.0
    %955 = vmatpush1.xpose.msra.mxu0 0.0
    %956 = vmatprep.subr.mxu0 0.0
    %957 = vmatpush1.xpose.msra.mxu0 0.0
    %958 = vmatprep.subr.mxu0 0.0
    %959 = vmatpush1.xpose.msra.mxu0 0.0
    %960 = vmatprep.subr.mxu0 0.0
    %961 = vmatpush1.xpose.msra.mxu0 0.0
    %962 = vmatprep.mubr.f32.mxu0 0.0
    %963 = vmatmul.mubr.f32.gmra.mrb[0].mxu0 %v894
    %v964 = vpop.f32.mrb[0].mxu0
    %v965 = vadd.f32 0.0, %v964
    %v966 = vpop.f32.mrb[0].mxu0
    %967 = vdwg.mxu0
    %968 = vrot.lane.b32.xlu0 %v222, 96
    %v969 = vpop.permute.xlu0 %968
    %970 = vrot.lane.b32.xlu0 %v222, 32
    %v971 = vpop.permute.xlu0 %970
    %v972 = vsel %vm229, %v969, 0
    %v974 = vsel %vm229, %v971, 0
    %976 = vmatprep.subr.mxu0 0.0
    %977 = vmatpush1.xpose.msra.mxu0 %v974
    %978 = vmatprep.subr.mxu0 0.0
    %979 = vmatpush1.xpose.msra.mxu0 0.0
    %980 = vmatprep.subr.mxu0 0.0
    %981 = vmatpush1.xpose.msra.mxu0 0.0
    %982 = vmatprep.subr.mxu0 0.0
    %983 = vmatpush1.xpose.msra.mxu0 0.0
    %984 = vmatprep.subr.mxu0 0.0
    %985 = vmatpush1.xpose.msra.mxu0 0.0
    %986 = vmatprep.subr.mxu0 0.0
    %987 = vmatpush1.xpose.msra.mxu0 0.0
    %988 = vmatprep.subr.mxu0 0.0
    %989 = vmatpush1.xpose.msra.mxu0 0.0
    %990 = vmatprep.subr.mxu0 0.0
    %991 = vmatpush1.xpose.msra.mxu0 0.0
    %992 = vmatprep.subr.mxu0 0.0
    %993 = vmatpush1.xpose.msra.mxu0 0.0
    %994 = vmatprep.subr.mxu0 0.0
    %995 = vmatpush1.xpose.msra.mxu0 0.0
    %996 = vmatprep.subr.mxu0 0.0
    %997 = vmatpush1.xpose.msra.mxu0 0.0
    %998 = vmatprep.subr.mxu0 0.0
    %999 = vmatpush1.xpose.msra.mxu0 0.0
    %1000 = vmatprep.subr.mxu0 0.0
    %1001 = vmatpush1.xpose.msra.mxu0 0.0
    %1002 = vmatprep.subr.mxu0 0.0
    %1003 = vmatpush1.xpose.msra.mxu0 0.0
    %1004 = vmatprep.subr.mxu0 0.0
    %1005 = vmatpush1.xpose.msra.mxu0 0.0
    %1006 = vmatprep.subr.mxu0 0.0
    %1007 = vmatpush1.xpose.msra.mxu0 0.0
    %1008 = vmatprep.subr.mxu0 0.0
    %1009 = vmatpush1.xpose.msra.mxu0 0.0
    %1010 = vmatprep.subr.mxu0 0.0
    %1011 = vmatpush1.xpose.msra.mxu0 0.0
    %1012 = vmatprep.subr.mxu0 0.0
    %1013 = vmatpush1.xpose.msra.mxu0 0.0
    %1014 = vmatprep.subr.mxu0 0.0
    %1015 = vmatpush1.xpose.msra.mxu0 0.0
    %1016 = vmatprep.subr.mxu0 0.0
    %1017 = vmatpush1.xpose.msra.mxu0 0.0
    %1018 = vmatprep.subr.mxu0 0.0
    %1019 = vmatpush1.xpose.msra.mxu0 0.0
    %1020 = vmatprep.subr.mxu0 0.0
    %1021 = vmatpush1.xpose.msra.mxu0 0.0
    %1022 = vmatprep.subr.mxu0 0.0
    %1023 = vmatpush1.xpose.msra.mxu0 0.0
    %1024 = vmatprep.subr.mxu0 0.0
    %1025 = vmatpush1.xpose.msra.mxu0 0.0
    %1026 = vmatprep.subr.mxu0 0.0
    %1027 = vmatpush1.xpose.msra.mxu0 0.0
    %1028 = vmatprep.subr.mxu0 0.0
    %1029 = vmatpush1.xpose.msra.mxu0 0.0
    %1030 = vmatprep.subr.mxu0 0.0
    %1031 = vmatpush1.xpose.msra.mxu0 0.0
    %1032 = vmatprep.subr.mxu0 0.0
    %1033 = vmatpush1.xpose.msra.mxu0 0.0
    %1034 = vmatprep.subr.mxu0 0.0
    %1035 = vmatpush1.xpose.msra.mxu0 0.0
    %1036 = vmatprep.subr.mxu0 0.0
    %1037 = vmatpush1.xpose.msra.mxu0 0.0
    %1038 = vmatprep.subr.mxu0 0.0
    %1039 = vmatpush1.xpose.msra.mxu0 0.0
    %1040 = vmatprep.mubr.f32.mxu0 0.0
    %1041 = vmatmul.mubr.f32.gmra.mrb[0].mxu0 %v972
    %v1042 = vpop.f32.mrb[0].mxu0
    %v1043 = vadd.f32 0.0, %v1042
    %v1044 = vpop.f32.mrb[0].mxu0
    %1045 = vdwg.mxu0
    %v1046 = vmul.f32 %v965, 0.25
    %v1047 = vmul.f32 %v1043, 0.25
    %v1048 = vadd.f32 %v1046, %v68
    %v1049 = vadd.f32 %v1047, %v68
    %v1050 = vsel %vm385, %v1048, -inf
    %1051 = vmax.xlane.f32.xlu0 %v1050
    %v1052 = vpop.xlane.xlu0 %1051
    %v1053 = vsel %vm385, %v1049, -inf
    %1054 = vmax.xlane.f32.xlu0 %v1053
    %v1055 = vpop.xlane.xlu0 %1054
    %v1056 = vsub.f32 %v1048, %v1052
    %v1057 = vsub.f32 %v1049, %v1055
    %v1058 = vmul.f32 %v1056, 1.442695
    %v1059 = vpow.pop %v1058
    %v1060 = vmul.f32 %v1057, 1.442695
    %v1061 = vpow.pop %v1060
    %v1062 = vsel %vm385, %v1059, 0.0
    %1063 = vadd.xlane.f32.xlu0 %v1062
    %v1064 = vpop.xlane.xlu0 %1063
    %v1065 = vsel %vm385, %v1061, 0.0
    %1066 = vadd.xlane.f32.xlu0 %v1065
    %v1067 = vpop.xlane.xlu0 %1066
    %v1068 = vrcp.pop %v1064
    %v1069 = vmul.f32 %v1059, %v1068
    %v1070 = vrcp.pop %v1067
    %v1071 = vmul.f32 %v1061, %v1070
    %1072 = vrot.lane.b32.xlu0 %v218, 96
    %v1073 = vpop.permute.xlu0 %1072
    %v1076 = vsel %vm385, %v1069, 0
    %1078 = vmatprep.subr.mxu0 0.0
    %1079 = vmatpush1.msra.mxu0 %v1073
    %1080 = vmatprep.subr.mxu0 0.0
    %1081 = vmatpush1.msra.mxu0 0.0
    %1082 = vmatprep.subr.mxu0 0.0
    %1083 = vmatpush1.msra.mxu0 0.0
    %1084 = vmatprep.subr.mxu0 0.0
    %1085 = vmatpush1.msra.mxu0 0.0
    %1086 = vmatprep.subr.mxu0 0.0
    %1087 = vmatpush1.msra.mxu0 0.0
    %1088 = vmatprep.subr.mxu0 0.0
    %1089 = vmatpush1.msra.mxu0 0.0
    %1090 = vmatprep.subr.mxu0 0.0
    %1091 = vmatpush1.msra.mxu0 0.0
    %1092 = vmatprep.subr.mxu0 0.0
    %1093 = vmatpush1.msra.mxu0 0.0
    %1094 = vmatprep.subr.mxu0 0.0
    %1095 = vmatpush1.msra.mxu0 0.0
    %1096 = vmatprep.subr.mxu0 0.0
    %1097 = vmatpush1.msra.mxu0 0.0
    %1098 = vmatprep.subr.mxu0 0.0
    %1099 = vmatpush1.msra.mxu0 0.0
    %1100 = vmatprep.subr.mxu0 0.0
    %1101 = vmatpush1.msra.mxu0 0.0
    %1102 = vmatprep.subr.mxu0 0.0
    %1103 = vmatpush1.msra.mxu0 0.0
    %1104 = vmatprep.subr.mxu0 0.0
    %1105 = vmatpush1.msra.mxu0 0.0
    %1106 = vmatprep.subr.mxu0 0.0
    %1107 = vmatpush1.msra.mxu0 0.0
    %1108 = vmatprep.subr.mxu0 0.0
    %1109 = vmatpush1.msra.mxu0 0.0
    %1110 = vmatprep.subr.mxu0 0.0
    %1111 = vmatpush1.msra.mxu0 0.0
    %1112 = vmatprep.subr.mxu0 0.0
    %1113 = vmatpush1.msra.mxu0 0.0
    %1114 = vmatprep.subr.mxu0 0.0
    %1115 = vmatpush1.msra.mxu0 0.0
    %1116 = vmatprep.subr.mxu0 0.0
    %1117 = vmatpush1.msra.mxu0 0.0
    %1118 = vmatprep.subr.mxu0 0.0
    %1119 = vmatpush1.msra.mxu0 0.0
    %1120 = vmatprep.subr.mxu0 0.0
    %1121 = vmatpush1.msra.mxu0 0.0
    %1122 = vmatprep.subr.mxu0 0.0
    %1123 = vmatpush1.msra.mxu0 0.0
    %1124 = vmatprep.subr.mxu0 0.0
    %1125 = vmatpush1.msra.mxu0 0.0
    %1126 = vmatprep.subr.mxu0 0.0
    %1127 = vmatpush1.msra.mxu0 0.0
    %1128 = vmatprep.subr.mxu0 0.0
    %1129 = vmatpush1.msra.mxu0 0.0
    %1130 = vmatprep.subr.mxu0 0.0
    %1131 = vmatpush1.msra.mxu0 0.0
    %1132 = vmatprep.subr.mxu0 0.0
    %1133 = vmatpush1.msra.mxu0 0.0
    %1134 = vmatprep.subr.mxu0 0.0
    %1135 = vmatpush1.msra.mxu0 0.0
    %1136 = vmatprep.subr.mxu0 0.0
    %1137 = vmatpush1.msra.mxu0 0.0
    %1138 = vmatprep.subr.mxu0 0.0
    %1139 = vmatpush1.msra.mxu0 0.0
    %1140 = vmatprep.subr.mxu0 0.0
    %1141 = vmatpush1.msra.mxu0 0.0
    %1142 = vmatprep.mubr.f32.mxu0 0.0
    %1143 = vmatmul.mubr.f32.gmra.mrb[0].mxu0 %v1076
    %v1144 = vpop.f32.mrb[0].mxu0
    %v1145 = vadd.f32 0.0, %v1144
    %v1146 = vpop.f32.mrb[0].mxu0
    %1147 = vdwg.mxu0
    %1148 = vrot.lane.b32.xlu0 %v224, 96
    %v1149 = vpop.permute.xlu0 %1148
    %v1152 = vsel %vm385, %v1071, 0
    %1154 = vmatprep.subr.mxu0 0.0
    %1155 = vmatpush1.msra.mxu0 %v1149
    %1156 = vmatprep.subr.mxu0 0.0
    %1157 = vmatpush1.msra.mxu0 0.0
    %1158 = vmatprep.subr.mxu0 0.0
    %1159 = vmatpush1.msra.mxu0 0.0
    %1160 = vmatprep.subr.mxu0 0.0
    %1161 = vmatpush1.msra.mxu0 0.0
    %1162 = vmatprep.subr.mxu0 0.0
    %1163 = vmatpush1.msra.mxu0 0.0
    %1164 = vmatprep.subr.mxu0 0.0
    %1165 = vmatpush1.msra.mxu0 0.0
    %1166 = vmatprep.subr.mxu0 0.0
    %1167 = vmatpush1.msra.mxu0 0.0
    %1168 = vmatprep.subr.mxu0 0.0
    %1169 = vmatpush1.msra.mxu0 0.0
    %1170 = vmatprep.subr.mxu0 0.0
    %1171 = vmatpush1.msra.mxu0 0.0
    %1172 = vmatprep.subr.mxu0 0.0
    %1173 = vmatpush1.msra.mxu0 0.0
    %1174 = vmatprep.subr.mxu0 0.0
    %1175 = vmatpush1.msra.mxu0 0.0
    %1176 = vmatprep.subr.mxu0 0.0
    %1177 = vmatpush1.msra.mxu0 0.0
    %1178 = vmatprep.subr.mxu0 0.0
    %1179 = vmatpush1.msra.mxu0 0.0
    %1180 = vmatprep.subr.mxu0 0.0
    %1181 = vmatpush1.msra.mxu0 0.0
    %1182 = vmatprep.subr.mxu0 0.0
    %1183 = vmatpush1.msra.mxu0 0.0
    %1184 = vmatprep.subr.mxu0 0.0
    %1185 = vmatpush1.msra.mxu0 0.0
    %1186 = vmatprep.subr.mxu0 0.0
    %1187 = vmatpush1.msra.mxu0 0.0
    %1188 = vmatprep.subr.mxu0 0.0
    %1189 = vmatpush1.msra.mxu0 0.0
    %1190 = vmatprep.subr.mxu0 0.0
    %1191 = vmatpush1.msra.mxu0 0.0
    %1192 = vmatprep.subr.mxu0 0.0
    %1193 = vmatpush1.msra.mxu0 0.0
    %1194 = vmatprep.subr.mxu0 0.0
    %1195 = vmatpush1.msra.mxu0 0.0
    %1196 = vmatprep.subr.mxu0 0.0
    %1197 = vmatpush1.msra.mxu0 0.0
    %1198 = vmatprep.subr.mxu0 0.0
    %1199 = vmatpush1.msra.mxu0 0.0
    %1200 = vmatprep.subr.mxu0 0.0
    %1201 = vmatpush1.msra.mxu0 0.0
    %1202 = vmatprep.subr.mxu0 0.0
    %1203 = vmatpush1.msra.mxu0 0.0
    %1204 = vmatprep.subr.mxu0 0.0
    %1205 = vmatpush1.msra.mxu0 0.0
    %1206 = vmatprep.subr.mxu0 0.0
    %1207 = vmatpush1.msra.mxu0 0.0
    %1208 = vmatprep.subr.mxu0 0.0
    %1209 = vmatpush1.msra.mxu0 0.0
    %1210 = vmatprep.subr.mxu0 0.0
    %1211 = vmatpush1.msra.mxu0 0.0
    %1212 = vmatprep.subr.mxu0 0.0
    %1213 = vmatpush1.msra.mxu0 0.0
    %1214 = vmatprep.subr.mxu0 0.0
    %1215 = vmatpush1.msra.mxu0 0.0
    %1216 = vmatprep.subr.mxu0 0.0
    %1217 = vmatpush1.msra.mxu0 0.0
    %1218 = vmatprep.mubr.f32.mxu0 0.0
    %1219 = vmatmul.mubr.f32.gmra.mrb[0].mxu0 %v1152
    %v1220 = vpop.f32.mrb[0].mxu0
    %v1221 = vadd.f32 0.0, %v1220
    %v1222 = vpop.f32.mrb[0].mxu0
    %1223 = vdwg.mxu0
    %1224 = vrot.lane.b32.xlu0 %v216, 80
    %v1225 = vpop.permute.xlu0 %1224
    %1226 = vrot.lane.b32.xlu0 %v216, 16
    %v1227 = vpop.permute.xlu0 %1226
    %v1228 = vsel %vm229, %v1225, 0
    %v1230 = vsel %vm229, %v1227, 0
    %1232 = vmatprep.subr.mxu0 0.0
    %1233 = vmatpush1.xpose.msra.mxu0 %v1230
    %1234 = vmatprep.subr.mxu0 0.0
    %1235 = vmatpush1.xpose.msra.mxu0 0.0
    %1236 = vmatprep.subr.mxu0 0.0
    %1237 = vmatpush1.xpose.msra.mxu0 0.0
    %1238 = vmatprep.subr.mxu0 0.0
    %1239 = vmatpush1.xpose.msra.mxu0 0.0
    %1240 = vmatprep.subr.mxu0 0.0
    %1241 = vmatpush1.xpose.msra.mxu0 0.0
    %1242 = vmatprep.subr.mxu0 0.0
    %1243 = vmatpush1.xpose.msra.mxu0 0.0
    %1244 = vmatprep.subr.mxu0 0.0
    %1245 = vmatpush1.xpose.msra.mxu0 0.0
    %1246 = vmatprep.subr.mxu0 0.0
    %1247 = vmatpush1.xpose.msra.mxu0 0.0
    %1248 = vmatprep.subr.mxu0 0.0
    %1249 = vmatpush1.xpose.msra.mxu0 0.0
    %1250 = vmatprep.subr.mxu0 0.0
    %1251 = vmatpush1.xpose.msra.mxu0 0.0
    %1252 = vmatprep.subr.mxu0 0.0
    %1253 = vmatpush1.xpose.msra.mxu0 0.0
    %1254 = vmatprep.subr.mxu0 0.0
    %1255 = vmatpush1.xpose.msra.mxu0 0.0
    %1256 = vmatprep.subr.mxu0 0.0
    %1257 = vmatpush1.xpose.msra.mxu0 0.0
    %1258 = vmatprep.subr.mxu0 0.0
    %1259 = vmatpush1.xpose.msra.mxu0 0.0
    %1260 = vmatprep.subr.mxu0 0.0
    %1261 = vmatpush1.xpose.msra.mxu0 0.0
    %1262 = vmatprep.subr.mxu0 0.0
    %1263 = vmatpush1.xpose.msra.mxu0 0.0
    %1264 = vmatprep.subr.mxu0 0.0
    %1265 = vmatpush1.xpose.msra.mxu0 0.0
    %1266 = vmatprep.subr.mxu0 0.0
    %1267 = vmatpush1.xpose.msra.mxu0 0.0
    %1268 = vmatprep.subr.mxu0 0.0
    %1269 = vmatpush1.xpose.msra.mxu0 0.0
    %1270 = vmatprep.subr.mxu0 0.0
    %1271 = vmatpush1.xpose.msra.mxu0 0.0
    %1272 = vmatprep.subr.mxu0 0.0
    %1273 = vmatpush1.xpose.msra.mxu0 0.0
    %1274 = vmatprep.subr.mxu0 0.0
    %1275 = vmatpush1.xpose.msra.mxu0 0.0
    %1276 = vmatprep.subr.mxu0 0.0
    %1277 = vmatpush1.xpose.msra.mxu0 0.0
    %1278 = vmatprep.subr.mxu0 0.0
    %1279 = vmatpush1.xpose.msra.mxu0 0.0
    %1280 = vmatprep.subr.mxu0 0.0
    %1281 = vmatpush1.xpose.msra.mxu0 0.0
    %1282 = vmatprep.subr.mxu0 0.0
    %1283 = vmatpush1.xpose.msra.mxu0 0.0
    %1284 = vmatprep.subr.mxu0 0.0
    %1285 = vmatpush1.xpose.msra.mxu0 0.0
    %1286 = vmatprep.subr.mxu0 0.0
    %1287 = vmatpush1.xpose.msra.mxu0 0.0
    %1288 = vmatprep.subr.mxu0 0.0
    %1289 = vmatpush1.xpose.msra.mxu0 0.0
    %1290 = vmatprep.subr.mxu0 0.0
    %1291 = vmatpush1.xpose.msra.mxu0 0.0
    %1292 = vmatprep.subr.mxu0 0.0
    %1293 = vmatpush1.xpose.msra.mxu0 0.0
    %1294 = vmatprep.subr.mxu0 0.0
    %1295 = vmatpush1.xpose.msra.mxu0 0.0
    %1296 = vmatprep.mubr.f32.mxu0 0.0
    %1297 = vmatmul.mubr.f32.gmra.mrb[0].mxu0 %v1228
    %v1298 = vpop.f32.mrb[0].mxu0
    %v1299 = vadd.f32 0.0, %v1298
    %v1300 = vpop.f32.mrb[0].mxu0
    %1301 = vdwg.mxu0
    %1302 = vrot.lane.b32.xlu0 %v222, 80
    %v1303 = vpop.permute.xlu0 %1302
    %1304 = vrot.lane.b32.xlu0 %v222, 16
    %v1305 = vpop.permute.xlu0 %1304
    %v1306 = vsel %vm229, %v1303, 0
    %v1308 = vsel %vm229, %v1305, 0
    %1310 = vmatprep.subr.mxu0 0.0
    %1311 = vmatpush1.xpose.msra.mxu0 %v1308
    %1312 = vmatprep.subr.mxu0 0.0
    %1313 = vmatpush1.xpose.msra.mxu0 0.0
    %1314 = vmatprep.subr.mxu0 0.0
    %1315 = vmatpush1.xpose.msra.mxu0 0.0
    %1316 = vmatprep.subr.mxu0 0.0
    %1317 = vmatpush1.xpose.msra.mxu0 0.0
    %1318 = vmatprep.subr.mxu0 0.0
    %1319 = vmatpush1.xpose.msra.mxu0 0.0
    %1320 = vmatprep.subr.mxu0 0.0
    %1321 = vmatpush1.xpose.msra.mxu0 0.0
    %1322 = vmatprep.subr.mxu0 0.0
    %1323 = vmatpush1.xpose.msra.mxu0 0.0
    %1324 = vmatprep.subr.mxu0 0.0
    %1325 = vmatpush1.xpose.msra.mxu0 0.0
    %1326 = vmatprep.subr.mxu0 0.0
    %1327 = vmatpush1.xpose.msra.mxu0 0.0
    %1328 = vmatprep.subr.mxu0 0.0
    %1329 = vmatpush1.xpose.msra.mxu0 0.0
    %1330 = vmatprep.subr.mxu0 0.0
    %1331 = vmatpush1.xpose.msra.mxu0 0.0
    %1332 = vmatprep.subr.mxu0 0.0
    %1333 = vmatpush1.xpose.msra.mxu0 0.0
    %1334 = vmatprep.subr.mxu0 0.0
    %1335 = vmatpush1.xpose.msra.mxu0 0.0
    %1336 = vmatprep.subr.mxu0 0.0
    %1337 = vmatpush1.xpose.msra.mxu0 0.0
    %1338 = vmatprep.subr.mxu0 0.0
    %1339 = vmatpush1.xpose.msra.mxu0 0.0
    %1340 = vmatprep.subr.mxu0 0.0
    %1341 = vmatpush1.xpose.msra.mxu0 0.0
    %1342 = vmatprep.subr.mxu0 0.0
    %1343 = vmatpush1.xpose.msra.mxu0 0.0
    %1344 = vmatprep.subr.mxu0 0.0
    %1345 = vmatpush1.xpose.msra.mxu0 0.0
    %1346 = vmatprep.subr.mxu0 0.0
    %1347 = vmatpush1.xpose.msra.mxu0 0.0
    %1348 = vmatprep.subr.mxu0 0.0
    %1349 = vmatpush1.xpose.msra.mxu0 0.0
    %1350 = vmatprep.subr.mxu0 0.0
    %1351 = vmatpush1.xpose.msra.mxu0 0.0
    %1352 = vmatprep.subr.mxu0 0.0
    %1353 = vmatpush1.xpose.msra.mxu0 0.0
    %1354 = vmatprep.subr.mxu0 0.0
    %1355 = vmatpush1.xpose.msra.mxu0 0.0
    %1356 = vmatprep.subr.mxu0 0.0
    %1357 = vmatpush1.xpose.msra.mxu0 0.0
    %1358 = vmatprep.subr.mxu0 0.0
    %1359 = vmatpush1.xpose.msra.mxu0 0.0
    %1360 = vmatprep.subr.mxu0 0.0
    %1361 = vmatpush1.xpose.msra.mxu0 0.0
    %1362 = vmatprep.subr.mxu0 0.0
    %1363 = vmatpush1.xpose.msra.mxu0 0.0
    %1364 = vmatprep.subr.mxu0 0.0
    %1365 = vmatpush1.xpose.msra.mxu0 0.0
    %1366 = vmatprep.subr.mxu0 0.0
    %1367 = vmatpush1.xpose.msra.mxu0 0.0
    %1368 = vmatprep.subr.mxu0 0.0
    %1369 = vmatpush1.xpose.msra.mxu0 0.0
    %1370 = vmatprep.subr.mxu0 0.0
    %1371 = vmatpush1.xpose.msra.mxu0 0.0
    %1372 = vmatprep.subr.mxu0 0.0
    %1373 = vmatpush1.xpose.msra.mxu0 0.0
    %1374 = vmatprep.mubr.f32.mxu0 0.0
    %1375 = vmatmul.mubr.f32.gmra.mrb[0].mxu0 %v1306
    %v1376 = vpop.f32.mrb[0].mxu0
    %v1377 = vadd.f32 0.0, %v1376
    %v1378 = vpop.f32.mrb[0].mxu0
    %1379 = vdwg.mxu0
    %v1380 = vmul.f32 %v1299, 0.25
    %v1381 = vmul.f32 %v1377, 0.25
    %v1382 = vadd.f32 %v1380, %v68
    %v1383 = vadd.f32 %v1381, %v68
    %v1384 = vsel %vm385, %v1382, -inf
    %1385 = vmax.xlane.f32.xlu0 %v1384
    %v1386 = vpop.xlane.xlu0 %1385
    %v1387 = vsel %vm385, %v1383, -inf
    %1388 = vmax.xlane.f32.xlu0 %v1387
    %v1389 = vpop.xlane.xlu0 %1388
    %v1390 = vsub.f32 %v1382, %v1386
    %v1391 = vsub.f32 %v1383, %v1389
    %v1392 = vmul.f32 %v1390, 1.442695
    %v1393 = vpow.pop %v1392
    %v1394 = vmul.f32 %v1391, 1.442695
    %v1395 = vpow.pop %v1394
    %v1396 = vsel %vm385, %v1393, 0.0
    %1397 = vadd.xlane.f32.xlu0 %v1396
    %v1398 = vpop.xlane.xlu0 %1397
    %v1399 = vsel %vm385, %v1395, 0.0
    %1400 = vadd.xlane.f32.xlu0 %v1399
    %v1401 = vpop.xlane.xlu0 %1400
    %v1402 = vrcp.pop %v1398
    %v1403 = vmul.f32 %v1393, %v1402
    %v1404 = vrcp.pop %v1401
    %v1405 = vmul.f32 %v1395, %v1404
    %1406 = vrot.lane.b32.xlu0 %v218, 80
    %v1407 = vpop.permute.xlu0 %1406
    %v1410 = vsel %vm385, %v1403, 0
    %1412 = vmatprep.subr.mxu0 0.0
    %1413 = vmatpush1.msra.mxu0 %v1407
    %1414 = vmatprep.subr.mxu0 0.0
    %1415 = vmatpush1.msra.mxu0 0.0
    %1416 = vmatprep.subr.mxu0 0.0
    %1417 = vmatpush1.msra.mxu0 0.0
    %1418 = vmatprep.subr.mxu0 0.0
    %1419 = vmatpush1.msra.mxu0 0.0
    %1420 = vmatprep.subr.mxu0 0.0
    %1421 = vmatpush1.msra.mxu0 0.0
    %1422 = vmatprep.subr.mxu0 0.0
    %1423 = vmatpush1.msra.mxu0 0.0
    %1424 = vmatprep.subr.mxu0 0.0
    %1425 = vmatpush1.msra.mxu0 0.0
    %1426 = vmatprep.subr.mxu0 0.0
    %1427 = vmatpush1.msra.mxu0 0.0
    %1428 = vmatprep.subr.mxu0 0.0
    %1429 = vmatpush1.msra.mxu0 0.0
    %1430 = vmatprep.subr.mxu0 0.0
    %1431 = vmatpush1.msra.mxu0 0.0
    %1432 = vmatprep.subr.mxu0 0.0
    %1433 = vmatpush1.msra.mxu0 0.0
    %1434 = vmatprep.subr.mxu0 0.0
    %1435 = vmatpush1.msra.mxu0 0.0
    %1436 = vmatprep.subr.mxu0 0.0
    %1437 = vmatpush1.msra.mxu0 0.0
    %1438 = vmatprep.subr.mxu0 0.0
    %1439 = vmatpush1.msra.mxu0 0.0
    %1440 = vmatprep.subr.mxu0 0.0
    %1441 = vmatpush1.msra.mxu0 0.0
    %1442 = vmatprep.subr.mxu0 0.0
    %1443 = vmatpush1.msra.mxu0 0.0
    %1444 = vmatprep.subr.mxu0 0.0
    %1445 = vmatpush1.msra.mxu0 0.0
    %1446 = vmatprep.subr.mxu0 0.0
    %1447 = vmatpush1.msra.mxu0 0.0
    %1448 = vmatprep.subr.mxu0 0.0
    %1449 = vmatpush1.msra.mxu0 0.0
    %1450 = vmatprep.subr.mxu0 0.0
    %1451 = vmatpush1.msra.mxu0 0.0
    %1452 = vmatprep.subr.mxu0 0.0
    %1453 = vmatpush1.msra.mxu0 0.0
    %1454 = vmatprep.subr.mxu0 0.0
    %1455 = vmatpush1.msra.mxu0 0.0
    %1456 = vmatprep.subr.mxu0 0.0
    %1457 = vmatpush1.msra.mxu0 0.0
    %1458 = vmatprep.subr.mxu0 0.0
    %1459 = vmatpush1.msra.mxu0 0.0
    %1460 = vmatprep.subr.mxu0 0.0
    %1461 = vmatpush1.msra.mxu0 0.0
    %1462 = vmatprep.subr.mxu0 0.0
    %1463 = vmatpush1.msra.mxu0 0.0
    %1464 = vmatprep.subr.mxu0 0.0
    %1465 = vmatpush1.msra.mxu0 0.0
    %1466 = vmatprep.subr.mxu0 0.0
    %1467 = vmatpush1.msra.mxu0 0.0
    %1468 = vmatprep.subr.mxu0 0.0
    %1469 = vmatpush1.msra.mxu0 0.0
    %1470 = vmatprep.subr.mxu0 0.0
    %1471 = vmatpush1.msra.mxu0 0.0
    %1472 = vmatprep.subr.mxu0 0.0
    %1473 = vmatpush1.msra.mxu0 0.0
    %1474 = vmatprep.subr.mxu0 0.0
    %1475 = vmatpush1.msra.mxu0 0.0
    %1476 = vmatprep.mubr.f32.mxu0 0.0
    %1477 = vmatmul.mubr.f32.gmra.mrb[0].mxu0 %v1410
    %v1478 = vpop.f32.mrb[0].mxu0
    %v1479 = vadd.f32 0.0, %v1478
    %v1480 = vpop.f32.mrb[0].mxu0
    %1481 = vdwg.mxu0
    %1482 = vrot.lane.b32.xlu0 %v224, 80
    %v1483 = vpop.permute.xlu0 %1482
    %v1486 = vsel %vm385, %v1405, 0
    %1488 = vmatprep.subr.mxu0 0.0
    %1489 = vmatpush1.msra.mxu0 %v1483
    %1490 = vmatprep.subr.mxu0 0.0
    %1491 = vmatpush1.msra.mxu0 0.0
    %1492 = vmatprep.subr.mxu0 0.0
    %1493 = vmatpush1.msra.mxu0 0.0
    %1494 = vmatprep.subr.mxu0 0.0
    %1495 = vmatpush1.msra.mxu0 0.0
    %1496 = vmatprep.subr.mxu0 0.0
    %1497 = vmatpush1.msra.mxu0 0.0
    %1498 = vmatprep.subr.mxu0 0.0
    %1499 = vmatpush1.msra.mxu0 0.0
    %1500 = vmatprep.subr.mxu0 0.0
    %1501 = vmatpush1.msra.mxu0 0.0
    %1502 = vmatprep.subr.mxu0 0.0
    %1503 = vmatpush1.msra.mxu0 0.0
    %1504 = vmatprep.subr.mxu0 0.0
    %1505 = vmatpush1.msra.mxu0 0.0
    %1506 = vmatprep.subr.mxu0 0.0
    %1507 = vmatpush1.msra.mxu0 0.0
    %1508 = vmatprep.subr.mxu0 0.0
    %1509 = vmatpush1.msra.mxu0 0.0
    %1510 = vmatprep.subr.mxu0 0.0
    %1511 = vmatpush1.msra.mxu0 0.0
    %1512 = vmatprep.subr.mxu0 0.0
    %1513 = vmatpush1.msra.mxu0 0.0
    %1514 = vmatprep.subr.mxu0 0.0
    %1515 = vmatpush1.msra.mxu0 0.0
    %1516 = vmatprep.subr.mxu0 0.0
    %1517 = vmatpush1.msra.mxu0 0.0
    %1518 = vmatprep.subr.mxu0 0.0
    %1519 = vmatpush1.msra.mxu0 0.0
    %1520 = vmatprep.subr.mxu0 0.0
    %1521 = vmatpush1.msra.mxu0 0.0
    %1522 = vmatprep.subr.mxu0 0.0
    %1523 = vmatpush1.msra.mxu0 0.0
    %1524 = vmatprep.subr.mxu0 0.0
    %1525 = vmatpush1.msra.mxu0 0.0
    %1526 = vmatprep.subr.mxu0 0.0
    %1527 = vmatpush1.msra.mxu0 0.0
    %1528 = vmatprep.subr.mxu0 0.0
    %1529 = vmatpush1.msra.mxu0 0.0
    %1530 = vmatprep.subr.mxu0 0.0
    %1531 = vmatpush1.msra.mxu0 0.0
    %1532 = vmatprep.subr.mxu0 0.0
    %1533 = vmatpush1.msra.mxu0 0.0
    %1534 = vmatprep.subr.mxu0 0.0
    %1535 = vmatpush1.msra.mxu0 0.0
    %1536 = vmatprep.subr.mxu0 0.0
    %1537 = vmatpush1.msra.mxu0 0.0
    %1538 = vmatprep.subr.mxu0 0.0
    %1539 = vmatpush1.msra.mxu0 0.0
    %1540 = vmatprep.subr.mxu0 0.0
    %1541 = vmatpush1.msra.mxu0 0.0
    %1542 = vmatprep.subr.mxu0 0.0
    %1543 = vmatpush1.msra.mxu0 0.0
    %1544 = vmatprep.subr.mxu0 0.0
    %1545 = vmatpush1.msra.mxu0 0.0
    %1546 = vmatprep.subr.mxu0 0.0
    %1547 = vmatpush1.msra.mxu0 0.0
    %1548 = vmatprep.subr.mxu0 0.0
    %1549 = vmatpush1.msra.mxu0 0.0
    %1550 = vmatprep.subr.mxu0 0.0
    %1551 = vmatpush1.msra.mxu0 0.0
    %1552 = vmatprep.mubr.f32.mxu0 0.0
    %1553 = vmatmul.mubr.f32.gmra.mrb[0].mxu0 %v1486
    %v1554 = vpop.f32.mrb[0].mxu0
    %v1555 = vadd.f32 0.0, %v1554
    %v1556 = vpop.f32.mrb[0].mxu0
    %1557 = vdwg.mxu0
    %1560 = vrot.lane.b32.xlu0 %v810, 16
    %v1561 = vpop.permute.xlu0 %1560
    %1562 = vrot.lane.b32.xlu0 %v887, 16
    %v1563 = vpop.permute.xlu0 %1562
    %1568 = vrot.lane.b32.xlu0 %v1145, 32
    %v1569 = vpop.permute.xlu0 %1568
    %1570 = vrot.lane.b32.xlu0 %v1221, 32
    %v1571 = vpop.permute.xlu0 %1570
    %1576 = vrot.lane.b32.xlu0 %v1479, 48
    %v1577 = vpop.permute.xlu0 %1576
    %1578 = vrot.lane.b32.xlu0 %v1555, 48
    %v1579 = vpop.permute.xlu0 %1578
    %v1582 = vsel %vm229, %v478, %v1561
    %v1583 = vsel %vm229, %v551, %v1563
    %vm1584 = vcmask 261120
    %v1585 = vsel %vm1584, %v1582, %v1569
    %v1586 = vsel %vm1584, %v1583, %v1571
    %vm1587 = vcmask 392192
    %v1588 = vsel %vm1587, %v1585, %v1577
    %v1589 = vsel %vm1587, %v1586, %v1579
    %v1590 = vld [vmem:[%s8] sm:$0xff]
    %v1591 = vld [vmem:[%s8 + $0x8] sm:$0xff]
    %v1592 = vld [vmem:[%s8 + $0x10] sm:$0xff]
    %v1593 = vld [vmem:[%s8 + $0x18] sm:$0xff]
    %v1594 = vld [vmem:[%s8 + $0x20] sm:$0xff]
    %v1595 = vld [vmem:[%s8 + $0x28] sm:$0xff]
    %v1596 = vld [vmem:[%s8 + $0x30] sm:$0xff]
    %v1597 = vld [vmem:[%s8 + $0x38] sm:$0xff]
    %v1598 = vld [vmem:[%s9] sm:$0x1]
    %v1600 = vlaneseq
    %v1601 = vshrl.u32 %v1600, 7
    %v1602 = vsub.s32 0, %v1601
    %v1603 = vrot.slane %v1598, %v1602
    %v1606 = vsel %vm71, %v1588, 0
    %v1609 = vsel %vm71, %v1589, 0
    %1611 = vmatprep.subr.mxu0 0.0
    %1612 = vmatpush1.msra.mxu0 %v1590
    %1613 = vmatprep.subr.mxu0 0.0
    %1614 = vmatpush1.msra.mxu0 %v1591
    %1615 = vmatprep.subr.mxu0 0.0
    %1616 = vmatpush1.msra.mxu0 %v1592
    %1617 = vmatprep.subr.mxu0 0.0
    %1618 = vmatpush1.msra.mxu0 %v1593
    %1619 = vmatprep.subr.mxu0 0.0
    %1620 = vmatpush1.msra.mxu0 %v1594
    %1621 = vmatprep.subr.mxu0 0.0
    %1622 = vmatpush1.msra.mxu0 %v1595
    %1623 = vmatprep.subr.mxu0 0.0
    %1624 = vmatpush1.msra.mxu0 %v1596
    %1625 = vmatprep.subr.mxu0 0.0
    %1626 = vmatpush1.msra.mxu0 %v1597
    %1627 = vmatprep.subr.mxu0 0.0
    %1628 = vmatpush1.msra.mxu0 0.0
    %1629 = vmatprep.subr.mxu0 0.0
    %1630 = vmatpush1.msra.mxu0 0.0
    %1631 = vmatprep.subr.mxu0 0.0
    %1632 = vmatpush1.msra.mxu0 0.0
    %1633 = vmatprep.subr.mxu0 0.0
    %1634 = vmatpush1.msra.mxu0 0.0
    %1635 = vmatprep.subr.mxu0 0.0
    %1636 = vmatpush1.msra.mxu0 0.0
    %1637 = vmatprep.subr.mxu0 0.0
    %1638 = vmatpush1.msra.mxu0 0.0
    %1639 = vmatprep.subr.mxu0 0.0
    %1640 = vmatpush1.msra.mxu0 0.0
    %1641 = vmatprep.subr.mxu0 0.0
    %1642 = vmatpush1.msra.mxu0 0.0
    %1643 = vmatprep.subr.mxu0 0.0
    %1644 = vmatpush1.msra.mxu0 0.0
    %1645 = vmatprep.subr.mxu0 0.0
    %1646 = vmatpush1.msra.mxu0 0.0
    %1647 = vmatprep.subr.mxu0 0.0
    %1648 = vmatpush1.msra.mxu0 0.0
    %1649 = vmatprep.subr.mxu0 0.0
    %1650 = vmatpush1.msra.mxu0 0.0
    %1651 = vmatprep.subr.mxu0 0.0
    %1652 = vmatpush1.msra.mxu0 0.0
    %1653 = vmatprep.subr.mxu0 0.0
    %1654 = vmatpush1.msra.mxu0 0.0
    %1655 = vmatprep.subr.mxu0 0.0
    %1656 = vmatpush1.msra.mxu0 0.0
    %1657 = vmatprep.subr.mxu0 0.0
    %1658 = vmatpush1.msra.mxu0 0.0
    %1659 = vmatprep.subr.mxu0 0.0
    %1660 = vmatpush1.msra.mxu0 0.0
    %1661 = vmatprep.subr.mxu0 0.0
    %1662 = vmatpush1.msra.mxu0 0.0
    %1663 = vmatprep.subr.mxu0 0.0
    %1664 = vmatpush1.msra.mxu0 0.0
    %1665 = vmatprep.subr.mxu0 0.0
    %1666 = vmatpush1.msra.mxu0 0.0
    %1667 = vmatprep.subr.mxu0 0.0
    %1668 = vmatpush1.msra.mxu0 0.0
    %1669 = vmatprep.subr.mxu0 0.0
    %1670 = vmatpush1.msra.mxu0 0.0
    %1671 = vmatprep.subr.mxu0 0.0
    %1672 = vmatpush1.msra.mxu0 0.0
    %1673 = vmatprep.subr.mxu0 0.0
    %1674 = vmatpush1.msra.mxu0 0.0
    %1675 = vmatprep.mubr.f32.mxu0 0.0
    %1676 = vmatmul.mubr.f32.gmra.mrb[0].mxu0 %v1606
    %v1677 = vpop.f32.mrb[0].mxu0
    %v1678 = vadd.f32 %v1603, %v1677
    %v1679 = vpop.f32.mrb[0].mxu0
    %1680 = vmatprep.mubr.f32.mxu0 0.0
    %1681 = vmatmul.mubr.f32.gmra.mrb[0].mxu0 %v1609
    %v1682 = vpop.f32.mrb[0].mxu0
    %v1683 = vadd.f32 %v1603, %v1682
    %v1684 = vpop.f32.mrb[0].mxu0
    %1685 = vdwg.mxu0
    %v1686 = vadd.f32 %v1678, %v66
    %v1687 = vadd.f32 %v1683, %v67
    %v1688 = vld [vmem:[%s10] sm:$0x1]
    %v1689 = vld [vmem:[%s11] sm:$0x1]
    %v1690 = vsel %vm71, %v1686, 0.0
    %1691 = vadd.xlane.f32.xlu0 %v1690
    %v1692 = vpop.xlane.xlu0 %1691
    %v1693 = vsel %vm71, %v1687, 0.0
    %1694 = vadd.xlane.f32.xlu0 %v1693
    %v1695 = vpop.xlane.xlu0 %1694
    %v1696 = vmul.f32 %v1692, %v78
    %v1697 = vmul.f32 %v1695, %v78
    %v1698 = vsub.f32 %v1686, %v1696
    %v1699 = vsub.f32 %v1687, %v1697
    %v1700 = vmul.f32 %v1698, %v1698
    %v1701 = vmul.f32 %v1699, %v1699
    %v1702 = vsel %vm71, %v1700, 0.0
    %1703 = vadd.xlane.f32.xlu0 %v1702
    %v1704 = vpop.xlane.xlu0 %1703
    %v1705 = vsel %vm71, %v1701, 0.0
    %1706 = vadd.xlane.f32.xlu0 %v1705
    %v1707 = vpop.xlane.xlu0 %1706
    %v1708 = vmul.f32 %v1704, %v78
    %v1709 = vmul.f32 %v1707, %v78
    %v1710 = vadd.f32 %v1708, 1e-05
    %v1711 = vadd.f32 %v1709, 1e-05
    %v1712 = vrsqrt.pop %v1710
    %v1713 = vrsqrt.pop %v1711
    %v1714 = vmul.f32 %v1698, %v1712
    %v1715 = vmul.f32 %v1699, %v1713
    %v1717 = vlaneseq
    %v1718 = vshrl.u32 %v1717, 7
    %v1719 = vsub.s32 0, %v1718
    %v1720 = vrot.slane %v1688, %v1719
    %v1722 = vmul.f32 %v1714, %v1720
    %v1723 = vmul.f32 %v1715, %v1720
    %v1725 = vlaneseq
    %v1726 = vshrl.u32 %v1725, 7
    %v1727 = vsub.s32 0, %v1726
    %v1728 = vrot.slane %v1689, %v1727
    %v1730 = vadd.f32 %v1722, %v1728
    %v1731 = vadd.f32 %v1723, %v1728
    %v1732 = vld [vmem:[%s12] sm:$0xff]
    %v1733 = vld [vmem:[%s12 + $0x8] sm:$0xff]
    %v1734 = vld [vmem:[%s12 + $0x10] sm:$0xff]
    %v1735 = vld [vmem:[%s12 + $0x18] sm:$0xff]
    %v1736 = vld [vmem:[%s12 + $0x20] sm:$0xff]
    %v1737 = vld [vmem:[%s12 + $0x28] sm:$0xff]
    %v1738 = vld [vmem:[%s12 + $0x30] sm:$0xff]
    %v1739 = vld [vmem:[%s12 + $0x38] sm:$0xff]
    %v1740 = vld [vmem:[%s12 + $0x40] sm:$0xff]
    %v1741 = vld [vmem:[%s12 + $0x48] sm:$0xff]
    %v1742 = vld [vmem:[%s12 + $0x50] sm:$0xff]
    %v1743 = vld [vmem:[%s12 + $0x58] sm:$0xff]
    %v1744 = vld [vmem:[%s12 + $0x60] sm:$0xff]
    %v1745 = vld [vmem:[%s12 + $0x68] sm:$0xff]
    %v1746 = vld [vmem:[%s12 + $0x70] sm:$0xff]
    %v1747 = vld [vmem:[%s12 + $0x78] sm:$0xff]
    %v1748 = vld [vmem:[%s13] sm:$0x3]
    %v1750 = vlaneseq
    %v1751 = vshrl.u32 %v1750, 7
    %v1752 = vsub.s32 0, %v1751
    %v1753 = vrot.slane %v1748, %v1752
    %v1754 = vlaneseq
    %v1755 = vshrl.u32 %v1754, 7
    %v1756 = vsub.s32 1, %v1755
    %v1757 = vrot.slane %v1748, %v1756
    %v1761 = vsel %vm71, %v1730, 0
    %v1764 = vsel %vm71, %v1731, 0
    %1766 = vmatprep.subr.mxu0 %v1733
    %1767 = vmatpush1.msra.mxu0 %v1732
    %1768 = vmatprep.subr.mxu0 %v1735
    %1769 = vmatpush1.msra.mxu0 %v1734
    %1770 = vmatprep.subr.mxu0 %v1737
    %1771 = vmatpush1.msra.mxu0 %v1736
    %1772 = vmatprep.subr.mxu0 %v1739
    %1773 = vmatpush1.msra.mxu0 %v1738
    %1774 = vmatprep.subr.mxu0 %v1741
    %1775 = vmatpush1.msra.mxu0 %v1740
    %1776 = vmatprep.subr.mxu0 %v1743
    %1777 = vmatpush1.msra.mxu0 %v1742
    %1778 = vmatprep.subr.mxu0 %v1745
    %1779 = vmatpush1.msra.mxu0 %v1744
    %1780 = vmatprep.subr.mxu0 %v1747
    %1781 = vmatpush1.msra.mxu0 %v1746
    %1782 = vmatprep.subr.mxu0 0.0
    %1783 = vmatpush1.msra.mxu0 0.0
    %1784 = vmatprep.subr.mxu0 0.0
    %1785 = vmatpush1.msra.mxu0 0.0
    %1786 = vmatprep.subr.mxu0 0.0
    %1787 = vmatpush1.msra.mxu0 0.0
    %1788 = vmatprep.subr.mxu0 0.0
    %1789 = vmatpush1.msra.mxu0 0.0
    %1790 = vmatprep.subr.mxu0 0.0
    %1791 = vmatpush1.msra.mxu0 0.0
    %1792 = vmatprep.subr.mxu0 0.0
    %1793 = vmatpush1.msra.mxu0 0.0
    %1794 = vmatprep.subr.mxu0 0.0
    %1795 = vmatpush1.msra.mxu0 0.0
    %1796 = vmatprep.subr.mxu0 0.0
    %1797 = vmatpush1.msra.mxu0 0.0
    %1798 = vmatprep.subr.mxu0 0.0
    %1799 = vmatpush1.msra.mxu0 0.0
    %1800 = vmatprep.subr.mxu0 0.0
    %1801 = vmatpush1.msra.mxu0 0.0
    %1802 = vmatprep.subr.mxu0 0.0
    %1803 = vmatpush1.msra.mxu0 0.0
    %1804 = vmatprep.subr.mxu0 0.0
    %1805 = vmatpush1.msra.mxu0 0.0
    %1806 = vmatprep.subr.mxu0 0.0
    %1807 = vmatpush1.msra.mxu0 0.0
    %1808 = vmatprep.subr.mxu0 0.0
    %1809 = vmatpush1.msra.mxu0 0.0
    %1810 = vmatprep.subr.mxu0 0.0
    %1811 = vmatpush1.msra.mxu0 0.0
    %1812 = vmatprep.subr.mxu0 0.0
    %1813 = vmatpush1.msra.mxu0 0.0
    %1814 = vmatprep.subr.mxu0 0.0
    %1815 = vmatpush1.msra.mxu0 0.0
    %1816 = vmatprep.subr.mxu0 0.0
    %1817 = vmatpush1.msra.mxu0 0.0
    %1818 = vmatprep.subr.mxu0 0.0
    %1819 = vmatpush1.msra.mxu0 0.0
    %1820 = vmatprep.subr.mxu0 0.0
    %1821 = vmatpush1.msra.mxu0 0.0
    %1822 = vmatprep.subr.mxu0 0.0
    %1823 = vmatpush1.msra.mxu0 0.0
    %1824 = vmatprep.subr.mxu0 0.0
    %1825 = vmatpush1.msra.mxu0 0.0
    %1826 = vmatprep.subr.mxu0 0.0
    %1827 = vmatpush1.msra.mxu0 0.0
    %1828 = vmatprep.subr.mxu0 0.0
    %1829 = vmatpush1.msra.mxu0 0.0
    %1830 = vmatprep.mubr.f32.mxu0 0.0
    %1831 = vmatmul.mubr.f32.gmra.mrb[0].mxu0 %v1761
    %v1832 = vpop.f32.mrb[0].mxu0
    %v1833 = vadd.f32 %v1753, %v1832
    %v1834 = vpop.f32.mrb[0].mxu0
    %v1835 = vadd.f32 %v1757, %v1834
    %1836 = vmatprep.mubr.f32.mxu0 0.0
    %1837 = vmatmul.mubr.f32.gmra.mrb[0].mxu0 %v1764
    %v1838 = vpop.f32.mrb[0].mxu0
    %v1839 = vadd.f32 %v1753, %v1838
    %v1840 = vpop.f32.mrb[0].mxu0
    %v1841 = vadd.f32 %v1757, %v1840
    %1842 = vdwg.mxu0
    %v1843 = vmul.f32 %v1833, 0.5
    %v1844 = vmul.f32 %v1835, 0.5
    %v1845 = vmul.f32 %v1839, 0.5
    %v1846 = vmul.f32 %v1841, 0.5
    %v1847 = vmul.f32 %v1833, 0.044715
    %v1848 = vmul.f32 %v1835, 0.044715
    %v1849 = vmul.f32 %v1839, 0.044715
    %v1850 = vmul.f32 %v1841, 0.044715
    %v1851 = vmul.f32 %v1847, %v1833
    %v1852 = vmul.f32 %v1848, %v1835
    %v1853 = vmul.f32 %v1849, %v1839
    %v1854 = vmul.f32 %v1850, %v1841
    %v1855 = vmul.f32 %v1851, %v1833
    %v1856 = vmul.f32 %v1852, %v1835
    %v1857 = vmul.f32 %v1853, %v1839
    %v1858 = vmul.f32 %v1854, %v1841
    %v1859 = vadd.f32 %v1833, %v1855
    %v1860 = vadd.f32 %v1835, %v1856
    %v1861 = vadd.f32 %v1839, %v1857
    %v1862 = vadd.f32 %v1841, %v1858
    %v1863 = vmul.f32 %v1859, 0.7978846
    %v1864 = vmul.f32 %v1860, 0.7978846
    %v1865 = vmul.f32 %v1861, 0.7978846
    %v1866 = vmul.f32 %v1862, 0.7978846
    %v1867 = vtanh.pop %v1863
    %v1868 = vtanh.pop %v1864
    %v1869 = vtanh.pop %v1865
    %v1870 = vtanh.pop %v1866
    %v1871 = vadd.f32 %v1867, 1.0
    %v1872 = vadd.f32 %v1868, 1.0
    %v1873 = vadd.f32 %v1869, 1.0
    %v1874 = vadd.f32 %v1870, 1.0
    %v1875 = vmul.f32 %v1843, %v1871
    %v1876 = vmul.f32 %v1844, %v1872
    %v1877 = vmul.f32 %v1845, %v1873
    %v1878 = vmul.f32 %v1846, %v1874
    %v1879 = vld [vmem:[%s14] sm:$0xff]
    %v1880 = vld [vmem:[%s14 + $0x8] sm:$0xff]
    %v1881 = vld [vmem:[%s14 + $0x10] sm:$0xff]
    %v1882 = vld [vmem:[%s14 + $0x18] sm:$0xff]
    %v1883 = vld [vmem:[%s14 + $0x20] sm:$0xff]
    %v1884 = vld [vmem:[%s14 + $0x28] sm:$0xff]
    %v1885 = vld [vmem:[%s14 + $0x30] sm:$0xff]
    %v1886 = vld [vmem:[%s14 + $0x38] sm:$0xff]
    %v1887 = vld [vmem:[%s14 + $0x40] sm:$0xff]
    %v1888 = vld [vmem:[%s14 + $0x48] sm:$0xff]
    %v1889 = vld [vmem:[%s14 + $0x50] sm:$0xff]
    %v1890 = vld [vmem:[%s14 + $0x58] sm:$0xff]
    %v1891 = vld [vmem:[%s14 + $0x60] sm:$0xff]
    %v1892 = vld [vmem:[%s14 + $0x68] sm:$0xff]
    %v1893 = vld [vmem:[%s14 + $0x70] sm:$0xff]
    %v1894 = vld [vmem:[%s14 + $0x78] sm:$0xff]
    %v1895 = vld [vmem:[%s14 + $0x80] sm:$0xff]
    %v1896 = vld [vmem:[%s14 + $0x88] sm:$0xff]
    %v1897 = vld [vmem:[%s14 + $0x90] sm:$0xff]
    %v1898 = vld [vmem:[%s14 + $0x98] sm:$0xff]
    %v1899 = vld [vmem:[%s14 + $0xa0] sm:$0xff]
    %v1900 = vld [vmem:[%s14 + $0xa8] sm:$0xff]
    %v1901 = vld [vmem:[%s14 + $0xb0] sm:$0xff]
    %v1902 = vld [vmem:[%s14 + $0xb8] sm:$0xff]
    %v1903 = vld [vmem:[%s14 + $0xc0] sm:$0xff]
    %v1904 = vld [vmem:[%s14 + $0xc8] sm:$0xff]
    %v1905 = vld [vmem:[%s14 + $0xd0] sm:$0xff]
    %v1906 = vld [vmem:[%s14 + $0xd8] sm:$0xff]
    %v1907 = vld [vmem:[%s14 + $0xe0] sm:$0xff]
    %v1908 = vld [vmem:[%s14 + $0xe8] sm:$0xff]
    %v1909 = vld [vmem:[%s14 + $0xf0] sm:$0xff]
    %v1910 = vld [vmem:[%s14 + $0xf8] sm:$0xff]
    %v1911 = vld [vmem:[%s15] sm:$0x1]
    %v1913 = vlaneseq
    %v1914 = vshrl.u32 %v1913, 7
    %v1915 = vsub.s32 0, %v1914
    %v1916 = vrot.slane %v1911, %v1915
    %1918 = vmatprep.subr.mxu0 0.0
    %1919 = vmatpush1.msra.mxu0 %v1879
    %1920 = vmatprep.subr.mxu0 0.0
    %1921 = vmatpush1.msra.mxu0 %v1880
    %1922 = vmatprep.subr.mxu0 0.0
    %1923 = vmatpush1.msra.mxu0 %v1881
    %1924 = vmatprep.subr.mxu0 0.0
    %1925 = vmatpush1.msra.mxu0 %v1882
    %1926 = vmatprep.subr.mxu0 0.0
    %1927 = vmatpush1.msra.mxu0 %v1883
    %1928 = vmatprep.subr.mxu0 0.0
    %1929 = vmatpush1.msra.mxu0 %v1884
    %1930 = vmatprep.subr.mxu0 0.0
    %1931 = vmatpush1.msra.mxu0 %v1885
    %1932 = vmatprep.subr.mxu0 0.0
    %1933 = vmatpush1.msra.mxu0 %v1886
    %1934 = vmatprep.subr.mxu0 0.0
    %1935 = vmatpush1.msra.mxu0 %v1887
    %1936 = vmatprep.subr.mxu0 0.0
    %1937 = vmatpush1.msra.mxu0 %v1888
    %1938 = vmatprep.subr.mxu0 0.0
    %1939 = vmatpush1.msra.mxu0 %v1889
    %1940 = vmatprep.subr.mxu0 0.0
    %1941 = vmatpush1.msra.mxu0 %v1890
    %1942 = vmatprep.subr.mxu0 0.0
    %1943 = vmatpush1.msra.mxu0 %v1891
    %1944 = vmatprep.subr.mxu0 0.0
    %1945 = vmatpush1.msra.mxu0 %v1892
    %1946 = vmatprep.subr.mxu0 0.0
    %1947 = vmatpush1.msra.mxu0 %v1893
    %1948 = vmatprep.subr.mxu0 0.0
    %1949 = vmatpush1.msra.mxu0 %v1894
    %1950 = vmatprep.subr.mxu0 0.0
    %1951 = vmatpush1.msra.mxu0 %v1895
    %1952 = vmatprep.subr.mxu0 0.0
    %1953 = vmatpush1.msra.mxu0 %v1896
    %1954 = vmatprep.subr.mxu0 0.0
    %1955 = vmatpush1.msra.mxu0 %v1897
    %1956 = vmatprep.subr.mxu0 0.0
    %1957 = vmatpush1.msra.mxu0 %v1898
    %1958 = vmatprep.subr.mxu0 0.0
    %1959 = vmatpush1.msra.mxu0 %v1899
    %1960 = vmatprep.subr.mxu0 0.0
    %1961 = vmatpush1.msra.mxu0 %v1900
    %1962 = vmatprep.subr.mxu0 0.0
    %1963 = vmatpush1.msra.mxu0 %v1901
    %1964 = vmatprep.subr.mxu0 0.0
    %1965 = vmatpush1.msra.mxu0 %v1902
    %1966 = vmatprep.subr.mxu0 0.0
    %1967 = vmatpush1.msra.mxu0 %v1903
    %1968 = vmatprep.subr.mxu0 0.0
    %1969 = vmatpush1.msra.mxu0 %v1904
    %1970 = vmatprep.subr.mxu0 0.0
    %1971 = vmatpush1.msra.mxu0 %v1905
    %1972 = vmatprep.subr.mxu0 0.0
    %1973 = vmatpush1.msra.mxu0 %v1906
    %1974 = vmatprep.subr.mxu0 0.0
    %1975 = vmatpush1.msra.mxu0 %v1907
    %1976 = vmatprep.subr.mxu0 0.0
    %1977 = vmatpush1.msra.mxu0 %v1908
    %1978 = vmatprep.subr.mxu0 0.0
    %1979 = vmatpush1.msra.mxu0 %v1909
    %1980 = vmatprep.subr.mxu0 0.0
    %1981 = vmatpush1.msra.mxu0 %v1910
    %1982 = vmatprep.mubr.f32.mxu0 %v1876
    %1983 = vmatmul.mubr.f32.gmra.mrb[0].mxu0 %v1875
    %v1984 = vpop.f32.mrb[0].mxu0
    %v1985 = vadd.f32 %v1916, %v1984
    %v1986 = vpop.f32.mrb[0].mxu0
    %1987 = vmatprep.mubr.f32.mxu0 %v1878
    %1988 = vmatmul.mubr.f32.gmra.mrb[0].mxu0 %v1877
    %v1989 = vpop.f32.mrb[0].mxu0
    %v1990 = vadd.f32 %v1916, %v1989
    %v1991 = vpop.f32.mrb[0].mxu0
    %1992 = vdwg.mxu0
    %v1993 = vadd.f32 %v1985, %v1686
    %v1994 = vadd.f32 %v1990, %v1687
    %s1995 = scalar_lea.vmem %s4, 1
    %v1996 = vld [vmem:[%s1995] sm:$0x1]
    %s1997 = scalar_lea.vmem %s5, 1
    %v1998 = vld [vmem:[%s1997] sm:$0x1]
    %v1999 = vsel %vm71, %v1993, 0.0
    %2000 = vadd.xlane.f32.xlu0 %v1999
    %v2001 = vpop.xlane.xlu0 %2000
    %v2002 = vsel %vm71, %v1994, 0.0
    %2003 = vadd.xlane.f32.xlu0 %v2002
    %v2004 = vpop.xlane.xlu0 %2003
    %v2005 = vmul.f32 %v2001, %v78
    %v2006 = vmul.f32 %v2004, %v78
    %v2007 = vsub.f32 %v1993, %v2005
    %v2008 = vsub.f32 %v1994, %v2006
    %v2009 = vmul.f32 %v2007, %v2007
    %v2010 = vmul.f32 %v2008, %v2008
    %v2011 = vsel %vm71, %v2009, 0.0
    %2012 = vadd.xlane.f32.xlu0 %v2011
    %v2013 = vpop.xlane.xlu0 %2012
    %v2014 = vsel %vm71, %v2010, 0.0
    %2015 = vadd.xlane.f32.xlu0 %v2014
    %v2016 = vpop.xlane.xlu0 %2015
    %v2017 = vmul.f32 %v2013, %v78
    %v2018 = vmul.f32 %v2016, %v78
    %v2019 = vadd.f32 %v2017, 1e-05
    %v2020 = vadd.f32 %v2018, 1e-05
    %v2021 = vrsqrt.pop %v2019
    %v2022 = vrsqrt.pop %v2020
    %v2023 = vmul.f32 %v2007, %v2021
    %v2024 = vmul.f32 %v2008, %v2022
    %v2026 = vlaneseq
    %v2027 = vshrl.u32 %v2026, 7
    %v2028 = vsub.s32 0, %v2027
    %v2029 = vrot.slane %v1996, %v2028
    %v2031 = vmul.f32 %v2023, %v2029
    %v2032 = vmul.f32 %v2024, %v2029
    %v2034 = vlaneseq
    %v2035 = vshrl.u32 %v2034, 7
    %v2036 = vsub.s32 0, %v2035
    %v2037 = vrot.slane %v1998, %v2036
    %v2039 = vadd.f32 %v2031, %v2037
    %v2040 = vadd.f32 %v2032, %v2037
    %s2041 = scalar_lea.vmem %s6, 128
    %v2042 = vld [vmem:[%s2041] sm:$0xff]
    %v2043 = vld [vmem:[%s2041 + $0x8] sm:$0xff]
    %v2044 = vld [vmem:[%s2041 + $0x10] sm:$0xff]
    %v2045 = vld [vmem:[%s2041 + $0x18] sm:$0xff]
    %v2046 = vld [vmem:[%s2041 + $0x20] sm:$0xff]
    %v2047 = vld [vmem:[%s2041 + $0x28] sm:$0xff]
    %v2048 = vld [vmem:[%s2041 + $0x30] sm:$0xff]
    %v2049 = vld [vmem:[%s2041 + $0x38] sm:$0xff]
    %v2050 = vld [vmem:[%s2041 + $0x40] sm:$0xff]
    %v2051 = vld [vmem:[%s2041 + $0x48] sm:$0xff]
    %v2052 = vld [vmem:[%s2041 + $0x50] sm:$0xff]
    %v2053 = vld [vmem:[%s2041 + $0x58] sm:$0xff]
    %v2054 = vld [vmem:[%s2041 + $0x60] sm:$0xff]
    %v2055 = vld [vmem:[%s2041 + $0x68] sm:$0xff]
    %v2056 = vld [vmem:[%s2041 + $0x70] sm:$0xff]
    %v2057 = vld [vmem:[%s2041 + $0x78] sm:$0xff]
    %s2058 = scalar_lea.vmem %s7, 2
    %v2059 = vld [vmem:[%s2058] sm:$0x3]
    %v2061 = vlaneseq
    %v2062 = vshrl.u32 %v2061, 7
    %v2063 = vsub.s32 0, %v2062
    %v2064 = vrot.slane %v2059, %v2063
    %v2065 = vlaneseq
    %v2066 = vshrl.u32 %v2065, 7
    %v2067 = vsub.s32 1, %v2066
    %v2068 = vrot.slane %v2059, %v2067
    %v2072 = vsel %vm71, %v2039, 0
    %v2075 = vsel %vm71, %v2040, 0
    %2077 = vmatprep.subr.mxu0 %v2043
    %2078 = vmatpush1.msra.mxu0 %v2042
    %2079 = vmatprep.subr.mxu0 %v2045
    %2080 = vmatpush1.msra.mxu0 %v2044
    %2081 = vmatprep.subr.mxu0 %v2047
    %2082 = vmatpush1.msra.mxu0 %v2046
    %2083 = vmatprep.subr.mxu0 %v2049
    %2084 = vmatpush1.msra.mxu0 %v2048
    %2085 = vmatprep.subr.mxu0 %v2051
    %2086 = vmatpush1.msra.mxu0 %v2050
    %2087 = vmatprep.subr.mxu0 %v2053
    %2088 = vmatpush1.msra.mxu0 %v2052
    %2089 = vmatprep.subr.mxu0 %v2055
    %2090 = vmatpush1.msra.mxu0 %v2054
    %2091 = vmatprep.subr.mxu0 %v2057
    %2092 = vmatpush1.msra.mxu0 %v2056
    %2093 = vmatprep.subr.mxu0 0.0
    %2094 = vmatpush1.msra.mxu0 0.0
    %2095 = vmatprep.subr.mxu0 0.0
    %2096 = vmatpush1.msra.mxu0 0.0
    %2097 = vmatprep.subr.mxu0 0.0
    %2098 = vmatpush1.msra.mxu0 0.0
    %2099 = vmatprep.subr.mxu0 0.0
    %2100 = vmatpush1.msra.mxu0 0.0
    %2101 = vmatprep.subr.mxu0 0.0
    %2102 = vmatpush1.msra.mxu0 0.0
    %2103 = vmatprep.subr.mxu0 0.0
    %2104 = vmatpush1.msra.mxu0 0.0
    %2105 = vmatprep.subr.mxu0 0.0
    %2106 = vmatpush1.msra.mxu0 0.0
    %2107 = vmatprep.subr.mxu0 0.0
    %2108 = vmatpush1.msra.mxu0 0.0
    %2109 = vmatprep.subr.mxu0 0.0
    %2110 = vmatpush1.msra.mxu0 0.0
    %2111 = vmatprep.subr.mxu0 0.0
    %2112 = vmatpush1.msra.mxu0 0.0
    %2113 = vmatprep.subr.mxu0 0.0
    %2114 = vmatpush1.msra.mxu0 0.0
    %2115 = vmatprep.subr.mxu0 0.0
    %2116 = vmatpush1.msra.mxu0 0.0
    %2117 = vmatprep.subr.mxu0 0.0
    %2118 = vmatpush1.msra.mxu0 0.0
    %2119 = vmatprep.subr.mxu0 0.0
    %2120 = vmatpush1.msra.mxu0 0.0
    %2121 = vmatprep.subr.mxu0 0.0
    %2122 = vmatpush1.msra.mxu0 0.0
    %2123 = vmatprep.subr.mxu0 0.0
    %2124 = vmatpush1.msra.mxu0 0.0
    %2125 = vmatprep.subr.mxu0 0.0
    %2126 = vmatpush1.msra.mxu0 0.0
    %2127 = vmatprep.subr.mxu0 0.0
    %2128 = vmatpush1.msra.mxu0 0.0
    %2129 = vmatprep.subr.mxu0 0.0
    %2130 = vmatpush1.msra.mxu0 0.0
    %2131 = vmatprep.subr.mxu0 0.0
    %2132 = vmatpush1.msra.mxu0 0.0
    %2133 = vmatprep.subr.mxu0 0.0
    %2134 = vmatpush1.msra.mxu0 0.0
    %2135 = vmatprep.subr.mxu0 0.0
    %2136 = vmatpush1.msra.mxu0 0.0
    %2137 = vmatprep.subr.mxu0 0.0
    %2138 = vmatpush1.msra.mxu0 0.0
    %2139 = vmatprep.subr.mxu0 0.0
    %2140 = vmatpush1.msra.mxu0 0.0
    %2141 = vmatprep.mubr.f32.mxu0 0.0
    %2142 = vmatmul.mubr.f32.gmra.mrb[0].mxu0 %v2072
    %v2143 = vpop.f32.mrb[0].mxu0
    %v2144 = vadd.f32 %v2064, %v2143
    %v2145 = vpop.f32.mrb[0].mxu0
    %v2146 = vadd.f32 %v2068, %v2145
    %2147 = vmatprep.mubr.f32.mxu0 0.0
    %2148 = vmatmul.mubr.f32.gmra.mrb[0].mxu0 %v2075
    %v2149 = vpop.f32.mrb[0].mxu0
    %v2150 = vadd.f32 %v2064, %v2149
    %v2151 = vpop.f32.mrb[0].mxu0
    %v2152 = vadd.f32 %v2068, %v2151
    %2153 = vdwg.mxu0
    %2155 = vrot.lane.b32.xlu0 %v2144, 64
    %v2156 = vpop.permute.xlu0 %2155
    %v2157 = vsel %vm229, %v2144, 0
    %v2159 = vsel %vm229, %v2156, 0
    %2161 = vmatprep.subr.mxu0 0.0
    %2162 = vmatpush1.xpose.msra.mxu0 %v2159
    %2163 = vmatprep.subr.mxu0 0.0
    %2164 = vmatpush1.xpose.msra.mxu0 0.0
    %2165 = vmatprep.subr.mxu0 0.0
    %2166 = vmatpush1.xpose.msra.mxu0 0.0
    %2167 = vmatprep.subr.mxu0 0.0
    %2168 = vmatpush1.xpose.msra.mxu0 0.0
    %2169 = vmatprep.subr.mxu0 0.0
    %2170 = vmatpush1.xpose.msra.mxu0 0.0
    %2171 = vmatprep.subr.mxu0 0.0
    %2172 = vmatpush1.xpose.msra.mxu0 0.0
    %2173 = vmatprep.subr.mxu0 0.0
    %2174 = vmatpush1.xpose.msra.mxu0 0.0
    %2175 = vmatprep.subr.mxu0 0.0
    %2176 = vmatpush1.xpose.msra.mxu0 0.0
    %2177 = vmatprep.subr.mxu0 0.0
    %2178 = vmatpush1.xpose.msra.mxu0 0.0
    %2179 = vmatprep.subr.mxu0 0.0
    %2180 = vmatpush1.xpose.msra.mxu0 0.0
    %2181 = vmatprep.subr.mxu0 0.0
    %2182 = vmatpush1.xpose.msra.mxu0 0.0
    %2183 = vmatprep.subr.mxu0 0.0
    %2184 = vmatpush1.xpose.msra.mxu0 0.0
    %2185 = vmatprep.subr.mxu0 0.0
    %2186 = vmatpush1.xpose.msra.mxu0 0.0
    %2187 = vmatprep.subr.mxu0 0.0
    %2188 = vmatpush1.xpose.msra.mxu0 0.0
    %2189 = vmatprep.subr.mxu0 0.0
    %2190 = vmatpush1.xpose.msra.mxu0 0.0
    %2191 = vmatprep.subr.mxu0 0.0
    %2192 = vmatpush1.xpose.msra.mxu0 0.0
    %2193 = vmatprep.subr.mxu0 0.0
    %2194 = vmatpush1.xpose.msra.mxu0 0.0
    %2195 = vmatprep.subr.mxu0 0.0
    %2196 = vmatpush1.xpose.msra.mxu0 0.0
    %2197 = vmatprep.subr.mxu0 0.0
    %2198 = vmatpush1.xpose.msra.mxu0 0.0
    %2199 = vmatprep.subr.mxu0 0.0
    %2200 = vmatpush1.xpose.msra.mxu0 0.0
    %2201 = vmatprep.subr.mxu0 0.0
    %2202 = vmatpush1.xpose.msra.mxu0 0.0
    %2203 = vmatprep.subr.mxu0 0.0
    %2204 = vmatpush1.xpose.msra.mxu0 0.0
    %2205 = vmatprep.subr.mxu0 0.0
    %2206 = vmatpush1.xpose.msra.mxu0 0.0
    %2207 = vmatprep.subr.mxu0 0.0
    %2208 = vmatpush1.xpose.msra.mxu0 0.0
    %2209 = vmatprep.subr.mxu0 0.0
    %2210 = vmatpush1.xpose.msra.mxu0 0.0
    %2211 = vmatprep.subr.mxu0 0.0
    %2212 = vmatpush1.xpose.msra.mxu0 0.0
    %2213 = vmatprep.subr.mxu0 0.0
    %2214 = vmatpush1.xpose.msra.mxu0 0.0
    %2215 = vmatprep.subr.mxu0 0.0
    %2216 = vmatpush1.xpose.msra.mxu0 0.0
    %2217 = vmatprep.subr.mxu0 0.0
    %2218 = vmatpush1.xpose.msra.mxu0 0.0
    %2219 = vmatprep.subr.mxu0 0.0
    %2220 = vmatpush1.xpose.msra.mxu0 0.0
    %2221 = vmatprep.subr.mxu0 0.0
    %2222 = vmatpush1.xpose.msra.mxu0 0.0
    %2223 = vmatprep.subr.mxu0 0.0
    %2224 = vmatpush1.xpose.msra.mxu0 0.0
    %2225 = vmatprep.mubr.f32.mxu0 0.0
    %2226 = vmatmul.mubr.f32.gmra.mrb[0].mxu0 %v2157
    %v2227 = vpop.f32.mrb[0].mxu0
    %v2228 = vadd.f32 0.0, %v2227
    %v2229 = vpop.f32.mrb[0].mxu0
    %2230 = vdwg.mxu0
    %2232 = vrot.lane.b32.xlu0 %v2150, 64
    %v2233 = vpop.permute.xlu0 %2232
    %v2234 = vsel %vm229, %v2150, 0
    %v2236 = vsel %vm229, %v2233, 0
    %2238 = vmatprep.subr.mxu0 0.0
    %2239 = vmatpush1.xpose.msra.mxu0 %v2236
    %2240 = vmatprep.subr.mxu0 0.0
    %2241 = vmatpush1.xpose.msra.mxu0 0.0
    %2242 = vmatprep.subr.mxu0 0.0
    %2243 = vmatpush1.xpose.msra.mxu0 0.0
    %2244 = vmatprep.subr.mxu0 0.0
    %2245 = vmatpush1.xpose.msra.mxu0 0.0
    %2246 = vmatprep.subr.mxu0 0.0
    %2247 = vmatpush1.xpose.msra.mxu0 0.0
    %2248 = vmatprep.subr.mxu0 0.0
    %2249 = vmatpush1.xpose.msra.mxu0 0.0
    %2250 = vmatprep.subr.mxu0 0.0
    %2251 = vmatpush1.xpose.msra.mxu0 0.0
    %2252 = vmatprep.subr.mxu0 0.0
    %2253 = vmatpush1.xpose.msra.mxu0 0.0
    %2254 = vmatprep.subr.mxu0 0.0
    %2255 = vmatpush1.xpose.msra.mxu0 0.0
    %2256 = vmatprep.subr.mxu0 0.0
    %2257 = vmatpush1.xpose.msra.mxu0 0.0
    %2258 = vmatprep.subr.mxu0 0.0
    %2259 = vmatpush1.xpose.msra.mxu0 0.0
    %2260 = vmatprep.subr.mxu0 0.0
    %2261 = vmatpush1.xpose.msra.mxu0 0.0
    %2262 = vmatprep.subr.mxu0 0.0
    %2263 = vmatpush1.xpose.msra.mxu0 0.0
    %2264 = vmatprep.subr.mxu0 0.0
    %2265 = vmatpush1.xpose.msra.mxu0 0.0
    %2266 = vmatprep.subr.mxu0 0.0
    %2267 = vmatpush1.xpose.msra.mxu0 0.0
    %2268 = vmatprep.subr.mxu0 0.0
    %2269 = vmatpush1.xpose.msra.mxu0 0.0
    %2270 = vmatprep.subr.mxu0 0.0
    %2271 = vmatpush1.xpose.msra.mxu0 0.0
    %2272 = vmatprep.subr.mxu0 0.0
    %2273 = vmatpush1.xpose.msra.mxu0 0.0
    %2274 = vmatprep.subr.mxu0 0.0
    %2275 = vmatpush1.xpose.msra.mxu0 0.0
    %2276 = vmatprep.subr.mxu0 0.0
    %2277 = vmatpush1.xpose.msra.mxu0 0.0
    %2278 = vmatprep.subr.mxu0 0.0
    %2279 = vmatpush1.xpose.msra.mxu0 0.0
    %2280 = vmatprep.subr.mxu0 0.0
    %2281 = vmatpush1.xpose.msra.mxu0 0.0
    %2282 = vmatprep.subr.mxu0 0.0
    %2283 = vmatpush1.xpose.msra.mxu0 0.0
    %2284 = vmatprep.subr.mxu0 0.0
    %2285 = vmatpush1.xpose.msra.mxu0 0.0
    %2286 = vmatprep.subr.mxu0 0.0
    %2287 = vmatpush1.xpose.msra.mxu0 0.0
    %2288 = vmatprep.subr.mxu0 0.0
    %2289 = vmatpush1.xpose.msra.mxu0 0.0
    %2290 = vmatprep.subr.mxu0 0.0
    %2291 = vmatpush1.xpose.msra.mxu0 0.0
    %2292 = vmatprep.subr.mxu0 0.0
    %2293 = vmatpush1.xpose.msra.mxu0 0.0
    %2294 = vmatprep.subr.mxu0 0.0
    %2295 = vmatpush1.xpose.msra.mxu0 0.0
    %2296 = vmatprep.subr.mxu0 0.0
    %2297 = vmatpush1.xpose.msra.mxu0 0.0
    %2298 = vmatprep.subr.mxu0 0.0
    %2299 = vmatpush1.xpose.msra.mxu0 0.0
    %2300 = vmatprep.subr.mxu0 0.0
    %2301 = vmatpush1.xpose.msra.mxu0 0.0
    %2302 = vmatprep.mubr.f32.mxu0 0.0
    %2303 = vmatmul.mubr.f32.gmra.mrb[0].mxu0 %v2234
    %v2304 = vpop.f32.mrb[0].mxu0
    %v2305 = vadd.f32 0.0, %v2304
    %v2306 = vpop.f32.mrb[0].mxu0
    %2307 = vdwg.mxu0
    %v2308 = vmul.f32 %v2228, 0.25
    %v2309 = vmul.f32 %v2305, 0.25
    %v2310 = vadd.f32 %v2308, %v68
    %v2311 = vadd.f32 %v2309, %v68
    %v2312 = vsel %vm385, %v2310, -inf
    %2313 = vmax.xlane.f32.xlu0 %v2312
    %v2314 = vpop.xlane.xlu0 %2313
    %v2315 = vsel %vm385, %v2311, -inf
    %2316 = vmax.xlane.f32.xlu0 %v2315
    %v2317 = vpop.xlane.xlu0 %2316
    %v2318 = vsub.f32 %v2310, %v2314
    %v2319 = vsub.f32 %v2311, %v2317
    %v2320 = vmul.f32 %v2318, 1.442695
    %v2321 = vpow.pop %v2320
    %v2322 = vmul.f32 %v2319, 1.442695
    %v2323 = vpow.pop %v2322
    %v2324 = vsel %vm385, %v2321, 0.0
    %2325 = vadd.xlane.f32.xlu0 %v2324
    %v2326 = vpop.xlane.xlu0 %2325
    %v2327 = vsel %vm385, %v2323, 0.0
    %2328 = vadd.xlane.f32.xlu0 %v2327
    %v2329 = vpop.xlane.xlu0 %2328
    %v2330 = vrcp.pop %v2326
    %v2331 = vmul.f32 %v2321, %v2330
    %v2332 = vrcp.pop %v2329
    %v2333 = vmul.f32 %v2323, %v2332
    %v2335 = vsel %vm385, %v2331, 0
    %2337 = vmatprep.subr.mxu0 0.0
    %2338 = vmatpush1.msra.mxu0 %v2146
    %2339 = vmatprep.subr.mxu0 0.0
    %2340 = vmatpush1.msra.mxu0 0.0
    %2341 = vmatprep.subr.mxu0 0.0
    %2342 = vmatpush1.msra.mxu0 0.0
    %2343 = vmatprep.subr.mxu0 0.0
    %2344 = vmatpush1.msra.mxu0 0.0
    %2345 = vmatprep.subr.mxu0 0.0
    %2346 = vmatpush1.msra.mxu0 0.0
    %2347 = vmatprep.subr.mxu0 0.0
    %2348 = vmatpush1.msra.mxu0 0.0
    %2349 = vmatprep.subr.mxu0 0.0
    %2350 = vmatpush1.msra.mxu0 0.0
    %2351 = vmatprep.subr.mxu0 0.0
    %2352 = vmatpush1.msra.mxu0 0.0
    %2353 = vmatprep.subr.mxu0 0.0
    %2354 = vmatpush1.msra.mxu0 0.0
    %2355 = vmatprep.subr.mxu0 0.0
    %2356 = vmatpush1.msra.mxu0 0.0
    %2357 = vmatprep.subr.mxu0 0.0
    %2358 = vmatpush1.msra.mxu0 0.0
    %2359 = vmatprep.subr.mxu0 0.0
    %2360 = vmatpush1.msra.mxu0 0.0
    %2361 = vmatprep.subr.mxu0 0.0
    %2362 = vmatpush1.msra.mxu0 0.0
    %2363 = vmatprep.subr.mxu0 0.0
    %2364 = vmatpush1.msra.mxu0 0.0
    %2365 = vmatprep.subr.mxu0 0.0
    %2366 = vmatpush1.msra.mxu0 0.0
    %2367 = vmatprep.subr.mxu0 0.0
    %2368 = vmatpush1.msra.mxu0 0.0
    %2369 = vmatprep.subr.mxu0 0.0
    %2370 = vmatpush1.msra.mxu0 0.0
    %2371 = vmatprep.subr.mxu0 0.0
    %2372 = vmatpush1.msra.mxu0 0.0
    %2373 = vmatprep.subr.mxu0 0.0
    %2374 = vmatpush1.msra.mxu0 0.0
    %2375 = vmatprep.subr.mxu0 0.0
    %2376 = vmatpush1.msra.mxu0 0.0
    %2377 = vmatprep.subr.mxu0 0.0
    %2378 = vmatpush1.msra.mxu0 0.0
    %2379 = vmatprep.subr.mxu0 0.0
    %2380 = vmatpush1.msra.mxu0 0.0
    %2381 = vmatprep.subr.mxu0 0.0
    %2382 = vmatpush1.msra.mxu0 0.0
    %2383 = vmatprep.subr.mxu0 0.0
    %2384 = vmatpush1.msra.mxu0 0.0
    %2385 = vmatprep.subr.mxu0 0.0
    %2386 = vmatpush1.msra.mxu0 0.0
    %2387 = vmatprep.subr.mxu0 0.0
    %2388 = vmatpush1.msra.mxu0 0.0
    %2389 = vmatprep.subr.mxu0 0.0
    %2390 = vmatpush1.msra.mxu0 0.0
    %2391 = vmatprep.subr.mxu0 0.0
    %2392 = vmatpush1.msra.mxu0 0.0
    %2393 = vmatprep.subr.mxu0 0.0
    %2394 = vmatpush1.msra.mxu0 0.0
    %2395 = vmatprep.subr.mxu0 0.0
    %2396 = vmatpush1.msra.mxu0 0.0
    %2397 = vmatprep.subr.mxu0 0.0
    %2398 = vmatpush1.msra.mxu0 0.0
    %2399 = vmatprep.subr.mxu0 0.0
    %2400 = vmatpush1.msra.mxu0 0.0
    %2401 = vmatprep.mubr.f32.mxu0 0.0
    %2402 = vmatmul.mubr.f32.gmra.mrb[0].mxu0 %v2335
    %v2403 = vpop.f32.mrb[0].mxu0
    %v2404 = vadd.f32 0.0, %v2403
    %v2405 = vpop.f32.mrb[0].mxu0
    %2406 = vdwg.mxu0
    %v2408 = vsel %vm385, %v2333, 0
    %2410 = vmatprep.subr.mxu0 0.0
    %2411 = vmatpush1.msra.mxu0 %v2152
    %2412 = vmatprep.subr.mxu0 0.0
    %2413 = vmatpush1.msra.mxu0 0.0
    %2414 = vmatprep.subr.mxu0 0.0
    %2415 = vmatpush1.msra.mxu0 0.0
    %2416 = vmatprep.subr.mxu0 0.0
    %2417 = vmatpush1.msra.mxu0 0.0
    %2418 = vmatprep.subr.mxu0 0.0
    %2419 = vmatpush1.msra.mxu0 0.0
    %2420 = vmatprep.subr.mxu0 0.0
    %2421 = vmatpush1.msra.mxu0 0.0
    %2422 = vmatprep.subr.mxu0 0.0
    %2423 = vmatpush1.msra.mxu0 0.0
    %2424 = vmatprep.subr.mxu0 0.0
    %2425 = vmatpush1.msra.mxu0 0.0
    %2426 = vmatprep.subr.mxu0 0.0
    %2427 = vmatpush1.msra.mxu0 0.0
    %2428 = vmatprep.subr.mxu0 0.0
    %2429 = vmatpush1.msra.mxu0 0.0
    %2430 = vmatprep.subr.mxu0 0.0
    %2431 = vmatpush1.msra.mxu0 0.0
    %2432 = vmatprep.subr.mxu0 0.0
    %2433 = vmatpush1.msra.mxu0 0.0
    %2434 = vmatprep.subr.mxu0 0.0
    %2435 = vmatpush1.msra.mxu0 0.0
    %2436 = vmatprep.subr.mxu0 0.0
    %2437 = vmatpush1.msra.mxu0 0.0
    %2438 = vmatprep.subr.mxu0 0.0
    %2439 = vmatpush1.msra.mxu0 0.0
    %2440 = vmatprep.subr.mxu0 0.0
    %2441 = vmatpush1.msra.mxu0 0.0
    %2442 = vmatprep.subr.mxu0 0.0
    %2443 = vmatpush1.msra.mxu0 0.0
    %2444 = vmatprep.subr.mxu0 0.0
    %2445 = vmatpush1.msra.mxu0 0.0
    %2446 = vmatprep.subr.mxu0 0.0
    %2447 = vmatpush1.msra.mxu0 0.0
    %2448 = vmatprep.subr.mxu0 0.0
    %2449 = vmatpush1.msra.mxu0 0.0
    %2450 = vmatprep.subr.mxu0 0.0
    %2451 = vmatpush1.msra.mxu0 0.0
    %2452 = vmatprep.subr.mxu0 0.0
    %2453 = vmatpush1.msra.mxu0 0.0
    %2454 = vmatprep.subr.mxu0 0.0
    %2455 = vmatpush1.msra.mxu0 0.0
    %2456 = vmatprep.subr.mxu0 0.0
    %2457 = vmatpush1.msra.mxu0 0.0
    %2458 = vmatprep.subr.mxu0 0.0
    %2459 = vmatpush1.msra.mxu0 0.0
    %2460 = vmatprep.subr.mxu0 0.0
    %2461 = vmatpush1.msra.mxu0 0.0
    %2462 = vmatprep.subr.mxu0 0.0
    %2463 = vmatpush1.msra.mxu0 0.0
    %2464 = vmatprep.subr.mxu0 0.0
    %2465 = vmatpush1.msra.mxu0 0.0
    %2466 = vmatprep.subr.mxu0 0.0
    %2467 = vmatpush1.msra.mxu0 0.0
    %2468 = vmatprep.subr.mxu0 0.0
    %2469 = vmatpush1.msra.mxu0 0.0
    %2470 = vmatprep.subr.mxu0 0.0
    %2471 = vmatpush1.msra.mxu0 0.0
    %2472 = vmatprep.subr.mxu0 0.0
    %2473 = vmatpush1.msra.mxu0 0.0
    %2474 = vmatprep.mubr.f32.mxu0 0.0
    %2475 = vmatmul.mubr.f32.gmra.mrb[0].mxu0 %v2408
    %v2476 = vpop.f32.mrb[0].mxu0
    %v2477 = vadd.f32 0.0, %v2476
    %v2478 = vpop.f32.mrb[0].mxu0
    %2479 = vdwg.mxu0
    %2480 = vrot.lane.b32.xlu0 %v2144, 112
    %v2481 = vpop.permute.xlu0 %2480
    %2482 = vrot.lane.b32.xlu0 %v2144, 48
    %v2483 = vpop.permute.xlu0 %2482
    %v2484 = vsel %vm229, %v2481, 0
    %v2486 = vsel %vm229, %v2483, 0
    %2488 = vmatprep.subr.mxu0 0.0
    %2489 = vmatpush1.xpose.msra.mxu0 %v2486
    %2490 = vmatprep.subr.mxu0 0.0
    %2491 = vmatpush1.xpose.msra.mxu0 0.0
    %2492 = vmatprep.subr.mxu0 0.0
    %2493 = vmatpush1.xpose.msra.mxu0 0.0
    %2494 = vmatprep.subr.mxu0 0.0
    %2495 = vmatpush1.xpose.msra.mxu0 0.0
    %2496 = vmatprep.subr.mxu0 0.0
    %2497 = vmatpush1.xpose.msra.mxu0 0.0
    %2498 = vmatprep.subr.mxu0 0.0
    %2499 = vmatpush1.xpose.msra.mxu0 0.0
    %2500 = vmatprep.subr.mxu0 0.0
    %2501 = vmatpush1.xpose.msra.mxu0 0.0
    %2502 = vmatprep.subr.mxu0 0.0
    %2503 = vmatpush1.xpose.msra.mxu0 0.0
    %2504 = vmatprep.subr.mxu0 0.0
    %2505 = vmatpush1.xpose.msra.mxu0 0.0
    %2506 = vmatprep.subr.mxu0 0.0
    %2507 = vmatpush1.xpose.msra.mxu0 0.0
    %2508 = vmatprep.subr.mxu0 0.0
    %2509 = vmatpush1.xpose.msra.mxu0 0.0
    %2510 = vmatprep.subr.mxu0 0.0
    %2511 = vmatpush1.xpose.msra.mxu0 0.0
    %2512 = vmatprep.subr.mxu0 0.0
    %2513 = vmatpush1.xpose.msra.mxu0 0.0
    %2514 = vmatprep.subr.mxu0 0.0
    %2515 = vmatpush1.xpose.msra.mxu0 0.0
    %2516 = vmatprep.subr.mxu0 0.0
    %2517 = vmatpush1.xpose.msra.mxu0 0.0
    %2518 = vmatprep.subr.mxu0 0.0
    %2519 = vmatpush1.xpose.msra.mxu0 0.0
    %2520 = vmatprep.subr.mxu0 0.0
    %2521 = vmatpush1.xpose.msra.mxu0 0.0
    %2522 = vmatprep.subr.mxu0 0.0
    %2523 = vmatpush1.xpose.msra.mxu0 0.0
    %2524 = vmatprep.subr.mxu0 0.0
    %2525 = vmatpush1.xpose.msra.mxu0 0.0
    %2526 = vmatprep.subr.mxu0 0.0
    %2527 = vmatpush1.xpose.msra.mxu0 0.0
    %2528 = vmatprep.subr.mxu0 0.0
    %2529 = vmatpush1.xpose.msra.mxu0 0.0
    %2530 = vmatprep.subr.mxu0 0.0
    %2531 = vmatpush1.xpose.msra.mxu0 0.0
    %2532 = vmatprep.subr.mxu0 0.0
    %2533 = vmatpush1.xpose.msra.mxu0 0.0
    %2534 = vmatprep.subr.mxu0 0.0
    %2535 = vmatpush1.xpose.msra.mxu0 0.0
    %2536 = vmatprep.subr.mxu0 0.0
    %2537 = vmatpush1.xpose.msra.mxu0 0.0
    %2538 = vmatprep.subr.mxu0 0.0
    %2539 = vmatpush1.xpose.msra.mxu0 0.0
    %2540 = vmatprep.subr.mxu0 0.0
    %2541 = vmatpush1.xpose.msra.mxu0 0.0
    %2542 = vmatprep.subr.mxu0 0.0
    %2543 = vmatpush1.xpose.msra.mxu0 0.0
    %2544 = vmatprep.subr.mxu0 0.0
    %2545 = vmatpush1.xpose.msra.mxu0 0.0
    %2546 = vmatprep.subr.mxu0 0.0
    %2547 = vmatpush1.xpose.msra.mxu0 0.0
    %2548 = vmatprep.subr.mxu0 0.0
    %2549 = vmatpush1.xpose.msra.mxu0 0.0
    %2550 = vmatprep.subr.mxu0 0.0
    %2551 = vmatpush1.xpose.msra.mxu0 0.0
    %2552 = vmatprep.mubr.f32.mxu0 0.0
    %2553 = vmatmul.mubr.f32.gmra.mrb[0].mxu0 %v2484
    %v2554 = vpop.f32.mrb[0].mxu0
    %v2555 = vadd.f32 0.0, %v2554
    %v2556 = vpop.f32.mrb[0].mxu0
    %2557 = vdwg.mxu0
    %2558 = vrot.lane.b32.xlu0 %v2150, 112
    %v2559 = vpop.permute.xlu0 %2558
    %2560 = vrot.lane.b32.xlu0 %v2150, 48
    %v2561 = vpop.permute.xlu0 %2560
    %v2562 = vsel %vm229, %v2559, 0
    %v2564 = vsel %vm229, %v2561, 0
    %2566 = vmatprep.subr.mxu0 0.0
    %2567 = vmatpush1.xpose.msra.mxu0 %v2564
    %2568 = vmatprep.subr.mxu0 0.0
    %2569 = vmatpush1.xpose.msra.mxu0 0.0
    %2570 = vmatprep.subr.mxu0 0.0
    %2571 = vmatpush1.xpose.msra.mxu0 0.0
    %2572 = vmatprep.subr.mxu0 0.0
    %2573 = vmatpush1.xpose.msra.mxu0 0.0
    %2574 = vmatprep.subr.mxu0 0.0
    %2575 = vmatpush1.xpose.msra.mxu0 0.0
    %2576 = vmatprep.subr.mxu0 0.0
    %2577 = vmatpush1.xpose.msra.mxu0 0.0
    %2578 = vmatprep.subr.mxu0 0.0
    %2579 = vmatpush1.xpose.msra.mxu0 0.0
    %2580 = vmatprep.subr.mxu0 0.0
    %2581 = vmatpush1.xpose.msra.mxu0 0.0
    %2582 = vmatprep.subr.mxu0 0.0
    %2583 = vmatpush1.xpose.msra.mxu0 0.0
    %2584 = vmatprep.subr.mxu0 0.0
    %2585 = vmatpush1.xpose.msra.mxu0 0.0
    %2586 = vmatprep.subr.mxu0 0.0
    %2587 = vmatpush1.xpose.msra.mxu0 0.0
    %2588 = vmatprep.subr.mxu0 0.0
    %2589 = vmatpush1.xpose.msra.mxu0 0.0
    %2590 = vmatprep.subr.mxu0 0.0
    %2591 = vmatpush1.xpose.msra.mxu0 0.0
    %2592 = vmatprep.subr.mxu0 0.0
    %2593 = vmatpush1.xpose.msra.mxu0 0.0
    %2594 = vmatprep.subr.mxu0 0.0
    %2595 = vmatpush1.xpose.msra.mxu0 0.0
    %2596 = vmatprep.subr.mxu0 0.0
    %2597 = vmatpush1.xpose.msra.mxu0 0.0
    %2598 = vmatprep.subr.mxu0 0.0
    %2599 = vmatpush1.xpose.msra.mxu0 0.0
    %2600 = vmatprep.subr.mxu0 0.0
    %2601 = vmatpush1.xpose.msra.mxu0 0.0
    %2602 = vmatprep.subr.mxu0 0.0
    %2603 = vmatpush1.xpose.msra.mxu0 0.0
    %2604 = vmatprep.subr.mxu0 0.0
    %2605 = vmatpush1.xpose.msra.mxu0 0.0
    %2606 = vmatprep.subr.mxu0 0.0
    %2607 = vmatpush1.xpose.msra.mxu0 0.0
    %2608 = vmatprep.subr.mxu0 0.0
    %2609 = vmatpush1.xpose.msra.mxu0 0.0
    %2610 = vmatprep.subr.mxu0 0.0
    %2611 = vmatpush1.xpose.msra.mxu0 0.0
    %2612 = vmatprep.subr.mxu0 0.0
    %2613 = vmatpush1.xpose.msra.mxu0 0.0
    %2614 = vmatprep.subr.mxu0 0.0
    %2615 = vmatpush1.xpose.msra.mxu0 0.0
    %2616 = vmatprep.subr.mxu0 0.0
    %2617 = vmatpush1.xpose.msra.mxu0 0.0
    %2618 = vmatprep.subr.mxu0 0.0
    %2619 = vmatpush1.xpose.msra.mxu0 0.0
    %2620 = vmatprep.subr.mxu0 0.0
    %2621 = vmatpush1.xpose.msra.mxu0 0.0
    %2622 = vmatprep.subr.mxu0 0.0
    %2623 = vmatpush1.xpose.msra.mxu0 0.0
    %2624 = vmatprep.subr.mxu0 0.0
    %2625 = vmatpush1.xpose.msra.mxu0 0.0
    %2626 = vmatprep.subr.mxu0 0.0
    %2627 = vmatpush1.xpose.msra.mxu0 0.0
    %2628 = vmatprep.subr.mxu0 0.0
    %2629 = vmatpush1.xpose.msra.mxu0 0.0
    %2630 = vmatprep.mubr.f32.mxu0 0.0
    %2631 = vmatmul.mubr.f32.gmra.mrb[0].mxu0 %v2562
    %v2632 = vpop.f32.mrb[0].mxu0
    %v2633 = vadd.f32 0.0, %v2632
    %v2634 = vpop.f32.mrb[0].mxu0
    %2635 = vdwg.mxu0
    %v2636 = vmul.f32 %v2555, 0.25
    %v2637 = vmul.f32 %v2633, 0.25
    %v2638 = vadd.f32 %v2636, %v68
    %v2639 = vadd.f32 %v2637, %v68
    %v2640 = vsel %vm385, %v2638, -inf
    %2641 = vmax.xlane.f32.xlu0 %v2640
    %v2642 = vpop.xlane.xlu0 %2641
    %v2643 = vsel %vm385, %v2639, -inf
    %2644 = vmax.xlane.f32.xlu0 %v2643
    %v2645 = vpop.xlane.xlu0 %2644
    %v2646 = vsub.f32 %v2638, %v2642
    %v2647 = vsub.f32 %v2639, %v2645
    %v2648 = vmul.f32 %v2646, 1.442695
    %v2649 = vpow.pop %v2648
    %v2650 = vmul.f32 %v2647, 1.442695
    %v2651 = vpow.pop %v2650
    %v2652 = vsel %vm385, %v2649, 0.0
    %2653 = vadd.xlane.f32.xlu0 %v2652
    %v2654 = vpop.xlane.xlu0 %2653
    %v2655 = vsel %vm385, %v2651, 0.0
    %2656 = vadd.xlane.f32.xlu0 %v2655
    %v2657 = vpop.xlane.xlu0 %2656
    %v2658 = vrcp.pop %v2654
    %v2659 = vmul.f32 %v2649, %v2658
    %v2660 = vrcp.pop %v2657
    %v2661 = vmul.f32 %v2651, %v2660
    %2663 = vrot.lane.b32.xlu0 %v2146, 112
    %v2664 = vpop.permute.xlu0 %2663
    %v2667 = vsel %vm385, %v2659, 0
    %2669 = vmatprep.subr.mxu0 0.0
    %2670 = vmatpush1.msra.mxu0 %v2664
    %2671 = vmatprep.subr.mxu0 0.0
    %2672 = vmatpush1.msra.mxu0 0.0
    %2673 = vmatprep.subr.mxu0 0.0
    %2674 = vmatpush1.msra.mxu0 0.0
    %2675 = vmatprep.subr.mxu0 0.0
    %2676 = vmatpush1.msra.mxu0 0.0
    %2677 = vmatprep.subr.mxu0 0.0
    %2678 = vmatpush1.msra.mxu0 0.0
    %2679 = vmatprep.subr.mxu0 0.0
    %2680 = vmatpush1.msra.mxu0 0.0
    %2681 = vmatprep.subr.mxu0 0.0
    %2682 = vmatpush1.msra.mxu0 0.0
    %2683 = vmatprep.subr.mxu0 0.0
    %2684 = vmatpush1.msra.mxu0 0.0
    %2685 = vmatprep.subr.mxu0 0.0
    %2686 = vmatpush1.msra.mxu0 0.0
    %2687 = vmatprep.subr.mxu0 0.0
    %2688 = vmatpush1.msra.mxu0 0.0
    %2689 = vmatprep.subr.mxu0 0.0
    %2690 = vmatpush1.msra.mxu0 0.0
    %2691 = vmatprep.subr.mxu0 0.0
    %2692 = vmatpush1.msra.mxu0 0.0
    %2693 = vmatprep.subr.mxu0 0.0
    %2694 = vmatpush1.msra.mxu0 0.0
    %2695 = vmatprep.subr.mxu0 0.0
    %2696 = vmatpush1.msra.mxu0 0.0
    %2697 = vmatprep.subr.mxu0 0.0
    %2698 = vmatpush1.msra.mxu0 0.0
    %2699 = vmatprep.subr.mxu0 0.0
    %2700 = vmatpush1.msra.mxu0 0.0
    %2701 = vmatprep.subr.mxu0 0.0
    %2702 = vmatpush1.msra.mxu0 0.0
    %2703 = vmatprep.subr.mxu0 0.0
    %2704 = vmatpush1.msra.mxu0 0.0
    %2705 = vmatprep.subr.mxu0 0.0
    %2706 = vmatpush1.msra.mxu0 0.0
    %2707 = vmatprep.subr.mxu0 0.0
    %2708 = vmatpush1.msra.mxu0 0.0
    %2709 = vmatprep.subr.mxu0 0.0
    %2710 = vmatpush1.msra.mxu0 0.0
    %2711 = vmatprep.subr.mxu0 0.0
    %2712 = vmatpush1.msra.mxu0 0.0
    %2713 = vmatprep.subr.mxu0 0.0
    %2714 = vmatpush1.msra.mxu0 0.0
    %2715 = vmatprep.subr.mxu0 0.0
    %2716 = vmatpush1.msra.mxu0 0.0
    %2717 = vmatprep.subr.mxu0 0.0
    %2718 = vmatpush1.msra.mxu0 0.0
    %2719 = vmatprep.subr.mxu0 0.0
    %2720 = vmatpush1.msra.mxu0 0.0
    %2721 = vmatprep.subr.mxu0 0.0
    %2722 = vmatpush1.msra.mxu0 0.0
    %2723 = vmatprep.subr.mxu0 0.0
    %2724 = vmatpush1.msra.mxu0 0.0
    %2725 = vmatprep.subr.mxu0 0.0
    %2726 = vmatpush1.msra.mxu0 0.0
    %2727 = vmatprep.subr.mxu0 0.0
    %2728 = vmatpush1.msra.mxu0 0.0
    %2729 = vmatprep.subr.mxu0 0.0
    %2730 = vmatpush1.msra.mxu0 0.0
    %2731 = vmatprep.subr.mxu0 0.0
    %2732 = vmatpush1.msra.mxu0 0.0
    %2733 = vmatprep.mubr.f32.mxu0 0.0
    %2734 = vmatmul.mubr.f32.gmra.mrb[0].mxu0 %v2667
    %v2735 = vpop.f32.mrb[0].mxu0
    %v2736 = vadd.f32 0.0, %v2735
    %v2737 = vpop.f32.mrb[0].mxu0
    %2738 = vdwg.mxu0
    %2740 = vrot.lane.b32.xlu0 %v2152, 112
    %v2741 = vpop.permute.xlu0 %2740
    %v2744 = vsel %vm385, %v2661, 0
    %2746 = vmatprep.subr.mxu0 0.0
    %2747 = vmatpush1.msra.mxu0 %v2741
    %2748 = vmatprep.subr.mxu0 0.0
    %2749 = vmatpush1.msra.mxu0 0.0
    %2750 = vmatprep.subr.mxu0 0.0
    %2751 = vmatpush1.msra.mxu0 0.0
    %2752 = vmatprep.subr.mxu0 0.0
    %2753 = vmatpush1.msra.mxu0 0.0
    %2754 = vmatprep.subr.mxu0 0.0
    %2755 = vmatpush1.msra.mxu0 0.0
    %2756 = vmatprep.subr.mxu0 0.0
    %2757 = vmatpush1.msra.mxu0 0.0
    %2758 = vmatprep.subr.mxu0 0.0
    %2759 = vmatpush1.msra.mxu0 0.0
    %2760 = vmatprep.subr.mxu0 0.0
    %2761 = vmatpush1.msra.mxu0 0.0
    %2762 = vmatprep.subr.mxu0 0.0
    %2763 = vmatpush1.msra.mxu0 0.0
    %2764 = vmatprep.subr.mxu0 0.0
    %2765 = vmatpush1.msra.mxu0 0.0
    %2766 = vmatprep.subr.mxu0 0.0
    %2767 = vmatpush1.msra.mxu0 0.0
    %2768 = vmatprep.subr.mxu0 0.0
    %2769 = vmatpush1.msra.mxu0 0.0
    %2770 = vmatprep.subr.mxu0 0.0
    %2771 = vmatpush1.msra.mxu0 0.0
    %2772 = vmatprep.subr.mxu0 0.0
    %2773 = vmatpush1.msra.mxu0 0.0
    %2774 = vmatprep.subr.mxu0 0.0
    %2775 = vmatpush1.msra.mxu0 0.0
    %2776 = vmatprep.subr.mxu0 0.0
    %2777 = vmatpush1.msra.mxu0 0.0
    %2778 = vmatprep.subr.mxu0 0.0
    %2779 = vmatpush1.msra.mxu0 0.0
    %2780 = vmatprep.subr.mxu0 0.0
    %2781 = vmatpush1.msra.mxu0 0.0
    %2782 = vmatprep.subr.mxu0 0.0
    %2783 = vmatpush1.msra.mxu0 0.0
    %2784 = vmatprep.subr.mxu0 0.0
    %2785 = vmatpush1.msra.mxu0 0.0
    %2786 = vmatprep.subr.mxu0 0.0
    %2787 = vmatpush1.msra.mxu0 0.0
    %2788 = vmatprep.subr.mxu0 0.0
    %2789 = vmatpush1.msra.mxu0 0.0
    %2790 = vmatprep.subr.mxu0 0.0
    %2791 = vmatpush1.msra.mxu0 0.0
    %2792 = vmatprep.subr.mxu0 0.0
    %2793 = vmatpush1.msra.mxu0 0.0
    %2794 = vmatprep.subr.mxu0 0.0
    %2795 = vmatpush1.msra.mxu0 0.0
    %2796 = vmatprep.subr.mxu0 0.0
    %2797 = vmatpush1.msra.mxu0 0.0
    %2798 = vmatprep.subr.mxu0 0.0
    %2799 = vmatpush1.msra.mxu0 0.0
    %2800 = vmatprep.subr.mxu0 0.0
    %2801 = vmatpush1.msra.mxu0 0.0
    %2802 = vmatprep.subr.mxu0 0.0
    %2803 = vmatpush1.msra.mxu0 0.0
    %2804 = vmatprep.subr.mxu0 0.0
    %2805 = vmatpush1.msra.mxu0 0.0
    %2806 = vmatprep.subr.mxu0 0.0
    %2807 = vmatpush1.msra.mxu0 0.0
    %2808 = vmatprep.subr.mxu0 0.0
    %2809 = vmatpush1.msra.mxu0 0.0
    %2810 = vmatprep.mubr.f32.mxu0 0.0
    %2811 = vmatmul.mubr.f32.gmra.mrb[0].mxu0 %v2744
    %v2812 = vpop.f32.mrb[0].mxu0
    %v2813 = vadd.f32 0.0, %v2812
    %v2814 = vpop.f32.mrb[0].mxu0
    %2815 = vdwg.mxu0
    %2816 = vrot.lane.b32.xlu0 %v2144, 96
    %v2817 = vpop.permute.xlu0 %2816
    %2818 = vrot.lane.b32.xlu0 %v2144, 32
    %v2819 = vpop.permute.xlu0 %2818
    %v2820 = vsel %vm229, %v2817, 0
    %v2822 = vsel %vm229, %v2819, 0
    %2824 = vmatprep.subr.mxu0 0.0
    %2825 = vmatpush1.xpose.msra.mxu0 %v2822
    %2826 = vmatprep.subr.mxu0 0.0
    %2827 = vmatpush1.xpose.msra.mxu0 0.0
    %2828 = vmatprep.subr.mxu0 0.0
    %2829 = vmatpush1.xpose.msra.mxu0 0.0
    %2830 = vmatprep.subr.mxu0 0.0
    %2831 = vmatpush1.xpose.msra.mxu0 0.0
    %2832 = vmatprep.subr.mxu0 0.0
    %2833 = vmatpush1.xpose.msra.mxu0 0.0
    %2834 = vmatprep.subr.mxu0 0.0
    %2835 = vmatpush1.xpose.msra.mxu0 0.0
    %2836 = vmatprep.subr.mxu0 0.0
    %2837 = vmatpush1.xpose.msra.mxu0 0.0
    %2838 = vmatprep.subr.mxu0 0.0
    %2839 = vmatpush1.xpose.msra.mxu0 0.0
    %2840 = vmatprep.subr.mxu0 0.0
    %2841 = vmatpush1.xpose.msra.mxu0 0.0
    %2842 = vmatprep.subr.mxu0 0.0
    %2843 = vmatpush1.xpose.msra.mxu0 0.0
    %2844 = vmatprep.subr.mxu0 0.0
    %2845 = vmatpush1.xpose.msra.mxu0 0.0
    %2846 = vmatprep.subr.mxu0 0.0
    %2847 = vmatpush1.xpose.msra.mxu0 0.0
    %2848 = vmatprep.subr.mxu0 0.0
    %2849 = vmatpush1.xpose.msra.mxu0 0.0
    %2850 = vmatprep.subr.mxu0 0.0
    %2851 = vmatpush1.xpose.msra.mxu0 0.0
    %2852 = vmatprep.subr.mxu0 0.0
    %2853 = vmatpush1.xpose.msra.mxu0 0.0
    %2854 = vmatprep.subr.mxu0 0.0
    %2855 = vmatpush1.xpose.msra.mxu0 0.0
    %2856 = vmatprep.subr.mxu0 0.0
    %2857 = vmatpush1.xpose.msra.mxu0 0.0
    %2858 = vmatprep.subr.mxu0 0.0
    %2859 = vmatpush1.xpose.msra.mxu0 0.0
    %2860 = vmatprep.subr.mxu0 0.0
    %2861 = vmatpush1.xpose.msra.mxu0 0.0
    %2862 = vmatprep.subr.mxu0 0.0
    %2863 = vmatpush1.xpose.msra.mxu0 0.0
    %2864 = vmatprep.subr.mxu0 0.0
    %2865 = vmatpush1.xpose.msra.mxu0 0.0
    %2866 = vmatprep.subr.mxu0 0.0
    %2867 = vmatpush1.xpose.msra.mxu0 0.0
    %2868 = vmatprep.subr.mxu0 0.0
    %2869 = vmatpush1.xpose.msra.mxu0 0.0
    %2870 = vmatprep.subr.mxu0 0.0
    %2871 = vmatpush1.xpose.msra.mxu0 0.0
    %2872 = vmatprep.subr.mxu0 0.0
    %2873 = vmatpush1.xpose.msra.mxu0 0.0
    %2874 = vmatprep.subr.mxu0 0.0
    %2875 = vmatpush1.xpose.msra.mxu0 0.0
    %2876 = vmatprep.subr.mxu0 0.0
    %2877 = vmatpush1.xpose.msra.mxu0 0.0
    %2878 = vmatprep.subr.mxu0 0.0
    %2879 = vmatpush1.xpose.msra.mxu0 0.0
    %2880 = vmatprep.subr.mxu0 0.0
    %2881 = vmatpush1.xpose.msra.mxu0 0.0
    %2882 = vmatprep.subr.mxu0 0.0
    %2883 = vmatpush1.xpose.msra.mxu0 0.0
    %2884 = vmatprep.subr.mxu0 0.0
    %2885 = vmatpush1.xpose.msra.mxu0 0.0
    %2886 = vmatprep.subr.mxu0 0.0
    %2887 = vmatpush1.xpose.msra.mxu0 0.0
    %2888 = vmatprep.mubr.f32.mxu0 0.0
    %2889 = vmatmul.mubr.f32.gmra.mrb[0].mxu0 %v2820
    %v2890 = vpop.f32.mrb[0].mxu0
    %v2891 = vadd.f32 0.0, %v2890
    %v2892 = vpop.f32.mrb[0].mxu0
    %2893 = vdwg.mxu0
    %2894 = vrot.lane.b32.xlu0 %v2150, 96
    %v2895 = vpop.permute.xlu0 %2894
    %2896 = vrot.lane.b32.xlu0 %v2150, 32
    %v2897 = vpop.permute.xlu0 %2896
    %v2898 = vsel %vm229, %v2895, 0
    %v2900 = vsel %vm229, %v2897, 0
    %2902 = vmatprep.subr.mxu0 0.0
    %2903 = vmatpush1.xpose.msra.mxu0 %v2900
    %2904 = vmatprep.subr.mxu0 0.0
    %2905 = vmatpush1.xpose.msra.mxu0 0.0
    %2906 = vmatprep.subr.mxu0 0.0
    %2907 = vmatpush1.xpose.msra.mxu0 0.0
    %2908 = vmatprep.subr.mxu0 0.0
    %2909 = vmatpush1.xpose.msra.mxu0 0.0
    %2910 = vmatprep.subr.mxu0 0.0
    %2911 = vmatpush1.xpose.msra.mxu0 0.0
    %2912 = vmatprep.subr.mxu0 0.0
    %2913 = vmatpush1.xpose.msra.mxu0 0.0
    %2914 = vmatprep.subr.mxu0 0.0
    %2915 = vmatpush1.xpose.msra.mxu0 0.0
    %2916 = vmatprep.subr.mxu0 0.0
    %2917 = vmatpush1.xpose.msra.mxu0 0.0
    %2918 = vmatprep.subr.mxu0 0.0
    %2919 = vmatpush1.xpose.msra.mxu0 0.0
    %2920 = vmatprep.subr.mxu0 0.0
    %2921 = vmatpush1.xpose.msra.mxu0 0.0
    %2922 = vmatprep.subr.mxu0 0.0
    %2923 = vmatpush1.xpose.msra.mxu0 0.0
    %2924 = vmatprep.subr.mxu0 0.0
    %2925 = vmatpush1.xpose.msra.mxu0 0.0
    %2926 = vmatprep.subr.mxu0 0.0
    %2927 = vmatpush1.xpose.msra.mxu0 0.0
    %2928 = vmatprep.subr.mxu0 0.0
    %2929 = vmatpush1.xpose.msra.mxu0 0.0
    %2930 = vmatprep.subr.mxu0 0.0
    %2931 = vmatpush1.xpose.msra.mxu0 0.0
    %2932 = vmatprep.subr.mxu0 0.0
    %2933 = vmatpush1.xpose.msra.mxu0 0.0
    %2934 = vmatprep.subr.mxu0 0.0
    %2935 = vmatpush1.xpose.msra.mxu0 0.0
    %2936 = vmatprep.subr.mxu0 0.0
    %2937 = vmatpush1.xpose.msra.mxu0 0.0
    %2938 = vmatprep.subr.mxu0 0.0
    %2939 = vmatpush1.xpose.msra.mxu0 0.0
    %2940 = vmatprep.subr.mxu0 0.0
    %2941 = vmatpush1.xpose.msra.mxu0 0.0
    %2942 = vmatprep.subr.mxu0 0.0
    %2943 = vmatpush1.xpose.msra.mxu0 0.0
    %2944 = vmatprep.subr.mxu0 0.0
    %2945 = vmatpush1.xpose.msra.mxu0 0.0
    %2946 = vmatprep.subr.mxu0 0.0
    %2947 = vmatpush1.xpose.msra.mxu0 0.0
    %2948 = vmatprep.subr.mxu0 0.0
    %2949 = vmatpush1.xpose.msra.mxu0 0.0
    %2950 = vmatprep.subr.mxu0 0.0
    %2951 = vmatpush1.xpose.msra.mxu0 0.0
    %2952 = vmatprep.subr.mxu0 0.0
    %2953 = vmatpush1.xpose.msra.mxu0 0.0
    %2954 = vmatprep.subr.mxu0 0.0
    %2955 = vmatpush1.xpose.msra.mxu0 0.0
    %2956 = vmatprep.subr.mxu0 0.0
    %2957 = vmatpush1.xpose.msra.mxu0 0.0
    %2958 = vmatprep.subr.mxu0 0.0
    %2959 = vmatpush1.xpose.msra.mxu0 0.0
    %2960 = vmatprep.subr.mxu0 0.0
    %2961 = vmatpush1.xpose.msra.mxu0 0.0
    %2962 = vmatprep.subr.mxu0 0.0
    %2963 = vmatpush1.xpose.msra.mxu0 0.0
    %2964 = vmatprep.subr.mxu0 0.0
    %2965 = vmatpush1.xpose.msra.mxu0 0.0
    %2966 = vmatprep.mubr.f32.mxu0 0.0
    %2967 = vmatmul.mubr.f32.gmra.mrb[0].mxu0 %v2898
    %v2968 = vpop.f32.mrb[0].mxu0
    %v2969 = vadd.f32 0.0, %v2968
    %v2970 = vpop.f32.mrb[0].mxu0
    %2971 = vdwg.mxu0
    %v2972 = vmul.f32 %v2891, 0.25
    %v2973 = vmul.f32 %v2969, 0.25
    %v2974 = vadd.f32 %v2972, %v68
    %v2975 = vadd.f32 %v2973, %v68
    %v2976 = vsel %vm385, %v2974, -inf
    %2977 = vmax.xlane.f32.xlu0 %v2976
    %v2978 = vpop.xlane.xlu0 %2977
    %v2979 = vsel %vm385, %v2975, -inf
    %2980 = vmax.xlane.f32.xlu0 %v2979
    %v2981 = vpop.xlane.xlu0 %2980
    %v2982 = vsub.f32 %v2974, %v2978
    %v2983 = vsub.f32 %v2975, %v2981
    %v2984 = vmul.f32 %v2982, 1.442695
    %v2985 = vpow.pop %v2984
    %v2986 = vmul.f32 %v2983, 1.442695
    %v2987 = vpow.pop %v2986
    %v2988 = vsel %vm385, %v2985, 0.0
    %2989 = vadd.xlane.f32.xlu0 %v2988
    %v2990 = vpop.xlane.xlu0 %2989
    %v2991 = vsel %vm385, %v2987, 0.0
    %2992 = vadd.xlane.f32.xlu0 %v2991
    %v2993 = vpop.xlane.xlu0 %2992
    %v2994 = vrcp.pop %v2990
    %v2995 = vmul.f32 %v2985, %v2994
    %v2996 = vrcp.pop %v2993
    %v2997 = vmul.f32 %v2987, %v2996
    %2998 = vrot.lane.b32.xlu0 %v2146, 96
    %v2999 = vpop.permute.xlu0 %2998
    %v3002 = vsel %vm385, %v2995, 0
    %3004 = vmatprep.subr.mxu0 0.0
    %3005 = vmatpush1.msra.mxu0 %v2999
    %3006 = vmatprep.subr.mxu0 0.0
    %3007 = vmatpush1.msra.mxu0 0.0
    %3008 = vmatprep.subr.mxu0 0.0
    %3009 = vmatpush1.msra.mxu0 0.0
    %3010 = vmatprep.subr.mxu0 0.0
    %3011 = vmatpush1.msra.mxu0 0.0
    %3012 = vmatprep.subr.mxu0 0.0
    %3013 = vmatpush1.msra.mxu0 0.0
    %3014 = vmatprep.subr.mxu0 0.0
    %3015 = vmatpush1.msra.mxu0 0.0
    %3016 = vmatprep.subr.mxu0 0.0
    %3017 = vmatpush1.msra.mxu0 0.0
    %3018 = vmatprep.subr.mxu0 0.0
    %3019 = vmatpush1.msra.mxu0 0.0
    %3020 = vmatprep.subr.mxu0 0.0
    %3021 = vmatpush1.msra.mxu0 0.0
    %3022 = vmatprep.subr.mxu0 0.0
    %3023 = vmatpush1.msra.mxu0 0.0
    %3024 = vmatprep.subr.mxu0 0.0
    %3025 = vmatpush1.msra.mxu0 0.0
    %3026 = vmatprep.subr.mxu0 0.0
    %3027 = vmatpush1.msra.mxu0 0.0
    %3028 = vmatprep.subr.mxu0 0.0
    %3029 = vmatpush1.msra.mxu0 0.0
    %3030 = vmatprep.subr.mxu0 0.0
    %3031 = vmatpush1.msra.mxu0 0.0
    %3032 = vmatprep.subr.mxu0 0.0
    %3033 = vmatpush1.msra.mxu0 0.0
    %3034 = vmatprep.subr.mxu0 0.0
    %3035 = vmatpush1.msra.mxu0 0.0
    %3036 = vmatprep.subr.mxu0 0.0
    %3037 = vmatpush1.msra.mxu0 0.0
    %3038 = vmatprep.subr.mxu0 0.0
    %3039 = vmatpush1.msra.mxu0 0.0
    %3040 = vmatprep.subr.mxu0 0.0
    %3041 = vmatpush1.msra.mxu0 0.0
    %3042 = vmatprep.subr.mxu0 0.0
    %3043 = vmatpush1.msra.mxu0 0.0
    %3044 = vmatprep.subr.mxu0 0.0
    %3045 = vmatpush1.msra.mxu0 0.0
    %3046 = vmatprep.subr.mxu0 0.0
    %3047 = vmatpush1.msra.mxu0 0.0
    %3048 = vmatprep.subr.mxu0 0.0
    %3049 = vmatpush1.msra.mxu0 0.0
    %3050 = vmatprep.subr.mxu0 0.0
    %3051 = vmatpush1.msra.mxu0 0.0
    %3052 = vmatprep.subr.mxu0 0.0
    %3053 = vmatpush1.msra.mxu0 0.0
    %3054 = vmatprep.subr.mxu0 0.0
    %3055 = vmatpush1.msra.mxu0 0.0
    %3056 = vmatprep.subr.mxu0 0.0
    %3057 = vmatpush1.msra.mxu0 0.0
    %3058 = vmatprep.subr.mxu0 0.0
    %3059 = vmatpush1.msra.mxu0 0.0
    %3060 = vmatprep.subr.mxu0 0.0
    %3061 = vmatpush1.msra.mxu0 0.0
    %3062 = vmatprep.subr.mxu0 0.0
    %3063 = vmatpush1.msra.mxu0 0.0
    %3064 = vmatprep.subr.mxu0 0.0
    %3065 = vmatpush1.msra.mxu0 0.0
    %3066 = vmatprep.subr.mxu0 0.0
    %3067 = vmatpush1.msra.mxu0 0.0
    %3068 = vmatprep.mubr.f32.mxu0 0.0
    %3069 = vmatmul.mubr.f32.gmra.mrb[0].mxu0 %v3002
    %v3070 = vpop.f32.mrb[0].mxu0
    %v3071 = vadd.f32 0.0, %v3070
    %v3072 = vpop.f32.mrb[0].mxu0
    %3073 = vdwg.mxu0
    %3074 = vrot.lane.b32.xlu0 %v2152, 96
    %v3075 = vpop.permute.xlu0 %3074
    %v3078 = vsel %vm385, %v2997, 0
    %3080 = vmatprep.subr.mxu0 0.0
    %3081 = vmatpush1.msra.mxu0 %v3075
    %3082 = vmatprep.subr.mxu0 0.0
    %3083 = vmatpush1.msra.mxu0 0.0
    %3084 = vmatprep.subr.mxu0 0.0
    %3085 = vmatpush1.msra.mxu0 0.0
    %3086 = vmatprep.subr.mxu0 0.0
    %3087 = vmatpush1.msra.mxu0 0.0
    %3088 = vmatprep.subr.mxu0 0.0
    %3089 = vmatpush1.msra.mxu0 0.0
    %3090 = vmatprep.subr.mxu0 0.0
    %3091 = vmatpush1.msra.mxu0 0.0
    %3092 = vmatprep.subr.mxu0 0.0
    %3093 = vmatpush1.msra.mxu0 0.0
    %3094 = vmatprep.subr.mxu0 0.0
    %3095 = vmatpush1.msra.mxu0 0.0
    %3096 = vmatprep.subr.mxu0 0.0
    %3097 = vmatpush1.msra.mxu0 0.0
    %3098 = vmatprep.subr.mxu0 0.0
    %3099 = vmatpush1.msra.mxu0 0.0
    %3100 = vmatprep.subr.mxu0 0.0
    %3101 = vmatpush1.msra.mxu0 0.0
    %3102 = vmatprep.subr.mxu0 0.0
    %3103 = vmatpush1.msra.mxu0 0.0
    %3104 = vmatprep.subr.mxu0 0.0
    %3105 = vmatpush1.msra.mxu0 0.0
    %3106 = vmatprep.subr.mxu0 0.0
    %3107 = vmatpush1.msra.mxu0 0.0
    %3108 = vmatprep.subr.mxu0 0.0
    %3109 = vmatpush1.msra.mxu0 0.0
    %3110 = vmatprep.subr.mxu0 0.0
    %3111 = vmatpush1.msra.mxu0 0.0
    %3112 = vmatprep.subr.mxu0 0.0
    %3113 = vmatpush1.msra.mxu0 0.0
    %3114 = vmatprep.subr.mxu0 0.0
    %3115 = vmatpush1.msra.mxu0 0.0
    %3116 = vmatprep.subr.mxu0 0.0
    %3117 = vmatpush1.msra.mxu0 0.0
    %3118 = vmatprep.subr.mxu0 0.0
    %3119 = vmatpush1.msra.mxu0 0.0
    %3120 = vmatprep.subr.mxu0 0.0
    %3121 = vmatpush1.msra.mxu0 0.0
    %3122 = vmatprep.subr.mxu0 0.0
    %3123 = vmatpush1.msra.mxu0 0.0
    %3124 = vmatprep.subr.mxu0 0.0
    %3125 = vmatpush1.msra.mxu0 0.0
    %3126 = vmatprep.subr.mxu0 0.0
    %3127 = vmatpush1.msra.mxu0 0.0
    %3128 = vmatprep.subr.mxu0 0.0
    %3129 = vmatpush1.msra.mxu0 0.0
    %3130 = vmatprep.subr.mxu0 0.0
    %3131 = vmatpush1.msra.mxu0 0.0
    %3132 = vmatprep.subr.mxu0 0.0
    %3133 = vmatpush1.msra.mxu0 0.0
    %3134 = vmatprep.subr.mxu0 0.0
    %3135 = vmatpush1.msra.mxu0 0.0
    %3136 = vmatprep.subr.mxu0 0.0
    %3137 = vmatpush1.msra.mxu0 0.0
    %3138 = vmatprep.subr.mxu0 0.0
    %3139 = vmatpush1.msra.mxu0 0.0
    %3140 = vmatprep.subr.mxu0 0.0
    %3141 = vmatpush1.msra.mxu0 0.0
    %3142 = vmatprep.subr.mxu0 0.0
    %3143 = vmatpush1.msra.mxu0 0.0
    %3144 = vmatprep.mubr.f32.mxu0 0.0
    %3145 = vmatmul.mubr.f32.gmra.mrb[0].mxu0 %v3078
    %v3146 = vpop.f32.mrb[0].mxu0
    %v3147 = vadd.f32 0.0, %v3146
    %v3148 = vpop.f32.mrb[0].mxu0
    %3149 = vdwg.mxu0
    %3150 = vrot.lane.b32.xlu0 %v2144, 80
    %v3151 = vpop.permute.xlu0 %3150
    %3152 = vrot.lane.b32.xlu0 %v2144, 16
    %v3153 = vpop.permute.xlu0 %3152
    %v3154 = vsel %vm229, %v3151, 0
    %v3156 = vsel %vm229, %v3153, 0
    %3158 = vmatprep.subr.mxu0 0.0
    %3159 = vmatpush1.xpose.msra.mxu0 %v3156
    %3160 = vmatprep.subr.mxu0 0.0
    %3161 = vmatpush1.xpose.msra.mxu0 0.0
    %3162 = vmatprep.subr.mxu0 0.0
    %3163 = vmatpush1.xpose.msra.mxu0 0.0
    %3164 = vmatprep.subr.mxu0 0.0
    %3165 = vmatpush1.xpose.msra.mxu0 0.0
    %3166 = vmatprep.subr.mxu0 0.0
    %3167 = vmatpush1.xpose.msra.mxu0 0.0
    %3168 = vmatprep.subr.mxu0 0.0
    %3169 = vmatpush1.xpose.msra.mxu0 0.0
    %3170 = vmatprep.subr.mxu0 0.0
    %3171 = vmatpush1.xpose.msra.mxu0 0.0
    %3172 = vmatprep.subr.mxu0 0.0
    %3173 = vmatpush1.xpose.msra.mxu0 0.0
    %3174 = vmatprep.subr.mxu0 0.0
    %3175 = vmatpush1.xpose.msra.mxu0 0.0
    %3176 = vmatprep.subr.mxu0 0.0
    %3177 = vmatpush1.xpose.msra.mxu0 0.0
    %3178 = vmatprep.subr.mxu0 0.0
    %3179 = vmatpush1.xpose.msra.mxu0 0.0
    %3180 = vmatprep.subr.mxu0 0.0
    %3181 = vmatpush1.xpose.msra.mxu0 0.0
    %3182 = vmatprep.subr.mxu0 0.0
    %3183 = vmatpush1.xpose.msra.mxu0 0.0
    %3184 = vmatprep.subr.mxu0 0.0
    %3185 = vmatpush1.xpose.msra.mxu0 0.0
    %3186 = vmatprep.subr.mxu0 0.0
    %3187 = vmatpush1.xpose.msra.mxu0 0.0
    %3188 = vmatprep.subr.mxu0 0.0
    %3189 = vmatpush1.xpose.msra.mxu0 0.0
    %3190 = vmatprep.subr.mxu0 0.0
    %3191 = vmatpush1.xpose.msra.mxu0 0.0
    %3192 = vmatprep.subr.mxu0 0.0
    %3193 = vmatpush1.xpose.msra.mxu0 0.0
    %3194 = vmatprep.subr.mxu0 0.0
    %3195 = vmatpush1.xpose.msra.mxu0 0.0
    %3196 = vmatprep.subr.mxu0 0.0
    %3197 = vmatpush1.xpose.msra.mxu0 0.0
    %3198 = vmatprep.subr.mxu0 0.0
    %3199 = vmatpush1.xpose.msra.mxu0 0.0
    %3200 = vmatprep.subr.mxu0 0.0
    %3201 = vmatpush1.xpose.msra.mxu0 0.0
    %3202 = vmatprep.subr.mxu0 0.0
    %3203 = vmatpush1.xpose.msra.mxu0 0.0
    %3204 = vmatprep.subr.mxu0 0.0
    %3205 = vmatpush1.xpose.msra.mxu0 0.0
    %3206 = vmatprep.subr.mxu0 0.0
    %3207 = vmatpush1.xpose.msra.mxu0 0.0
    %3208 = vmatprep.subr.mxu0 0.0
    %3209 = vmatpush1.xpose.msra.mxu0 0.0
    %3210 = vmatprep.subr.mxu0 0.0
    %3211 = vmatpush1.xpose.msra.mxu0 0.0
    %3212 = vmatprep.subr.mxu0 0.0
    %3213 = vmatpush1.xpose.msra.mxu0 0.0
    %3214 = vmatprep.subr.mxu0 0.0
    %3215 = vmatpush1.xpose.msra.mxu0 0.0
    %3216 = vmatprep.subr.mxu0 0.0
    %3217 = vmatpush1.xpose.msra.mxu0 0.0
    %3218 = vmatprep.subr.mxu0 0.0
    %3219 = vmatpush1.xpose.msra.mxu0 0.0
    %3220 = vmatprep.subr.mxu0 0.0
    %3221 = vmatpush1.xpose.msra.mxu0 0.0
    %3222 = vmatprep.mubr.f32.mxu0 0.0
    %3223 = vmatmul.mubr.f32.gmra.mrb[0].mxu0 %v3154
    %v3224 = vpop.f32.mrb[0].mxu0
    %v3225 = vadd.f32 0.0, %v3224
    %v3226 = vpop.f32.mrb[0].mxu0
    %3227 = vdwg.mxu0
    %3228 = vrot.lane.b32.xlu0 %v2150, 80
    %v3229 = vpop.permute.xlu0 %3228
    %3230 = vrot.lane.b32.xlu0 %v2150, 16
    %v3231 = vpop.permute.xlu0 %3230
    %v3232 = vsel %vm229, %v3229, 0
    %v3234 = vsel %vm229, %v3231, 0
    %3236 = vmatprep.subr.mxu0 0.0
    %3237 = vmatpush1.xpose.msra.mxu0 %v3234
    %3238 = vmatprep.subr.mxu0 0.0
    %3239 = vmatpush1.xpose.msra.mxu0 0.0
    %3240 = vmatprep.subr.mxu0 0.0
    %3241 = vmatpush1.xpose.msra.mxu0 0.0
    %3242 = vmatprep.subr.mxu0 0.0
    %3243 = vmatpush1.xpose.msra.mxu0 0.0
    %3244 = vmatprep.subr.mxu0 0.0
    %3245 = vmatpush1.xpose.msra.mxu0 0.0
    %3246 = vmatprep.subr.mxu0 0.0
    %3247 = vmatpush1.xpose.msra.mxu0 0.0
    %3248 = vmatprep.subr.mxu0 0.0
    %3249 = vmatpush1.xpose.msra.mxu0 0.0
    %3250 = vmatprep.subr.mxu0 0.0
    %3251 = vmatpush1.xpose.msra.mxu0 0.0
    %3252 = vmatprep.subr.mxu0 0.0
    %3253 = vmatpush1.xpose.msra.mxu0 0.0
    %3254 = vmatprep.subr.mxu0 0.0
    %3255 = vmatpush1.xpose.msra.mxu0 0.0
    %3256 = vmatprep.subr.mxu0 0.0
    %3257 = vmatpush1.xpose.msra.mxu0 0.0
    %3258 = vmatprep.subr.mxu0 0.0
    %3259 = vmatpush1.xpose.msra.mxu0 0.0
    %3260 = vmatprep.subr.mxu0 0.0
    %3261 = vmatpush1.xpose.msra.mxu0 0.0
    %3262 = vmatprep.subr.mxu0 0.0
    %3263 = vmatpush1.xpose.msra.mxu0 0.0
    %3264 = vmatprep.subr.mxu0 0.0
    %3265 = vmatpush1.xpose.msra.mxu0 0.0
    %3266 = vmatprep.subr.mxu0 0.0
    %3267 = vmatpush1.xpose.msra.mxu0 0.0
    %3268 = vmatprep.subr.mxu0 0.0
    %3269 = vmatpush1.xpose.msra.mxu0 0.0
    %3270 = vmatprep.subr.mxu0 0.0
    %3271 = vmatpush1.xpose.msra.mxu0 0.0
    %3272 = vmatprep.subr.mxu0 0.0
    %3273 = vmatpush1.xpose.msra.mxu0 0.0
    %3274 = vmatprep.subr.mxu0 0.0
    %3275 = vmatpush1.xpose.msra.mxu0 0.0
    %3276 = vmatprep.subr.mxu0 0.0
    %3277 = vmatpush1.xpose.msra.mxu0 0.0
    %3278 = vmatprep.subr.mxu0 0.0
    %3279 = vmatpush1.xpose.msra.mxu0 0.0
    %3280 = vmatprep.subr.mxu0 0.0
    %3281 = vmatpush1.xpose.msra.mxu0 0.0
    %3282 = vmatprep.subr.mxu0 0.0
    %3283 = vmatpush1.xpose.msra.mxu0 0.0
    %3284 = vmatprep.subr.mxu0 0.0
    %3285 = vmatpush1.xpose.msra.mxu0 0.0
    %3286 = vmatprep.subr.mxu0 0.0
    %3287 = vmatpush1.xpose.msra.mxu0 0.0
    %3288 = vmatprep.subr.mxu0 0.0
    %3289 = vmatpush1.xpose.msra.mxu0 0.0
    %3290 = vmatprep.subr.mxu0 0.0
    %3291 = vmatpush1.xpose.msra.mxu0 0.0
    %3292 = vmatprep.subr.mxu0 0.0
    %3293 = vmatpush1.xpose.msra.mxu0 0.0
    %3294 = vmatprep.subr.mxu0 0.0
    %3295 = vmatpush1.xpose.msra.mxu0 0.0
    %3296 = vmatprep.subr.mxu0 0.0
    %3297 = vmatpush1.xpose.msra.mxu0 0.0
    %3298 = vmatprep.subr.mxu0 0.0
    %3299 = vmatpush1.xpose.msra.mxu0 0.0
    %3300 = vmatprep.mubr.f32.mxu0 0.0
    %3301 = vmatmul.mubr.f32.gmra.mrb[0].mxu0 %v3232
    %v3302 = vpop.f32.mrb[0].mxu0
    %v3303 = vadd.f32 0.0, %v3302
    %v3304 = vpop.f32.mrb[0].mxu0
    %3305 = vdwg.mxu0
    %v3306 = vmul.f32 %v3225, 0.25
    %v3307 = vmul.f32 %v3303, 0.25
    %v3308 = vadd.f32 %v3306, %v68
    %v3309 = vadd.f32 %v3307, %v68
    %v3310 = vsel %vm385, %v3308, -inf
    %3311 = vmax.xlane.f32.xlu0 %v3310
    %v3312 = vpop.xlane.xlu0 %3311
    %v3313 = vsel %vm385, %v3309, -inf
    %3314 = vmax.xlane.f32.xlu0 %v3313
    %v3315 = vpop.xlane.xlu0 %3314
    %v3316 = vsub.f32 %v3308, %v3312
    %v3317 = vsub.f32 %v3309, %v3315
    %v3318 = vmul.f32 %v3316, 1.442695
    %v3319 = vpow.pop %v3318
    %v3320 = vmul.f32 %v3317, 1.442695
    %v3321 = vpow.pop %v3320
    %v3322 = vsel %vm385, %v3319, 0.0
    %3323 = vadd.xlane.f32.xlu0 %v3322
    %v3324 = vpop.xlane.xlu0 %3323
    %v3325 = vsel %vm385, %v3321, 0.0
    %3326 = vadd.xlane.f32.xlu0 %v3325
    %v3327 = vpop.xlane.xlu0 %3326
    %v3328 = vrcp.pop %v3324
    %v3329 = vmul.f32 %v3319, %v3328
    %v3330 = vrcp.pop %v3327
    %v3331 = vmul.f32 %v3321, %v3330
    %3332 = vrot.lane.b32.xlu0 %v2146, 80
    %v3333 = vpop.permute.xlu0 %3332
    %v3336 = vsel %vm385, %v3329, 0
    %3338 = vmatprep.subr.mxu0 0.0
    %3339 = vmatpush1.msra.mxu0 %v3333
    %3340 = vmatprep.subr.mxu0 0.0
    %3341 = vmatpush1.msra.mxu0 0.0
    %3342 = vmatprep.subr.mxu0 0.0
    %3343 = vmatpush1.msra.mxu0 0.0
    %3344 = vmatprep.subr.mxu0 0.0
    %3345 = vmatpush1.msra.mxu0 0.0
    %3346 = vmatprep.subr.mxu0 0.0
    %3347 = vmatpush1.msra.mxu0 0.0
    %3348 = vmatprep.subr.mxu0 0.0
    %3349 = vmatpush1.msra.mxu0 0.0
    %3350 = vmatprep.subr.mxu0 0.0
    %3351 = vmatpush1.msra.mxu0 0.0
    %3352 = vmatprep.subr.mxu0 0.0
    %3353 = vmatpush1.msra.mxu0 0.0
    %3354 = vmatprep.subr.mxu0 0.0
    %3355 = vmatpush1.msra.mxu0 0.0
    %3356 = vmatprep.subr.mxu0 0.0
    %3357 = vmatpush1.msra.mxu0 0.0
    %3358 = vmatprep.subr.mxu0 0.0
    %3359 = vmatpush1.msra.mxu0 0.0
    %3360 = vmatprep.subr.mxu0 0.0
    %3361 = vmatpush1.msra.mxu0 0.0
    %3362 = vmatprep.subr.mxu0 0.0
    %3363 = vmatpush1.msra.mxu0 0.0
    %3364 = vmatprep.subr.mxu0 0.0
    %3365 = vmatpush1.msra.mxu0 0.0
    %3366 = vmatprep.subr.mxu0 0.0
    %3367 = vmatpush1.msra.mxu0 0.0
    %3368 = vmatprep.subr.mxu0 0.0
    %3369 = vmatpush1.msra.mxu0 0.0
    %3370 = vmatprep.subr.mxu0 0.0
    %3371 = vmatpush1.msra.mxu0 0.0
    %3372 = vmatprep.subr.mxu0 0.0
    %3373 = vmatpush1.msra.mxu0 0.0
    %3374 = vmatprep.subr.mxu0 0.0
    %3375 = vmatpush1.msra.mxu0 0.0
    %3376 = vmatprep.subr.mxu0 0.0
    %3377 = vmatpush1.msra.mxu0 0.0
    %3378 = vmatprep.subr.mxu0 0.0
    %3379 = vmatpush1.msra.mxu0 0.0
    %3380 = vmatprep.subr.mxu0 0.0
    %3381 = vmatpush1.msra.mxu0 0.0
    %3382 = vmatprep.subr.mxu0 0.0
    %3383 = vmatpush1.msra.mxu0 0.0
    %3384 = vmatprep.subr.mxu0 0.0
    %3385 = vmatpush1.msra.mxu0 0.0
    %3386 = vmatprep.subr.mxu0 0.0
    %3387 = vmatpush1.msra.mxu0 0.0
    %3388 = vmatprep.subr.mxu0 0.0
    %3389 = vmatpush1.msra.mxu0 0.0
    %3390 = vmatprep.subr.mxu0 0.0
    %3391 = vmatpush1.msra.mxu0 0.0
    %3392 = vmatprep.subr.mxu0 0.0
    %3393 = vmatpush1.msra.mxu0 0.0
    %3394 = vmatprep.subr.mxu0 0.0
    %3395 = vmatpush1.msra.mxu0 0.0
    %3396 = vmatprep.subr.mxu0 0.0
    %3397 = vmatpush1.msra.mxu0 0.0
    %3398 = vmatprep.subr.mxu0 0.0
    %3399 = vmatpush1.msra.mxu0 0.0
    %3400 = vmatprep.subr.mxu0 0.0
    %3401 = vmatpush1.msra.mxu0 0.0
    %3402 = vmatprep.mubr.f32.mxu0 0.0
    %3403 = vmatmul.mubr.f32.gmra.mrb[0].mxu0 %v3336
    %v3404 = vpop.f32.mrb[0].mxu0
    %v3405 = vadd.f32 0.0, %v3404
    %v3406 = vpop.f32.mrb[0].mxu0
    %3407 = vdwg.mxu0
    %3408 = vrot.lane.b32.xlu0 %v2152, 80
    %v3409 = vpop.permute.xlu0 %3408
    %v3412 = vsel %vm385, %v3331, 0
    %3414 = vmatprep.subr.mxu0 0.0
    %3415 = vmatpush1.msra.mxu0 %v3409
    %3416 = vmatprep.subr.mxu0 0.0
    %3417 = vmatpush1.msra.mxu0 0.0
    %3418 = vmatprep.subr.mxu0 0.0
    %3419 = vmatpush1.msra.mxu0 0.0
    %3420 = vmatprep.subr.mxu0 0.0
    %3421 = vmatpush1.msra.mxu0 0.0
    %3422 = vmatprep.subr.mxu0 0.0
    %3423 = vmatpush1.msra.mxu0 0.0
    %3424 = vmatprep.subr.mxu0 0.0
    %3425 = vmatpush1.msra.mxu0 0.0
    %3426 = vmatprep.subr.mxu0 0.0
    %3427 = vmatpush1.msra.mxu0 0.0
    %3428 = vmatprep.subr.mxu0 0.0
    %3429 = vmatpush1.msra.mxu0 0.0
    %3430 = vmatprep.subr.mxu0 0.0
    %3431 = vmatpush1.msra.mxu0 0.0
    %3432 = vmatprep.subr.mxu0 0.0
    %3433 = vmatpush1.msra.mxu0 0.0
    %3434 = vmatprep.subr.mxu0 0.0
    %3435 = vmatpush1.msra.mxu0 0.0
    %3436 = vmatprep.subr.mxu0 0.0
    %3437 = vmatpush1.msra.mxu0 0.0
    %3438 = vmatprep.subr.mxu0 0.0
    %3439 = vmatpush1.msra.mxu0 0.0
    %3440 = vmatprep.subr.mxu0 0.0
    %3441 = vmatpush1.msra.mxu0 0.0
    %3442 = vmatprep.subr.mxu0 0.0
    %3443 = vmatpush1.msra.mxu0 0.0
    %3444 = vmatprep.subr.mxu0 0.0
    %3445 = vmatpush1.msra.mxu0 0.0
    %3446 = vmatprep.subr.mxu0 0.0
    %3447 = vmatpush1.msra.mxu0 0.0
    %3448 = vmatprep.subr.mxu0 0.0
    %3449 = vmatpush1.msra.mxu0 0.0
    %3450 = vmatprep.subr.mxu0 0.0
    %3451 = vmatpush1.msra.mxu0 0.0
    %3452 = vmatprep.subr.mxu0 0.0
    %3453 = vmatpush1.msra.mxu0 0.0
    %3454 = vmatprep.subr.mxu0 0.0
    %3455 = vmatpush1.msra.mxu0 0.0
    %3456 = vmatprep.subr.mxu0 0.0
    %3457 = vmatpush1.msra.mxu0 0.0
    %3458 = vmatprep.subr.mxu0 0.0
    %3459 = vmatpush1.msra.mxu0 0.0
    %3460 = vmatprep.subr.mxu0 0.0
    %3461 = vmatpush1.msra.mxu0 0.0
    %3462 = vmatprep.subr.mxu0 0.0
    %3463 = vmatpush1.msra.mxu0 0.0
    %3464 = vmatprep.subr.mxu0 0.0
    %3465 = vmatpush1.msra.mxu0 0.0
    %3466 = vmatprep.subr.mxu0 0.0
    %3467 = vmatpush1.msra.mxu0 0.0
    %3468 = vmatprep.subr.mxu0 0.0
    %3469 = vmatpush1.msra.mxu0 0.0
    %3470 = vmatprep.subr.mxu0 0.0
    %3471 = vmatpush1.msra.mxu0 0.0
    %3472 = vmatprep.subr.mxu0 0.0
    %3473 = vmatpush1.msra.mxu0 0.0
    %3474 = vmatprep.subr.mxu0 0.0
    %3475 = vmatpush1.msra.mxu0 0.0
    %3476 = vmatprep.subr.mxu0 0.0
    %3477 = vmatpush1.msra.mxu0 0.0
    %3478 = vmatprep.mubr.f32.mxu0 0.0
    %3479 = vmatmul.mubr.f32.gmra.mrb[0].mxu0 %v3412
    %v3480 = vpop.f32.mrb[0].mxu0
    %v3481 = vadd.f32 0.0, %v3480
    %v3482 = vpop.f32.mrb[0].mxu0
    %3483 = vdwg.mxu0
    %3486 = vrot.lane.b32.xlu0 %v2736, 16
    %v3487 = vpop.permute.xlu0 %3486
    %3488 = vrot.lane.b32.xlu0 %v2813, 16
    %v3489 = vpop.permute.xlu0 %3488
    %3494 = vrot.lane.b32.xlu0 %v3071, 32
    %v3495 = vpop.permute.xlu0 %3494
    %3496 = vrot.lane.b32.xlu0 %v3147, 32
    %v3497 = vpop.permute.xlu0 %3496
    %3502 = vrot.lane.b32.xlu0 %v3405, 48
    %v3503 = vpop.permute.xlu0 %3502
    %3504 = vrot.lane.b32.xlu0 %v3481, 48
    %v3505 = vpop.permute.xlu0 %3504
    %v3508 = vsel %vm229, %v2404, %v3487
    %v3509 = vsel %vm229, %v2477, %v3489
    %v3510 = vsel %vm1584, %v3508, %v3495
    %v3511 = vsel %vm1584, %v3509, %v3497
    %v3512 = vsel %vm1587, %v3510, %v3503
    %v3513 = vsel %vm1587, %v3511, %v3505
    %s3514 = scalar_lea.vmem %s8, 64
    %v3515 = vld [vmem:[%s3514] sm:$0xff]
    %v3516 = vld [vmem:[%s3514 + $0x8] sm:$0xff]
    %v3517 = vld [vmem:[%s3514 + $0x10] sm:$0xff]
    %v3518 = vld [vmem:[%s3514 + $0x18] sm:$0xff]
    %v3519 = vld [vmem:[%s3514 + $0x20] sm:$0xff]
    %v3520 = vld [vmem:[%s3514 + $0x28] sm:$0xff]
    %v3521 = vld [vmem:[%s3514 + $0x30] sm:$0xff]
    %v3522 = vld [vmem:[%s3514 + $0x38] sm:$0xff]
    %s3523 = scalar_lea.vmem %s9, 1
    %v3524 = vld [vmem:[%s3523] sm:$0x1]
    %v3526 = vlaneseq
    %v3527 = vshrl.u32 %v3526, 7
    %v3528 = vsub.s32 0, %v3527
    %v3529 = vrot.slane %v3524, %v3528
    %v3532 = vsel %vm71, %v3512, 0
    %v3535 = vsel %vm71, %v3513, 0
    %3537 = vmatprep.subr.mxu0 0.0
    %3538 = vmatpush1.msra.mxu0 %v3515
    %3539 = vmatprep.subr.mxu0 0.0
    %3540 = vmatpush1.msra.mxu0 %v3516
    %3541 = vmatprep.subr.mxu0 0.0
    %3542 = vmatpush1.msra.mxu0 %v3517
    %3543 = vmatprep.subr.mxu0 0.0
    %3544 = vmatpush1.msra.mxu0 %v3518
    %3545 = vmatprep.subr.mxu0 0.0
    %3546 = vmatpush1.msra.mxu0 %v3519
    %3547 = vmatprep.subr.mxu0 0.0
    %3548 = vmatpush1.msra.mxu0 %v3520
    %3549 = vmatprep.subr.mxu0 0.0
    %3550 = vmatpush1.msra.mxu0 %v3521
    %3551 = vmatprep.subr.mxu0 0.0
    %3552 = vmatpush1.msra.mxu0 %v3522
    %3553 = vmatprep.subr.mxu0 0.0
    %3554 = vmatpush1.msra.mxu0 0.0
    %3555 = vmatprep.subr.mxu0 0.0
    %3556 = vmatpush1.msra.mxu0 0.0
    %3557 = vmatprep.subr.mxu0 0.0
    %3558 = vmatpush1.msra.mxu0 0.0
    %3559 = vmatprep.subr.mxu0 0.0
    %3560 = vmatpush1.msra.mxu0 0.0
    %3561 = vmatprep.subr.mxu0 0.0
    %3562 = vmatpush1.msra.mxu0 0.0
    %3563 = vmatprep.subr.mxu0 0.0
    %3564 = vmatpush1.msra.mxu0 0.0
    %3565 = vmatprep.subr.mxu0 0.0
    %3566 = vmatpush1.msra.mxu0 0.0
    %3567 = vmatprep.subr.mxu0 0.0
    %3568 = vmatpush1.msra.mxu0 0.0
    %3569 = vmatprep.subr.mxu0 0.0
    %3570 = vmatpush1.msra.mxu0 0.0
    %3571 = vmatprep.subr.mxu0 0.0
    %3572 = vmatpush1.msra.mxu0 0.0
    %3573 = vmatprep.subr.mxu0 0.0
    %3574 = vmatpush1.msra.mxu0 0.0
    %3575 = vmatprep.subr.mxu0 0.0
    %3576 = vmatpush1.msra.mxu0 0.0
    %3577 = vmatprep.subr.mxu0 0.0
    %3578 = vmatpush1.msra.mxu0 0.0
    %3579 = vmatprep.subr.mxu0 0.0
    %3580 = vmatpush1.msra.mxu0 0.0
    %3581 = vmatprep.subr.mxu0 0.0
    %3582 = vmatpush1.msra.mxu0 0.0
    %3583 = vmatprep.subr.mxu0 0.0
    %3584 = vmatpush1.msra.mxu0 0.0
    %3585 = vmatprep.subr.mxu0 0.0
    %3586 = vmatpush1.msra.mxu0 0.0
    %3587 = vmatprep.subr.mxu0 0.0
    %3588 = vmatpush1.msra.mxu0 0.0
    %3589 = vmatprep.subr.mxu0 0.0
    %3590 = vmatpush1.msra.mxu0 0.0
    %3591 = vmatprep.subr.mxu0 0.0
    %3592 = vmatpush1.msra.mxu0 0.0
    %3593 = vmatprep.subr.mxu0 0.0
    %3594 = vmatpush1.msra.mxu0 0.0
    %3595 = vmatprep.subr.mxu0 0.0
    %3596 = vmatpush1.msra.mxu0 0.0
    %3597 = vmatprep.subr.mxu0 0.0
    %3598 = vmatpush1.msra.mxu0 0.0
    %3599 = vmatprep.subr.mxu0 0.0
    %3600 = vmatpush1.msra.mxu0 0.0
    %3601 = vmatprep.mubr.f32.mxu0 0.0
    %3602 = vmatmul.mubr.f32.gmra.mrb[0].mxu0 %v3532
    %v3603 = vpop.f32.mrb[0].mxu0
    %v3604 = vadd.f32 %v3529, %v3603
    %v3605 = vpop.f32.mrb[0].mxu0
    %3606 = vmatprep.mubr.f32.mxu0 0.0
    %3607 = vmatmul.mubr.f32.gmra.mrb[0].mxu0 %v3535
    %v3608 = vpop.f32.mrb[0].mxu0
    %v3609 = vadd.f32 %v3529, %v3608
    %v3610 = vpop.f32.mrb[0].mxu0
    %3611 = vdwg.mxu0
    %v3612 = vadd.f32 %v3604, %v1993
    %v3613 = vadd.f32 %v3609, %v1994
    %s3614 = scalar_lea.vmem %s10, 1
    %v3615 = vld [vmem:[%s3614] sm:$0x1]
    %s3616 = scalar_lea.vmem %s11, 1
    %v3617 = vld [vmem:[%s3616] sm:$0x1]
    %v3618 = vsel %vm71, %v3612, 0.0
    %3619 = vadd.xlane.f32.xlu0 %v3618
    %v3620 = vpop.xlane.xlu0 %3619
    %v3621 = vsel %vm71, %v3613, 0.0
    %3622 = vadd.xlane.f32.xlu0 %v3621
    %v3623 = vpop.xlane.xlu0 %3622
    %v3624 = vmul.f32 %v3620, %v78
    %v3625 = vmul.f32 %v3623, %v78
    %v3626 = vsub.f32 %v3612, %v3624
    %v3627 = vsub.f32 %v3613, %v3625
    %v3628 = vmul.f32 %v3626, %v3626
    %v3629 = vmul.f32 %v3627, %v3627
    %v3630 = vsel %vm71, %v3628, 0.0
    %3631 = vadd.xlane.f32.xlu0 %v3630
    %v3632 = vpop.xlane.xlu0 %3631
    %v3633 = vsel %vm71, %v3629, 0.0
    %3634 = vadd.xlane.f32.xlu0 %v3633
    %v3635 = vpop.xlane.xlu0 %3634
    %v3636 = vmul.f32 %v3632, %v78
    %v3637 = vmul.f32 %v3635, %v78
    %v3638 = vadd.f32 %v3636, 1e-05
    %v3639 = vadd.f32 %v3637, 1e-05
    %v3640 = vrsqrt.pop %v3638
    %v3641 = vrsqrt.pop %v3639
    %v3642 = vmul.f32 %v3626, %v3640
    %v3643 = vmul.f32 %v3627, %v3641
    %v3645 = vlaneseq
    %v3646 = vshrl.u32 %v3645, 7
    %v3647 = vsub.s32 0, %v3646
    %v3648 = vrot.slane %v3615, %v3647
    %v3650 = vmul.f32 %v3642, %v3648
    %v3651 = vmul.f32 %v3643, %v3648
    %v3653 = vlaneseq
    %v3654 = vshrl.u32 %v3653, 7
    %v3655 = vsub.s32 0, %v3654
    %v3656 = vrot.slane %v3617, %v3655
    %v3658 = vadd.f32 %v3650, %v3656
    %v3659 = vadd.f32 %v3651, %v3656
    %s3660 = scalar_lea.vmem %s12, 128
    %v3661 = vld [vmem:[%s3660] sm:$0xff]
    %v3662 = vld [vmem:[%s3660 + $0x8] sm:$0xff]
    %v3663 = vld [vmem:[%s3660 + $0x10] sm:$0xff]
    %v3664 = vld [vmem:[%s3660 + $0x18] sm:$0xff]
    %v3665 = vld [vmem:[%s3660 + $0x20] sm:$0xff]
    %v3666 = vld [vmem:[%s3660 + $0x28] sm:$0xff]
    %v3667 = vld [vmem:[%s3660 + $0x30] sm:$0xff]
    %v3668 = vld [vmem:[%s3660 + $0x38] sm:$0xff]
    %v3669 = vld [vmem:[%s3660 + $0x40] sm:$0xff]
    %v3670 = vld [vmem:[%s3660 + $0x48] sm:$0xff]
    %v3671 = vld [vmem:[%s3660 + $0x50] sm:$0xff]
    %v3672 = vld [vmem:[%s3660 + $0x58] sm:$0xff]
    %v3673 = vld [vmem:[%s3660 + $0x60] sm:$0xff]
    %v3674 = vld [vmem:[%s3660 + $0x68] sm:$0xff]
    %v3675 = vld [vmem:[%s3660 + $0x70] sm:$0xff]
    %v3676 = vld [vmem:[%s3660 + $0x78] sm:$0xff]
    %s3677 = scalar_lea.vmem %s13, 2
    %v3678 = vld [vmem:[%s3677] sm:$0x3]
    %v3680 = vlaneseq
    %v3681 = vshrl.u32 %v3680, 7
    %v3682 = vsub.s32 0, %v3681
    %v3683 = vrot.slane %v3678, %v3682
    %v3684 = vlaneseq
    %v3685 = vshrl.u32 %v3684, 7
    %v3686 = vsub.s32 1, %v3685
    %v3687 = vrot.slane %v3678, %v3686
    %v3691 = vsel %vm71, %v3658, 0
    %v3694 = vsel %vm71, %v3659, 0
    %3696 = vmatprep.subr.mxu0 %v3662
    %3697 = vmatpush1.msra.mxu0 %v3661
    %3698 = vmatprep.subr.mxu0 %v3664
    %3699 = vmatpush1.msra.mxu0 %v3663
    %3700 = vmatprep.subr.mxu0 %v3666
    %3701 = vmatpush1.msra.mxu0 %v3665
    %3702 = vmatprep.subr.mxu0 %v3668
    %3703 = vmatpush1.msra.mxu0 %v3667
    %3704 = vmatprep.subr.mxu0 %v3670
    %3705 = vmatpush1.msra.mxu0 %v3669
    %3706 = vmatprep.subr.mxu0 %v3672
    %3707 = vmatpush1.msra.mxu0 %v3671
    %3708 = vmatprep.subr.mxu0 %v3674
    %3709 = vmatpush1.msra.mxu0 %v3673
    %3710 = vmatprep.subr.mxu0 %v3676
    %3711 = vmatpush1.msra.mxu0 %v3675
    %3712 = vmatprep.subr.mxu0 0.0
    %3713 = vmatpush1.msra.mxu0 0.0
    %3714 = vmatprep.subr.mxu0 0.0
    %3715 = vmatpush1.msra.mxu0 0.0
    %3716 = vmatprep.subr.mxu0 0.0
    %3717 = vmatpush1.msra.mxu0 0.0
    %3718 = vmatprep.subr.mxu0 0.0
    %3719 = vmatpush1.msra.mxu0 0.0
    %3720 = vmatprep.subr.mxu0 0.0
    %3721 = vmatpush1.msra.mxu0 0.0
    %3722 = vmatprep.subr.mxu0 0.0
    %3723 = vmatpush1.msra.mxu0 0.0
    %3724 = vmatprep.subr.mxu0 0.0
    %3725 = vmatpush1.msra.mxu0 0.0
    %3726 = vmatprep.subr.mxu0 0.0
    %3727 = vmatpush1.msra.mxu0 0.0
    %3728 = vmatprep.subr.mxu0 0.0
    %3729 = vmatpush1.msra.mxu0 0.0
    %3730 = vmatprep.subr.mxu0 0.0
    %3731 = vmatpush1.msra.mxu0 0.0
    %3732 = vmatprep.subr.mxu0 0.0
    %3733 = vmatpush1.msra.mxu0 0.0
    %3734 = vmatprep.subr.mxu0 0.0
    %3735 = vmatpush1.msra.mxu0 0.0
    %3736 = vmatprep.subr.mxu0 0.0
    %3737 = vmatpush1.msra.mxu0 0.0
    %3738 = vmatprep.subr.mxu0 0.0
    %3739 = vmatpush1.msra.mxu0 0.0
    %3740 = vmatprep.subr.mxu0 0.0
    %3741 = vmatpush1.msra.mxu0 0.0
    %3742 = vmatprep.subr.mxu0 0.0
    %3743 = vmatpush1.msra.mxu0 0.0
    %3744 = vmatprep.subr.mxu0 0.0
    %3745 = vmatpush1.msra.mxu0 0.0
    %3746 = vmatprep.subr.mxu0 0.0
    %3747 = vmatpush1.msra.mxu0 0.0
    %3748 = vmatprep.subr.mxu0 0.0
    %3749 = vmatpush1.msra.mxu0 0.0
    %3750 = vmatprep.subr.mxu0 0.0
    %3751 = vmatpush1.msra.mxu0 0.0
    %3752 = vmatprep.subr.mxu0 0.0
    %3753 = vmatpush1.msra.mxu0 0.0
    %3754 = vmatprep.subr.mxu0 0.0
    %3755 = vmatpush1.msra.mxu0 0.0
    %3756 = vmatprep.subr.mxu0 0.0
    %3757 = vmatpush1.msra.mxu0 0.0
    %3758 = vmatprep.subr.mxu0 0.0
    %3759 = vmatpush1.msra.mxu0 0.0
    %3760 = vmatprep.mubr.f32.mxu0 0.0
    %3761 = vmatmul.mubr.f32.gmra.mrb[0].mxu0 %v3691
    %v3762 = vpop.f32.mrb[0].mxu0
    %v3763 = vadd.f32 %v3683, %v3762
    %v3764 = vpop.f32.mrb[0].mxu0
    %v3765 = vadd.f32 %v3687, %v3764
    %3766 = vmatprep.mubr.f32.mxu0 0.0
    %3767 = vmatmul.mubr.f32.gmra.mrb[0].mxu0 %v3694
    %v3768 = vpop.f32.mrb[0].mxu0
    %v3769 = vadd.f32 %v3683, %v3768
    %v3770 = vpop.f32.mrb[0].mxu0
    %v3771 = vadd.f32 %v3687, %v3770
    %3772 = vdwg.mxu0
    %v3773 = vmul.f32 %v3763, 0.5
    %v3774 = vmul.f32 %v3765, 0.5
    %v3775 = vmul.f32 %v3769, 0.5
    %v3776 = vmul.f32 %v3771, 0.5
    %v3777 = vmul.f32 %v3763, 0.044715
    %v3778 = vmul.f32 %v3765, 0.044715
    %v3779 = vmul.f32 %v3769, 0.044715
    %v3780 = vmul.f32 %v3771, 0.044715
    %v3781 = vmul.f32 %v3777, %v3763
    %v3782 = vmul.f32 %v3778, %v3765
    %v3783 = vmul.f32 %v3779, %v3769
    %v3784 = vmul.f32 %v3780, %v3771
    %v3785 = vmul.f32 %v3781, %v3763
    %v3786 = vmul.f32 %v3782, %v3765
    %v3787 = vmul.f32 %v3783, %v3769
    %v3788 = vmul.f32 %v3784, %v3771
    %v3789 = vadd.f32 %v3763, %v3785
    %v3790 = vadd.f32 %v3765, %v3786
    %v3791 = vadd.f32 %v3769, %v3787
    %v3792 = vadd.f32 %v3771, %v3788
    %v3793 = vmul.f32 %v3789, 0.7978846
    %v3794 = vmul.f32 %v3790, 0.7978846
    %v3795 = vmul.f32 %v3791, 0.7978846
    %v3796 = vmul.f32 %v3792, 0.7978846
    %v3797 = vtanh.pop %v3793
    %v3798 = vtanh.pop %v3794
    %v3799 = vtanh.pop %v3795
    %v3800 = vtanh.pop %v3796
    %v3801 = vadd.f32 %v3797, 1.0
    %v3802 = vadd.f32 %v3798, 1.0
    %v3803 = vadd.f32 %v3799, 1.0
    %v3804 = vadd.f32 %v3800, 1.0
    %v3805 = vmul.f32 %v3773, %v3801
    %v3806 = vmul.f32 %v3774, %v3802
    %v3807 = vmul.f32 %v3775, %v3803
    %v3808 = vmul.f32 %v3776, %v3804
    %s3809 = scalar_lea.vmem %s14, 256
    %v3810 = vld [vmem:[%s3809] sm:$0xff]
    %v3811 = vld [vmem:[%s3809 + $0x8] sm:$0xff]
    %v3812 = vld [vmem:[%s3809 + $0x10] sm:$0xff]
    %v3813 = vld [vmem:[%s3809 + $0x18] sm:$0xff]
    %v3814 = vld [vmem:[%s3809 + $0x20] sm:$0xff]
    %v3815 = vld [vmem:[%s3809 + $0x28] sm:$0xff]
    %v3816 = vld [vmem:[%s3809 + $0x30] sm:$0xff]
    %v3817 = vld [vmem:[%s3809 + $0x38] sm:$0xff]
    %v3818 = vld [vmem:[%s3809 + $0x40] sm:$0xff]
    %v3819 = vld [vmem:[%s3809 + $0x48] sm:$0xff]
    %v3820 = vld [vmem:[%s3809 + $0x50] sm:$0xff]
    %v3821 = vld [vmem:[%s3809 + $0x58] sm:$0xff]
    %v3822 = vld [vmem:[%s3809 + $0x60] sm:$0xff]
    %v3823 = vld [vmem:[%s3809 + $0x68] sm:$0xff]
    %v3824 = vld [vmem:[%s3809 + $0x70] sm:$0xff]
    %v3825 = vld [vmem:[%s3809 + $0x78] sm:$0xff]
    %v3826 = vld [vmem:[%s3809 + $0x80] sm:$0xff]
    %v3827 = vld [vmem:[%s3809 + $0x88] sm:$0xff]
    %v3828 = vld [vmem:[%s3809 + $0x90] sm:$0xff]
    %v3829 = vld [vmem:[%s3809 + $0x98] sm:$0xff]
    %v3830 = vld [vmem:[%s3809 + $0xa0] sm:$0xff]
    %v3831 = vld [vmem:[%s3809 + $0xa8] sm:$0xff]
    %v3832 = vld [vmem:[%s3809 + $0xb0] sm:$0xff]
    %v3833 = vld [vmem:[%s3809 + $0xb8] sm:$0xff]
    %v3834 = vld [vmem:[%s3809 + $0xc0] sm:$0xff]
    %v3835 = vld [vmem:[%s3809 + $0xc8] sm:$0xff]
    %v3836 = vld [vmem:[%s3809 + $0xd0] sm:$0xff]
    %v3837 = vld [vmem:[%s3809 + $0xd8] sm:$0xff]
    %v3838 = vld [vmem:[%s3809 + $0xe0] sm:$0xff]
    %v3839 = vld [vmem:[%s3809 + $0xe8] sm:$0xff]
    %v3840 = vld [vmem:[%s3809 + $0xf0] sm:$0xff]
    %v3841 = vld [vmem:[%s3809 + $0xf8] sm:$0xff]
    %s3842 = scalar_lea.vmem %s15, 1
    %v3843 = vld [vmem:[%s3842] sm:$0x1]
    %v3845 = vlaneseq
    %v3846 = vshrl.u32 %v3845, 7
    %v3847 = vsub.s32 0, %v3846
    %v3848 = vrot.slane %v3843, %v3847
    %3850 = vmatprep.subr.mxu0 0.0
    %3851 = vmatpush1.msra.mxu0 %v3810
    %3852 = vmatprep.subr.mxu0 0.0
    %3853 = vmatpush1.msra.mxu0 %v3811
    %3854 = vmatprep.subr.mxu0 0.0
    %3855 = vmatpush1.msra.mxu0 %v3812
    %3856 = vmatprep.subr.mxu0 0.0
    %3857 = vmatpush1.msra.mxu0 %v3813
    %3858 = vmatprep.subr.mxu0 0.0
    %3859 = vmatpush1.msra.mxu0 %v3814
    %3860 = vmatprep.subr.mxu0 0.0
    %3861 = vmatpush1.msra.mxu0 %v3815
    %3862 = vmatprep.subr.mxu0 0.0
    %3863 = vmatpush1.msra.mxu0 %v3816
    %3864 = vmatprep.subr.mxu0 0.0
    %3865 = vmatpush1.msra.mxu0 %v3817
    %3866 = vmatprep.subr.mxu0 0.0
    %3867 = vmatpush1.msra.mxu0 %v3818
    %3868 = vmatprep.subr.mxu0 0.0
    %3869 = vmatpush1.msra.mxu0 %v3819
    %3870 = vmatprep.subr.mxu0 0.0
    %3871 = vmatpush1.msra.mxu0 %v3820
    %3872 = vmatprep.subr.mxu0 0.0
    %3873 = vmatpush1.msra.mxu0 %v3821
    %3874 = vmatprep.subr.mxu0 0.0
    %3875 = vmatpush1.msra.mxu0 %v3822
    %3876 = vmatprep.subr.mxu0 0.0
    %3877 = vmatpush1.msra.mxu0 %v3823
    %3878 = vmatprep.subr.mxu0 0.0
    %3879 = vmatpush1.msra.mxu0 %v3824
    %3880 = vmatprep.subr.mxu0 0.0
    %3881 = vmatpush1.msra.mxu0 %v3825
    %3882 = vmatprep.subr.mxu0 0.0
    %3883 = vmatpush1.msra.mxu0 %v3826
    %3884 = vmatprep.subr.mxu0 0.0
    %3885 = vmatpush1.msra.mxu0 %v3827
    %3886 = vmatprep.subr.mxu0 0.0
    %3887 = vmatpush1.msra.mxu0 %v3828
    %3888 = vmatprep.subr.mxu0 0.0
    %3889 = vmatpush1.msra.mxu0 %v3829
    %3890 = vmatprep.subr.mxu0 0.0
    %3891 = vmatpush1.msra.mxu0 %v3830
    %3892 = vmatprep.subr.mxu0 0.0
    %3893 = vmatpush1.msra.mxu0 %v3831
    %3894 = vmatprep.subr.mxu0 0.0
    %3895 = vmatpush1.msra.mxu0 %v3832
    %3896 = vmatprep.subr.mxu0 0.0
    %3897 = vmatpush1.msra.mxu0 %v3833
    %3898 = vmatprep.subr.mxu0 0.0
    %3899 = vmatpush1.msra.mxu0 %v3834
    %3900 = vmatprep.subr.mxu0 0.0
    %3901 = vmatpush1.msra.mxu0 %v3835
    %3902 = vmatprep.subr.mxu0 0.0
    %3903 = vmatpush1.msra.mxu0 %v3836
    %3904 = vmatprep.subr.mxu0 0.0
    %3905 = vmatpush1.msra.mxu0 %v3837
    %3906 = vmatprep.subr.mxu0 0.0
    %3907 = vmatpush1.msra.mxu0 %v3838
    %3908 = vmatprep.subr.mxu0 0.0
    %3909 = vmatpush1.msra.mxu0 %v3839
    %3910 = vmatprep.subr.mxu0 0.0
    %3911 = vmatpush1.msra.mxu0 %v3840
    %3912 = vmatprep.subr.mxu0 0.0
    %3913 = vmatpush1.msra.mxu0 %v3841
    %3914 = vmatprep.mubr.f32.mxu0 %v3806
    %3915 = vmatmul.mubr.f32.gmra.mrb[0].mxu0 %v3805
    %v3916 = vpop.f32.mrb[0].mxu0
    %v3917 = vadd.f32 %v3848, %v3916
    %v3918 = vpop.f32.mrb[0].mxu0
    %3919 = vmatprep.mubr.f32.mxu0 %v3808
    %3920 = vmatmul.mubr.f32.gmra.mrb[0].mxu0 %v3807
    %v3921 = vpop.f32.mrb[0].mxu0
    %v3922 = vadd.f32 %v3848, %v3921
    %v3923 = vpop.f32.mrb[0].mxu0
    %3924 = vdwg.mxu0
    %v3925 = vadd.f32 %v3917, %v3612
    %v3926 = vadd.f32 %v3922, %v3613
    %v3927 = vld [vmem:[%s16] sm:$0x1]
    %v3928 = vld [vmem:[%s17] sm:$0x1]
    %v3929 = vsel %vm71, %v3925, 0.0
    %3930 = vadd.xlane.f32.xlu0 %v3929
    %v3931 = vpop.xlane.xlu0 %3930
    %v3932 = vsel %vm71, %v3926, 0.0
    %3933 = vadd.xlane.f32.xlu0 %v3932
    %v3934 = vpop.xlane.xlu0 %3933
    %v3935 = vmul.f32 %v3931, %v78
    %v3936 = vmul.f32 %v3934, %v78
    %v3937 = vsub.f32 %v3925, %v3935
    %v3938 = vsub.f32 %v3926, %v3936
    %v3939 = vmul.f32 %v3937, %v3937
    %v3940 = vmul.f32 %v3938, %v3938
    %v3941 = vsel %vm71, %v3939, 0.0
    %3942 = vadd.xlane.f32.xlu0 %v3941
    %v3943 = vpop.xlane.xlu0 %3942
    %v3944 = vsel %vm71, %v3940, 0.0
    %3945 = vadd.xlane.f32.xlu0 %v3944
    %v3946 = vpop.xlane.xlu0 %3945
    %v3947 = vmul.f32 %v3943, %v78
    %v3948 = vmul.f32 %v3946, %v78
    %v3949 = vadd.f32 %v3947, 1e-05
    %v3950 = vadd.f32 %v3948, 1e-05
    %v3951 = vrsqrt.pop %v3949
    %v3952 = vrsqrt.pop %v3950
    %v3953 = vmul.f32 %v3937, %v3951
    %v3954 = vmul.f32 %v3938, %v3952
    %v3956 = vlaneseq
    %v3957 = vshrl.u32 %v3956, 7
    %v3958 = vsub.s32 0, %v3957
    %v3959 = vrot.slane %v3927, %v3958
    %v3961 = vmul.f32 %v3953, %v3959
    %v3962 = vmul.f32 %v3954, %v3959
    %v3964 = vlaneseq
    %v3965 = vshrl.u32 %v3964, 7
    %v3966 = vsub.s32 0, %v3965
    %v3967 = vrot.slane %v3928, %v3966
    %v3969 = vadd.f32 %v3961, %v3967
    %v3970 = vadd.f32 %v3962, %v3967
    %v3971 = vld [vmem:[%s3] sm:$0x3]
    %v3973 = vsel %vm229, %v3971, 0
    %3975 = vmatprep.subr.mxu0 0.0
    %3976 = vmatpush1.msra.mxu0 %v3969
    %3977 = vmatprep.subr.mxu0 0.0
    %3978 = vmatpush1.msra.mxu0 %v3970
    %3979 = vmatprep.subr.mxu0 0.0
    %3980 = vmatpush1.msra.mxu0 0.0
    %3981 = vmatprep.subr.mxu0 0.0
    %3982 = vmatpush1.msra.mxu0 0.0
    %3983 = vmatprep.subr.mxu0 0.0
    %3984 = vmatpush1.msra.mxu0 0.0
    %3985 = vmatprep.subr.mxu0 0.0
    %3986 = vmatpush1.msra.mxu0 0.0
    %3987 = vmatprep.subr.mxu0 0.0
    %3988 = vmatpush1.msra.mxu0 0.0
    %3989 = vmatprep.subr.mxu0 0.0
    %3990 = vmatpush1.msra.mxu0 0.0
    %3991 = vmatprep.subr.mxu0 0.0
    %3992 = vmatpush1.msra.mxu0 0.0
    %3993 = vmatprep.subr.mxu0 0.0
    %3994 = vmatpush1.msra.mxu0 0.0
    %3995 = vmatprep.subr.mxu0 0.0
    %3996 = vmatpush1.msra.mxu0 0.0
    %3997 = vmatprep.subr.mxu0 0.0
    %3998 = vmatpush1.msra.mxu0 0.0
    %3999 = vmatprep.subr.mxu0 0.0
    %4000 = vmatpush1.msra.mxu0 0.0
    %4001 = vmatprep.subr.mxu0 0.0
    %4002 = vmatpush1.msra.mxu0 0.0
    %4003 = vmatprep.subr.mxu0 0.0
    %4004 = vmatpush1.msra.mxu0 0.0
    %4005 = vmatprep.subr.mxu0 0.0
    %4006 = vmatpush1.msra.mxu0 0.0
    %4007 = vmatprep.subr.mxu0 0.0
    %4008 = vmatpush1.msra.mxu0 0.0
    %4009 = vmatprep.subr.mxu0 0.0
    %4010 = vmatpush1.msra.mxu0 0.0
    %4011 = vmatprep.subr.mxu0 0.0
    %4012 = vmatpush1.msra.mxu0 0.0
    %4013 = vmatprep.subr.mxu0 0.0
    %4014 = vmatpush1.msra.mxu0 0.0
    %4015 = vmatprep.subr.mxu0 0.0
    %4016 = vmatpush1.msra.mxu0 0.0
    %4017 = vmatprep.subr.mxu0 0.0
    %4018 = vmatpush1.msra.mxu0 0.0
    %4019 = vmatprep.subr.mxu0 0.0
    %4020 = vmatpush1.msra.mxu0 0.0
    %4021 = vmatprep.subr.mxu0 0.0
    %4022 = vmatpush1.msra.mxu0 0.0
    %4023 = vmatprep.subr.mxu0 0.0
    %4024 = vmatpush1.msra.mxu0 0.0
    %4025 = vmatprep.subr.mxu0 0.0
    %4026 = vmatpush1.msra.mxu0 0.0
    %4027 = vmatprep.subr.mxu0 0.0
    %4028 = vmatpush1.msra.mxu0 0.0
    %4029 = vmatprep.subr.mxu0 0.0
    %4030 = vmatpush1.msra.mxu0 0.0
    %4031 = vmatprep.subr.mxu0 0.0
    %4032 = vmatpush1.msra.mxu0 0.0
    %4033 = vmatprep.subr.mxu0 0.0
    %4034 = vmatpush1.msra.mxu0 0.0
    %4035 = vmatprep.subr.mxu0 0.0
    %4036 = vmatpush1.msra.mxu0 0.0
    %4037 = vmatprep.subr.mxu0 0.0
    %4038 = vmatpush1.msra.mxu0 0.0
    %4039 = vmatprep.mubr.f32.mxu0 0.0
    %4040 = vmatmul.mubr.f32.gmra.mrb[0].mxu0 %v3973
    %v4041 = vpop.f32.mrb[0].mxu0
    %v4042 = vadd.f32 0.0, %v4041
    %v4043 = vpop.f32.mrb[0].mxu0
    %4044 = vdwg.mxu0
    %v4045 = vld [vmem:[%s18] sm:$0xff]
    %v4046 = vld [vmem:[%s18 + $0x8] sm:$0xff]
    %v4047 = vld [vmem:[%s18 + $0x10] sm:$0xff]
    %v4048 = vld [vmem:[%s18 + $0x18] sm:$0xff]
    %v4049 = vld [vmem:[%s18 + $0x20] sm:$0xff]
    %v4050 = vld [vmem:[%s18 + $0x28] sm:$0xff]
    %v4051 = vld [vmem:[%s18 + $0x30] sm:$0xff]
    %v4052 = vld [vmem:[%s18 + $0x38] sm:$0xff]
    %v4054 = vsel %vm71, %v4042, 0
    %4056 = vmatprep.subr.mxu0 0.0
    %4057 = vmatpush1.msra.mxu0 %v4045
    %4058 = vmatprep.subr.mxu0 0.0
    %4059 = vmatpush1.msra.mxu0 %v4046
    %4060 = vmatprep.subr.mxu0 0.0
    %4061 = vmatpush1.msra.mxu0 %v4047
    %4062 = vmatprep.subr.mxu0 0.0
    %4063 = vmatpush1.msra.mxu0 %v4048
    %4064 = vmatprep.subr.mxu0 0.0
    %4065 = vmatpush1.msra.mxu0 %v4049
    %4066 = vmatprep.subr.mxu0 0.0
    %4067 = vmatpush1.msra.mxu0 %v4050
    %4068 = vmatprep.subr.mxu0 0.0
    %4069 = vmatpush1.msra.mxu0 %v4051
    %4070 = vmatprep.subr.mxu0 0.0
    %4071 = vmatpush1.msra.mxu0 %v4052
    %4072 = vmatprep.subr.mxu0 0.0
    %4073 = vmatpush1.msra.mxu0 0.0
    %4074 = vmatprep.subr.mxu0 0.0
    %4075 = vmatpush1.msra.mxu0 0.0
    %4076 = vmatprep.subr.mxu0 0.0
    %4077 = vmatpush1.msra.mxu0 0.0
    %4078 = vmatprep.subr.mxu0 0.0
    %4079 = vmatpush1.msra.mxu0 0.0
    %4080 = vmatprep.subr.mxu0 0.0
    %4081 = vmatpush1.msra.mxu0 0.0
    %4082 = vmatprep.subr.mxu0 0.0
    %4083 = vmatpush1.msra.mxu0 0.0
    %4084 = vmatprep.subr.mxu0 0.0
    %4085 = vmatpush1.msra.mxu0 0.0
    %4086 = vmatprep.subr.mxu0 0.0
    %4087 = vmatpush1.msra.mxu0 0.0
    %4088 = vmatprep.subr.mxu0 0.0
    %4089 = vmatpush1.msra.mxu0 0.0
    %4090 = vmatprep.subr.mxu0 0.0
    %4091 = vmatpush1.msra.mxu0 0.0
    %4092 = vmatprep.subr.mxu0 0.0
    %4093 = vmatpush1.msra.mxu0 0.0
    %4094 = vmatprep.subr.mxu0 0.0
    %4095 = vmatpush1.msra.mxu0 0.0
    %4096 = vmatprep.subr.mxu0 0.0
    %4097 = vmatpush1.msra.mxu0 0.0
    %4098 = vmatprep.subr.mxu0 0.0
    %4099 = vmatpush1.msra.mxu0 0.0
    %4100 = vmatprep.subr.mxu0 0.0
    %4101 = vmatpush1.msra.mxu0 0.0
    %4102 = vmatprep.subr.mxu0 0.0
    %4103 = vmatpush1.msra.mxu0 0.0
    %4104 = vmatprep.subr.mxu0 0.0
    %4105 = vmatpush1.msra.mxu0 0.0
    %4106 = vmatprep.subr.mxu0 0.0
    %4107 = vmatpush1.msra.mxu0 0.0
    %4108 = vmatprep.subr.mxu0 0.0
    %4109 = vmatpush1.msra.mxu0 0.0
    %4110 = vmatprep.subr.mxu0 0.0
    %4111 = vmatpush1.msra.mxu0 0.0
    %4112 = vmatprep.subr.mxu0 0.0
    %4113 = vmatpush1.msra.mxu0 0.0
    %4114 = vmatprep.subr.mxu0 0.0
    %4115 = vmatpush1.msra.mxu0 0.0
    %4116 = vmatprep.subr.mxu0 0.0
    %4117 = vmatpush1.msra.mxu0 0.0
    %4118 = vmatprep.subr.mxu0 0.0
    %4119 = vmatpush1.msra.mxu0 0.0
    %4120 = vmatprep.mubr.f32.mxu0 0.0
    %4121 = vmatmul.mubr.f32.gmra.mrb[0].mxu0 %v4054
    %v4122 = vpop.f32.mrb[0].mxu0
    %v4123 = vadd.f32 0.0, %v4122
    %v4124 = vpop.f32.mrb[0].mxu0
    %4125 = vdwg.mxu0
    %vm4126 = vcmask 254976
    %4127 = vst.msk [vmem:[#allocation2] sm:$0x3] %vm4126, %v4123
    // Predicated region
    $region78: #{tpu_custom_call.1} parent=1 // pred_check
      _
    $region79: #{tpu_custom_call.1} parent=1 // pred_check_branch
      %4129 = sbr.rel (0) target = $region81
    $region80: #{tpu_custom_call.1} parent=1 // pred_region
      %s4131 = ssub.s32 32, 32
      %4132 = vsyncadd [#allocation3], %s4131
      %s4134 = sshll.u32 [#allocation2], 4
      %s4135 = int_to_ptr.vmem [resolvable:$true] %s4134
      %4137 = dma.vmem_to_hbm [thread:$0]  %s4135, 32, %s19, [#allocation3]
    $region81: #{tpu_custom_call.1} parent=1 // pred_fallthru
      _
    // Predicated region
    $region82: #{tpu_custom_call.1} parent=1 // pred_check
      _
    $region83: #{tpu_custom_call.1} parent=1 // pred_check_branch
      %4139 = sbr.rel (0) target = $region85
    $region84: #{tpu_custom_call.1} parent=1 // pred_region
      %4140 = dma.done [#allocation3], 32
    $region85: #{tpu_custom_call.1} parent=1 // pred_fallthru
      _
    %4141 = vsyncpa [#allocation3], 1

</llo_original>
